<compile_context>
chip_gen: v7x
topology: tpu7x:2x2x1
jax: 0.10.0
libtpu: 0.0.40
codegen_flags: <defaults>
</compile_context>

<pallas_src>
import jax
import jax.numpy as jnp
from jax import lax
from jax.experimental import pallas as pl
from jax.experimental.pallas import tpu as pltpu


def fcsubnet_kernel(x_ref, w_ref, out_ref, ppad_ref, acc_ref):
    # x_ref:    (1, H, W, C)          VMEM, one batch element, NHWC
    # w_ref:    (3, 3, C, OC)         VMEM, conv4 weight, tap-major
    # out_ref:  (1, H2, W2, 4C + OC)  VMEM, NHWC output block
    # ppad_ref: (H2+2, W2+2, C)       VMEM scratch, zero-padded pooled map (input dtype)
    # acc_ref:  (H2, W2, OC)          VMEM scratch, f32 conv accumulator
    _, H, W, C = x_ref.shape
    H2, W2 = H // 2, W // 2
    Wp = W2 + 2
    OC = w_ref.shape[3]

    xv = x_ref[0]                                    # (H, W, C): read x once

    # ---- ReOrg: four spatial quadrants -> channel slabs (pink/green/purple/red)
    out_ref[0, :, :, 0 * C:1 * C] = xv[0:H2, 0:W2, :]
    out_ref[0, :, :, 1 * C:2 * C] = xv[H2:H, 0:W2, :]
    out_ref[0, :, :, 2 * C:3 * C] = xv[0:H2, W2:W, :]
    out_ref[0, :, :, 3 * C:4 * C] = xv[H2:H, W2:W, :]
    # TODO(synk): on v5e route these four pure-copy slabs through
    # pltpu.make_async_copy (VMEM->VMEM DMA) to overlap them with the MXU conv.

    # ---- P3: MaxPool2d(kernel=2, stride=2) — no extra scratch pass -------------
    # Pairwise maxima over reshaped row/col pairs (no strided ref reads).
    rows = xv.reshape(H2, 2, W, C)
    rmax = jnp.maximum(rows[:, 0, :, :], rows[:, 1, :, :])          # (H2, W, C)
    cols = rmax.reshape(H2, W2, 2, C)
    pooled = jnp.maximum(cols[:, :, 0, :], cols[:, :, 1, :])        # (H2, W2, C)

    # ---- zero only the 1-pixel halo; pooled interior written exactly once ------
    zrow = jnp.zeros((1, Wp, C), ppad_ref.dtype)
    zcol = jnp.zeros((H2 + 2, 1, C), ppad_ref.dtype)
    ppad_ref[0:1, :, :] = zrow
    ppad_ref[H2 + 1:H2 + 2, :, :] = zrow
    ppad_ref[:, 0:1, :] = zcol
    ppad_ref[:, W2 + 1:W2 + 2, :] = zcol
    ppad_ref[1:H2 + 1, 1:W2 + 1, :] = pooled.astype(ppad_ref.dtype)

    # ---- C4: Conv2d(C -> OC, 3x3, 'same', bias=None) on the MXU ----------------
    # Per dy: one contiguous padded-width slab matmul per dx tap; the dx shift is
    # applied to the result with a sublane-offset slice, accumulated into VMEM.
    acc_ref[...] = jnp.zeros_like(acc_ref)

    def dy_body(dy, carry):
        slab = ppad_ref[pl.ds(dy, H2), :, :].reshape(H2 * Wp, C)   # contiguous rows
        for dx in range(3):                                        # 3 taps per slab
            res = jnp.dot(slab, w_ref[dy, dx, :, :],
                          preferred_element_type=jnp.float32)      # (H2*Wp, OC)
            res = res.reshape(H2, Wp, OC)
            acc_ref[...] += res[:, dx:dx + W2, :]
        return carry

    lax.fori_loop(0, 3, dy_body, 0, unroll=True)

    out_ref[0, :, :, 4 * C:4 * C + OC] = acc_ref[...].astype(out_ref.dtype)


def fcsubnet_forward(x, w):
    """FCsubnet forward: concat([ReOrg(x), Conv3x3(MaxPool2x2(x))], channel axis).

    x: (N, C, H, W) float32 (NCHW, as in the PyTorch module)
    w: (OC, C, 3, 3) float32 (OIHW conv4 weight, bias=None)
    returns: (N, 4*C + OC, H//2, W//2) float32
    """
    N, C, H, W = x.shape
    OC = w.shape[0]
    assert H % 2 == 0 and W % 2 == 0, "ReOrg/MaxPool assume even spatial dims"
    H2, W2 = H // 2, W // 2

    # Layout plumbing: channels-last inside the kernel so channels sit on lanes.
    x_nhwc = jnp.transpose(x, (0, 2, 3, 1))                      # (N, H, W, C)
    w_taps = jnp.transpose(w, (2, 3, 1, 0)).astype(jnp.float32)  # (3, 3, C, OC)
    # TODO(synk): casting x_nhwc / w_taps to bf16 (f32 accumulation kept) runs the
    # MXU at native rate and halves VMEM bytes — numerics tradeoff, left off so
    # the f32 reference check stays tight.

    itemsize = jnp.dtype(x.dtype).itemsize
    x_blk = H * W * C * itemsize
    out_blk = H2 * W2 * (4 * C + OC) * itemsize
    w_blk = 9 * C * OC * 4
    scratch = (H2 + 2) * (W2 + 2) * C * itemsize + H2 * W2 * OC * 4
    # Double-buffered pipelined blocks + weight + scratch + headroom, clamped.
    vmem_needed = 2 * (x_blk + out_blk) + 2 * w_blk + scratch + (4 << 20)
    vmem_limit = int(min(max(vmem_needed, 32 << 20), 64 << 20))

    out_nhwc = pl.pallas_call(
        fcsubnet_kernel,
        out_shape=jax.ShapeDtypeStruct((N, H2, W2, 4 * C + OC), x.dtype),
        grid=(N,),
        in_specs=[
            pl.BlockSpec((1, H, W, C), lambda n: (n, 0, 0, 0)),
            pl.BlockSpec((3, 3, C, OC), lambda n: (0, 0, 0, 0)),
        ],
        out_specs=pl.BlockSpec((1, H2, W2, 4 * C + OC), lambda n: (n, 0, 0, 0)),
        scratch_shapes=[
            pltpu.VMEM((H2 + 2, W2 + 2, C), x.dtype),   # padded pooled map
            pltpu.VMEM((H2, W2, OC), jnp.float32),      # conv accumulator
        ],
        compiler_params=pltpu.CompilerParams(
            dimension_semantics=("parallel",),
            vmem_limit_bytes=vmem_limit),
    )(x_nhwc, w_taps)

    # Back to NCHW to match the PyTorch module's output layout.
    return jnp.transpose(out_nhwc, (0, 3, 1, 2))


def ref_forward(x, w):
    """Pure-JAX reference mirroring the PyTorch FCsubnet."""
    N, C, H, W = x.shape
    H2, W2 = H // 2, W // 2
    pink = x[:, :, :H2, :W2]
    green = x[:, :, H2:, :W2]
    purple = x[:, :, :H2, W2:]
    red = x[:, :, H2:, W2:]
    reorg = jnp.concatenate([pink, green, purple, red], axis=1)
    p = jax.lax.reduce_window(x, -jnp.inf, jax.lax.max,
                              (1, 1, 2, 2), (1, 1, 2, 2), 'VALID')
    c4 = jax.lax.conv_general_dilated(
        p, w, window_strides=(1, 1), padding='SAME',
        dimension_numbers=('NCHW', 'OIHW', 'NCHW'))
    return jnp.concatenate([reorg, c4], axis=1)


if __name__ == "__main__":
    key = jax.random.PRNGKey(0)
    kx, kw = jax.random.split(key)

    N, C, H, W = 2, 4, 16, 16        # scaled-down FCsubnet (real widths: C=128, OC=256)
    OC = 8

    x = jax.random.normal(kx, (N, C, H, W), dtype=jnp.float32)
    # Deterministic synthetic conv4 weight (OIHW); Conv2d has bias=None.
    w = jax.random.normal(kw, (OC, C, 3, 3), dtype=jnp.float32) * 0.1

    out = jax.block_until_ready(fcsubnet_forward(x, w))

    ref = ref_forward(x, w)
    assert out.shape == (N, 4 * C + OC, H // 2, W // 2), out.shape
    max_err = float(jnp.max(jnp.abs(out - ref)))
    assert jnp.allclose(out, ref, atol=1e-4, rtol=1e-4), max_err

    print("KERNEL_OK")
</pallas_src>

<mosaic_0001>
module attributes {stable_mosaic.version = 11 : i64} {
  func.func @fcsubnet_kernel(%arg0: i32, %arg1: memref<1x16x16x4xf32, #tpu.memory_space<vmem>>, %arg2: memref<3x3x4x8xf32, #tpu.memory_space<vmem>>, %arg3: memref<1x8x8x24xf32, #tpu.memory_space<vmem>>, %arg4: memref<10x10x4xf32, #tpu.memory_space<vmem>>, %arg5: memref<8x8x8xf32, #tpu.memory_space<vmem>>) attributes {dimension_semantics = [#tpu.dimension_semantics<parallel>], iteration_bounds = array<i64: 2>, scalar_prefetch = 0 : i64, scratch_operands = 2 : i64, tpu.core_type = #tpu.core_type<tc>, window_params = [{transform_indices = @transform_0, window_bounds = array<i64: 1, 16, 16, 4>}, {pipeline_mode = #tpu.pipeline_mode<synchronous>, transform_indices = @transform_1, window_bounds = array<i64: 3, 3, 4, 8>}, {transform_indices = @transform_2, window_bounds = array<i64: 1, 8, 8, 24>}]} {
    %c0 = arith.constant 0 : index
    %c0_0 = arith.constant 0 : index
    %c0_1 = arith.constant 0 : index
    %c0_2 = arith.constant 0 : index
    %0 = vector.load %arg1[%c0, %c0_0, %c0_1, %c0_2] : memref<1x16x16x4xf32, #tpu.memory_space<vmem>>, vector<1x16x16x4xf32>
    %1 = vector.shape_cast %0 : vector<1x16x16x4xf32> to vector<16x16x4xf32>
    %2 = vector.extract_strided_slice %1 {offsets = [0, 0, 0], sizes = [8, 8, 4], strides = [1, 1, 1]} : vector<16x16x4xf32> to vector<8x8x4xf32>
    %c0_3 = arith.constant 0 : index
    %c0_4 = arith.constant 0 : index
    %c0_5 = arith.constant 0 : index
    %c0_6 = arith.constant 0 : index
    %3 = vector.load %arg3[%c0_3, %c0_4, %c0_5, %c0_6] : memref<1x8x8x24xf32, #tpu.memory_space<vmem>>, vector<1x8x8x4xf32>
    %4 = vector.shape_cast %3 : vector<1x8x8x4xf32> to vector<8x8x4xf32>
    %5 = vector.shape_cast %2 : vector<8x8x4xf32> to vector<1x8x8x4xf32>
    tpu.vector_store %arg3[%c0_3, %c0_4, %c0_5, %c0_6], %5 {strides = array<i32>} : memref<1x8x8x24xf32, #tpu.memory_space<vmem>>, vector<1x8x8x4xf32>,
    %6 = vector.extract_strided_slice %1 {offsets = [8, 0, 0], sizes = [8, 8, 4], strides = [1, 1, 1]} : vector<16x16x4xf32> to vector<8x8x4xf32>
    %c0_7 = arith.constant 0 : index
    %c0_8 = arith.constant 0 : index
    %c0_9 = arith.constant 0 : index
    %c4 = arith.constant 4 : index
    %7 = vector.load %arg3[%c0_7, %c0_8, %c0_9, %c4] : memref<1x8x8x24xf32, #tpu.memory_space<vmem>>, vector<1x8x8x4xf32>
    %8 = vector.shape_cast %7 : vector<1x8x8x4xf32> to vector<8x8x4xf32>
    %9 = vector.shape_cast %6 : vector<8x8x4xf32> to vector<1x8x8x4xf32>
    tpu.vector_store %arg3[%c0_7, %c0_8, %c0_9, %c4], %9 {strides = array<i32>} : memref<1x8x8x24xf32, #tpu.memory_space<vmem>>, vector<1x8x8x4xf32>,
    %10 = vector.extract_strided_slice %1 {offsets = [0, 8, 0], sizes = [8, 8, 4], strides = [1, 1, 1]} : vector<16x16x4xf32> to vector<8x8x4xf32>
    %c0_10 = arith.constant 0 : index
    %c0_11 = arith.constant 0 : index
    %c0_12 = arith.constant 0 : index
    %c8 = arith.constant 8 : index
    %11 = vector.load %arg3[%c0_10, %c0_11, %c0_12, %c8] : memref<1x8x8x24xf32, #tpu.memory_space<vmem>>, vector<1x8x8x4xf32>
    %12 = vector.shape_cast %11 : vector<1x8x8x4xf32> to vector<8x8x4xf32>
    %13 = vector.shape_cast %10 : vector<8x8x4xf32> to vector<1x8x8x4xf32>
    tpu.vector_store %arg3[%c0_10, %c0_11, %c0_12, %c8], %13 {strides = array<i32>} : memref<1x8x8x24xf32, #tpu.memory_space<vmem>>, vector<1x8x8x4xf32>,
    %14 = vector.extract_strided_slice %1 {offsets = [8, 8, 0], sizes = [8, 8, 4], strides = [1, 1, 1]} : vector<16x16x4xf32> to vector<8x8x4xf32>
    %c0_13 = arith.constant 0 : index
    %c0_14 = arith.constant 0 : index
    %c0_15 = arith.constant 0 : index
    %c12 = arith.constant 12 : index
    %15 = vector.load %arg3[%c0_13, %c0_14, %c0_15, %c12] : memref<1x8x8x24xf32, #tpu.memory_space<vmem>>, vector<1x8x8x4xf32>
    %16 = vector.shape_cast %15 : vector<1x8x8x4xf32> to vector<8x8x4xf32>
    %17 = vector.shape_cast %14 : vector<8x8x4xf32> to vector<1x8x8x4xf32>
    tpu.vector_store %arg3[%c0_13, %c0_14, %c0_15, %c12], %17 {strides = array<i32>} : memref<1x8x8x24xf32, #tpu.memory_space<vmem>>, vector<1x8x8x4xf32>,
    %18 = vector.shape_cast %1 : vector<16x16x4xf32> to vector<8x2x16x4xf32>
    %19 = vector.extract_strided_slice %18 {offsets = [0, 0, 0, 0], sizes = [8, 1, 16, 4], strides = [1, 1, 1, 1]} : vector<8x2x16x4xf32> to vector<8x1x16x4xf32>
    %20 = vector.shape_cast %19 : vector<8x1x16x4xf32> to vector<8x16x4xf32>
    %21 = vector.extract_strided_slice %18 {offsets = [0, 1, 0, 0], sizes = [8, 1, 16, 4], strides = [1, 1, 1, 1]} : vector<8x2x16x4xf32> to vector<8x1x16x4xf32>
    %22 = vector.shape_cast %21 : vector<8x1x16x4xf32> to vector<8x16x4xf32>
    %23 = arith.maximumf %20, %22 : vector<8x16x4xf32>
    %24 = vector.shape_cast %23 : vector<8x16x4xf32> to vector<8x8x2x4xf32>
    %25 = vector.extract_strided_slice %24 {offsets = [0, 0, 0, 0], sizes = [8, 8, 1, 4], strides = [1, 1, 1, 1]} : vector<8x8x2x4xf32> to vector<8x8x1x4xf32>
    %26 = vector.shape_cast %25 : vector<8x8x1x4xf32> to vector<8x8x4xf32>
    %27 = vector.extract_strided_slice %24 {offsets = [0, 0, 1, 0], sizes = [8, 8, 1, 4], strides = [1, 1, 1, 1]} : vector<8x8x2x4xf32> to vector<8x8x1x4xf32>
    %28 = vector.shape_cast %27 : vector<8x8x1x4xf32> to vector<8x8x4xf32>
    %29 = arith.maximumf %26, %28 : vector<8x8x4xf32>
    %cst = arith.constant 0.000000e+00 : f32
    %30 = vector.broadcast %cst : f32 to vector<1x10x4xf32>
    %cst_16 = arith.constant 0.000000e+00 : f32
    %31 = vector.broadcast %cst_16 : f32 to vector<10x1x4xf32>
    %c0_17 = arith.constant 0 : index
    %c0_18 = arith.constant 0 : index
    %c0_19 = arith.constant 0 : index
    %32 = vector.load %arg4[%c0_17, %c0_18, %c0_19] : memref<10x10x4xf32, #tpu.memory_space<vmem>>, vector<1x10x4xf32>
    tpu.vector_store %arg4[%c0_17, %c0_18, %c0_19], %30 {strides = array<i32>} : memref<10x10x4xf32, #tpu.memory_space<vmem>>, vector<1x10x4xf32>,
    %c9 = arith.constant 9 : index
    %c0_20 = arith.constant 0 : index
    %c0_21 = arith.constant 0 : index
    %33 = vector.load %arg4[%c9, %c0_20, %c0_21] : memref<10x10x4xf32, #tpu.memory_space<vmem>>, vector<1x10x4xf32>
    tpu.vector_store %arg4[%c9, %c0_20, %c0_21], %30 {strides = array<i32>} : memref<10x10x4xf32, #tpu.memory_space<vmem>>, vector<1x10x4xf32>,
    %c0_22 = arith.constant 0 : index
    %c0_23 = arith.constant 0 : index
    %c0_24 = arith.constant 0 : index
    %34 = vector.load %arg4[%c0_22, %c0_23, %c0_24] : memref<10x10x4xf32, #tpu.memory_space<vmem>>, vector<10x1x4xf32>
    tpu.vector_store %arg4[%c0_22, %c0_23, %c0_24], %31 {strides = array<i32>} : memref<10x10x4xf32, #tpu.memory_space<vmem>>, vector<10x1x4xf32>,
    %c0_25 = arith.constant 0 : index
    %c9_26 = arith.constant 9 : index
    %c0_27 = arith.constant 0 : index
    %35 = vector.load %arg4[%c0_25, %c9_26, %c0_27] : memref<10x10x4xf32, #tpu.memory_space<vmem>>, vector<10x1x4xf32>
    tpu.vector_store %arg4[%c0_25, %c9_26, %c0_27], %31 {strides = array<i32>} : memref<10x10x4xf32, #tpu.memory_space<vmem>>, vector<10x1x4xf32>,
    %c1 = arith.constant 1 : index
    %c1_28 = arith.constant 1 : index
    %c0_29 = arith.constant 0 : index
    %36 = vector.load %arg4[%c1, %c1_28, %c0_29] : memref<10x10x4xf32, #tpu.memory_space<vmem>>, vector<8x8x4xf32>
    tpu.vector_store %arg4[%c1, %c1_28, %c0_29], %29 {strides = array<i32>} : memref<10x10x4xf32, #tpu.memory_space<vmem>>, vector<8x8x4xf32>,
    %cst_30 = arith.constant 0.000000e+00 : f32
    %37 = vector.broadcast %cst_30 : f32 to vector<8x8x8xf32>
    %c0_31 = arith.constant 0 : index
    %c0_32 = arith.constant 0 : index
    %c0_33 = arith.constant 0 : index
    %38 = vector.load %arg5[%c0_31, %c0_32, %c0_33] : memref<8x8x8xf32, #tpu.memory_space<vmem>>, vector<8x8x8xf32>
    tpu.vector_store %arg5[%c0_31, %c0_32, %c0_33], %37 {strides = array<i32>} : memref<8x8x8xf32, #tpu.memory_space<vmem>>, vector<8x8x8xf32>,
    %c0_i32 = arith.constant 0 : i32
    %39 = arith.index_cast %c0_i32 : i32 to index
    %c0_34 = arith.constant 0 : index
    %c0_35 = arith.constant 0 : index
    %40 = vector.load %arg4[%39, %c0_34, %c0_35] : memref<10x10x4xf32, #tpu.memory_space<vmem>>, vector<8x10x4xf32>
    %41 = vector.shape_cast %40 : vector<8x10x4xf32> to vector<80x4xf32>
    %42 = arith.index_cast %c0_i32 : i32 to index
    %c0_36 = arith.constant 0 : index
    %c0_37 = arith.constant 0 : index
    %c0_38 = arith.constant 0 : index
    %43 = vector.load %arg2[%42, %c0_36, %c0_37, %c0_38] : memref<3x3x4x8xf32, #tpu.memory_space<vmem>>, vector<1x1x4x8xf32>
    %44 = vector.shape_cast %43 : vector<1x1x4x8xf32> to vector<4x8xf32>
    %cst_39 = arith.constant dense<0.000000e+00> : vector<80x8xf32>
    %45 = tpu.matmul %41, %44, %cst_39 {dimension_numbers = #tpu.dot_dimension_numbers<[1], [0], [0], [1], [0, 0, 1, 1], [], []>} : vector<80x4xf32>, vector<4x8xf32>, vector<80x8xf32> -> vector<80x8xf32>
    %46 = vector.shape_cast %45 : vector<80x8xf32> to vector<8x10x8xf32>
    %c0_40 = arith.constant 0 : index
    %c0_41 = arith.constant 0 : index
    %c0_42 = arith.constant 0 : index
    %47 = vector.load %arg5[%c0_40, %c0_41, %c0_42] : memref<8x8x8xf32, #tpu.memory_space<vmem>>, vector<8x8x8xf32>
    %48 = vector.extract_strided_slice %46 {offsets = [0, 0, 0], sizes = [8, 8, 8], strides = [1, 1, 1]} : vector<8x10x8xf32> to vector<8x8x8xf32>
    %49 = arith.addf %47, %48 : vector<8x8x8xf32>
    %c0_43 = arith.constant 0 : index
    %c0_44 = arith.constant 0 : index
    %c0_45 = arith.constant 0 : index
    %50 = vector.load %arg5[%c0_43, %c0_44, %c0_45] : memref<8x8x8xf32, #tpu.memory_space<vmem>>, vector<8x8x8xf32>
    tpu.vector_store %arg5[%c0_43, %c0_44, %c0_45], %49 {strides = array<i32>} : memref<8x8x8xf32, #tpu.memory_space<vmem>>, vector<8x8x8xf32>,
    %51 = arith.index_cast %c0_i32 : i32 to index
    %c1_46 = arith.constant 1 : index
    %c0_47 = arith.constant 0 : index
    %c0_48 = arith.constant 0 : index
    %52 = vector.load %arg2[%51, %c1_46, %c0_47, %c0_48] : memref<3x3x4x8xf32, #tpu.memory_space<vmem>>, vector<1x1x4x8xf32>
    %53 = vector.shape_cast %52 : vector<1x1x4x8xf32> to vector<4x8xf32>
    %cst_49 = arith.constant dense<0.000000e+00> : vector<80x8xf32>
    %54 = tpu.matmul %41, %53, %cst_49 {dimension_numbers = #tpu.dot_dimension_numbers<[1], [0], [0], [1], [0, 0, 1, 1], [], []>} : vector<80x4xf32>, vector<4x8xf32>, vector<80x8xf32> -> vector<80x8xf32>
    %55 = vector.shape_cast %54 : vector<80x8xf32> to vector<8x10x8xf32>
    %c0_50 = arith.constant 0 : index
    %c0_51 = arith.constant 0 : index
    %c0_52 = arith.constant 0 : index
    %56 = vector.load %arg5[%c0_50, %c0_51, %c0_52] : memref<8x8x8xf32, #tpu.memory_space<vmem>>, vector<8x8x8xf32>
    %57 = vector.extract_strided_slice %55 {offsets = [0, 1, 0], sizes = [8, 8, 8], strides = [1, 1, 1]} : vector<8x10x8xf32> to vector<8x8x8xf32>
    %58 = arith.addf %56, %57 : vector<8x8x8xf32>
    %c0_53 = arith.constant 0 : index
    %c0_54 = arith.constant 0 : index
    %c0_55 = arith.constant 0 : index
    %59 = vector.load %arg5[%c0_53, %c0_54, %c0_55] : memref<8x8x8xf32, #tpu.memory_space<vmem>>, vector<8x8x8xf32>
    tpu.vector_store %arg5[%c0_53, %c0_54, %c0_55], %58 {strides = array<i32>} : memref<8x8x8xf32, #tpu.memory_space<vmem>>, vector<8x8x8xf32>,
    %60 = arith.index_cast %c0_i32 : i32 to index
    %c2 = arith.constant 2 : index
    %c0_56 = arith.constant 0 : index
    %c0_57 = arith.constant 0 : index
    %61 = vector.load %arg2[%60, %c2, %c0_56, %c0_57] : memref<3x3x4x8xf32, #tpu.memory_space<vmem>>, vector<1x1x4x8xf32>
    %62 = vector.shape_cast %61 : vector<1x1x4x8xf32> to vector<4x8xf32>
    %cst_58 = arith.constant dense<0.000000e+00> : vector<80x8xf32>
    %63 = tpu.matmul %41, %62, %cst_58 {dimension_numbers = #tpu.dot_dimension_numbers<[1], [0], [0], [1], [0, 0, 1, 1], [], []>} : vector<80x4xf32>, vector<4x8xf32>, vector<80x8xf32> -> vector<80x8xf32>
    %64 = vector.shape_cast %63 : vector<80x8xf32> to vector<8x10x8xf32>
    %c0_59 = arith.constant 0 : index
    %c0_60 = arith.constant 0 : index
    %c0_61 = arith.constant 0 : index
    %65 = vector.load %arg5[%c0_59, %c0_60, %c0_61] : memref<8x8x8xf32, #tpu.memory_space<vmem>>, vector<8x8x8xf32>
    %66 = vector.extract_strided_slice %64 {offsets = [0, 2, 0], sizes = [8, 8, 8], strides = [1, 1, 1]} : vector<8x10x8xf32> to vector<8x8x8xf32>
    %67 = arith.addf %65, %66 : vector<8x8x8xf32>
    %c0_62 = arith.constant 0 : index
    %c0_63 = arith.constant 0 : index
    %c0_64 = arith.constant 0 : index
    %68 = vector.load %arg5[%c0_62, %c0_63, %c0_64] : memref<8x8x8xf32, #tpu.memory_space<vmem>>, vector<8x8x8xf32>
    tpu.vector_store %arg5[%c0_62, %c0_63, %c0_64], %67 {strides = array<i32>} : memref<8x8x8xf32, #tpu.memory_space<vmem>>, vector<8x8x8xf32>,
    %c1_i32 = arith.constant 1 : i32
    %69 = arith.index_cast %c1_i32 : i32 to index
    %c0_65 = arith.constant 0 : index
    %c0_66 = arith.constant 0 : index
    %70 = vector.load %arg4[%69, %c0_65, %c0_66] : memref<10x10x4xf32, #tpu.memory_space<vmem>>, vector<8x10x4xf32>
    %71 = vector.shape_cast %70 : vector<8x10x4xf32> to vector<80x4xf32>
    %72 = arith.index_cast %c1_i32 : i32 to index
    %c0_67 = arith.constant 0 : index
    %c0_68 = arith.constant 0 : index
    %c0_69 = arith.constant 0 : index
    %73 = vector.load %arg2[%72, %c0_67, %c0_68, %c0_69] : memref<3x3x4x8xf32, #tpu.memory_space<vmem>>, vector<1x1x4x8xf32>
    %74 = vector.shape_cast %73 : vector<1x1x4x8xf32> to vector<4x8xf32>
    %cst_70 = arith.constant dense<0.000000e+00> : vector<80x8xf32>
    %75 = tpu.matmul %71, %74, %cst_70 {dimension_numbers = #tpu.dot_dimension_numbers<[1], [0], [0], [1], [0, 0, 1, 1], [], []>} : vector<80x4xf32>, vector<4x8xf32>, vector<80x8xf32> -> vector<80x8xf32>
    %76 = vector.shape_cast %75 : vector<80x8xf32> to vector<8x10x8xf32>
    %c0_71 = arith.constant 0 : index
    %c0_72 = arith.constant 0 : index
    %c0_73 = arith.constant 0 : index
    %77 = vector.load %arg5[%c0_71, %c0_72, %c0_73] : memref<8x8x8xf32, #tpu.memory_space<vmem>>, vector<8x8x8xf32>
    %78 = vector.extract_strided_slice %76 {offsets = [0, 0, 0], sizes = [8, 8, 8], strides = [1, 1, 1]} : vector<8x10x8xf32> to vector<8x8x8xf32>
    %79 = arith.addf %77, %78 : vector<8x8x8xf32>
    %c0_74 = arith.constant 0 : index
    %c0_75 = arith.constant 0 : index
    %c0_76 = arith.constant 0 : index
    %80 = vector.load %arg5[%c0_74, %c0_75, %c0_76] : memref<8x8x8xf32, #tpu.memory_space<vmem>>, vector<8x8x8xf32>
    tpu.vector_store %arg5[%c0_74, %c0_75, %c0_76], %79 {strides = array<i32>} : memref<8x8x8xf32, #tpu.memory_space<vmem>>, vector<8x8x8xf32>,
    %81 = arith.index_cast %c1_i32 : i32 to index
    %c1_77 = arith.constant 1 : index
    %c0_78 = arith.constant 0 : index
    %c0_79 = arith.constant 0 : index
    %82 = vector.load %arg2[%81, %c1_77, %c0_78, %c0_79] : memref<3x3x4x8xf32, #tpu.memory_space<vmem>>, vector<1x1x4x8xf32>
    %83 = vector.shape_cast %82 : vector<1x1x4x8xf32> to vector<4x8xf32>
    %cst_80 = arith.constant dense<0.000000e+00> : vector<80x8xf32>
    %84 = tpu.matmul %71, %83, %cst_80 {dimension_numbers = #tpu.dot_dimension_numbers<[1], [0], [0], [1], [0, 0, 1, 1], [], []>} : vector<80x4xf32>, vector<4x8xf32>, vector<80x8xf32> -> vector<80x8xf32>
    %85 = vector.shape_cast %84 : vector<80x8xf32> to vector<8x10x8xf32>
    %c0_81 = arith.constant 0 : index
    %c0_82 = arith.constant 0 : index
    %c0_83 = arith.constant 0 : index
    %86 = vector.load %arg5[%c0_81, %c0_82, %c0_83] : memref<8x8x8xf32, #tpu.memory_space<vmem>>, vector<8x8x8xf32>
    %87 = vector.extract_strided_slice %85 {offsets = [0, 1, 0], sizes = [8, 8, 8], strides = [1, 1, 1]} : vector<8x10x8xf32> to vector<8x8x8xf32>
    %88 = arith.addf %86, %87 : vector<8x8x8xf32>
    %c0_84 = arith.constant 0 : index
    %c0_85 = arith.constant 0 : index
    %c0_86 = arith.constant 0 : index
    %89 = vector.load %arg5[%c0_84, %c0_85, %c0_86] : memref<8x8x8xf32, #tpu.memory_space<vmem>>, vector<8x8x8xf32>
    tpu.vector_store %arg5[%c0_84, %c0_85, %c0_86], %88 {strides = array<i32>} : memref<8x8x8xf32, #tpu.memory_space<vmem>>, vector<8x8x8xf32>,
    %90 = arith.index_cast %c1_i32 : i32 to index
    %c2_87 = arith.constant 2 : index
    %c0_88 = arith.constant 0 : index
    %c0_89 = arith.constant 0 : index
    %91 = vector.load %arg2[%90, %c2_87, %c0_88, %c0_89] : memref<3x3x4x8xf32, #tpu.memory_space<vmem>>, vector<1x1x4x8xf32>
    %92 = vector.shape_cast %91 : vector<1x1x4x8xf32> to vector<4x8xf32>
    %cst_90 = arith.constant dense<0.000000e+00> : vector<80x8xf32>
    %93 = tpu.matmul %71, %92, %cst_90 {dimension_numbers = #tpu.dot_dimension_numbers<[1], [0], [0], [1], [0, 0, 1, 1], [], []>} : vector<80x4xf32>, vector<4x8xf32>, vector<80x8xf32> -> vector<80x8xf32>
    %94 = vector.shape_cast %93 : vector<80x8xf32> to vector<8x10x8xf32>
    %c0_91 = arith.constant 0 : index
    %c0_92 = arith.constant 0 : index
    %c0_93 = arith.constant 0 : index
    %95 = vector.load %arg5[%c0_91, %c0_92, %c0_93] : memref<8x8x8xf32, #tpu.memory_space<vmem>>, vector<8x8x8xf32>
    %96 = vector.extract_strided_slice %94 {offsets = [0, 2, 0], sizes = [8, 8, 8], strides = [1, 1, 1]} : vector<8x10x8xf32> to vector<8x8x8xf32>
    %97 = arith.addf %95, %96 : vector<8x8x8xf32>
    %c0_94 = arith.constant 0 : index
    %c0_95 = arith.constant 0 : index
    %c0_96 = arith.constant 0 : index
    %98 = vector.load %arg5[%c0_94, %c0_95, %c0_96] : memref<8x8x8xf32, #tpu.memory_space<vmem>>, vector<8x8x8xf32>
    tpu.vector_store %arg5[%c0_94, %c0_95, %c0_96], %97 {strides = array<i32>} : memref<8x8x8xf32, #tpu.memory_space<vmem>>, vector<8x8x8xf32>,
    %c2_i32 = arith.constant 2 : i32
    %99 = arith.index_cast %c2_i32 : i32 to index
    %c0_97 = arith.constant 0 : index
    %c0_98 = arith.constant 0 : index
    %100 = vector.load %arg4[%99, %c0_97, %c0_98] : memref<10x10x4xf32, #tpu.memory_space<vmem>>, vector<8x10x4xf32>
    %101 = vector.shape_cast %100 : vector<8x10x4xf32> to vector<80x4xf32>
    %102 = arith.index_cast %c2_i32 : i32 to index
    %c0_99 = arith.constant 0 : index
    %c0_100 = arith.constant 0 : index
    %c0_101 = arith.constant 0 : index
    %103 = vector.load %arg2[%102, %c0_99, %c0_100, %c0_101] : memref<3x3x4x8xf32, #tpu.memory_space<vmem>>, vector<1x1x4x8xf32>
    %104 = vector.shape_cast %103 : vector<1x1x4x8xf32> to vector<4x8xf32>
    %cst_102 = arith.constant dense<0.000000e+00> : vector<80x8xf32>
    %105 = tpu.matmul %101, %104, %cst_102 {dimension_numbers = #tpu.dot_dimension_numbers<[1], [0], [0], [1], [0, 0, 1, 1], [], []>} : vector<80x4xf32>, vector<4x8xf32>, vector<80x8xf32> -> vector<80x8xf32>
    %106 = vector.shape_cast %105 : vector<80x8xf32> to vector<8x10x8xf32>
    %c0_103 = arith.constant 0 : index
    %c0_104 = arith.constant 0 : index
    %c0_105 = arith.constant 0 : index
    %107 = vector.load %arg5[%c0_103, %c0_104, %c0_105] : memref<8x8x8xf32, #tpu.memory_space<vmem>>, vector<8x8x8xf32>
    %108 = vector.extract_strided_slice %106 {offsets = [0, 0, 0], sizes = [8, 8, 8], strides = [1, 1, 1]} : vector<8x10x8xf32> to vector<8x8x8xf32>
    %109 = arith.addf %107, %108 : vector<8x8x8xf32>
    %c0_106 = arith.constant 0 : index
    %c0_107 = arith.constant 0 : index
    %c0_108 = arith.constant 0 : index
    %110 = vector.load %arg5[%c0_106, %c0_107, %c0_108] : memref<8x8x8xf32, #tpu.memory_space<vmem>>, vector<8x8x8xf32>
    tpu.vector_store %arg5[%c0_106, %c0_107, %c0_108], %109 {strides = array<i32>} : memref<8x8x8xf32, #tpu.memory_space<vmem>>, vector<8x8x8xf32>,
    %111 = arith.index_cast %c2_i32 : i32 to index
    %c1_109 = arith.constant 1 : index
    %c0_110 = arith.constant 0 : index
    %c0_111 = arith.constant 0 : index
    %112 = vector.load %arg2[%111, %c1_109, %c0_110, %c0_111] : memref<3x3x4x8xf32, #tpu.memory_space<vmem>>, vector<1x1x4x8xf32>
    %113 = vector.shape_cast %112 : vector<1x1x4x8xf32> to vector<4x8xf32>
    %cst_112 = arith.constant dense<0.000000e+00> : vector<80x8xf32>
    %114 = tpu.matmul %101, %113, %cst_112 {dimension_numbers = #tpu.dot_dimension_numbers<[1], [0], [0], [1], [0, 0, 1, 1], [], []>} : vector<80x4xf32>, vector<4x8xf32>, vector<80x8xf32> -> vector<80x8xf32>
    %115 = vector.shape_cast %114 : vector<80x8xf32> to vector<8x10x8xf32>
    %c0_113 = arith.constant 0 : index
    %c0_114 = arith.constant 0 : index
    %c0_115 = arith.constant 0 : index
    %116 = vector.load %arg5[%c0_113, %c0_114, %c0_115] : memref<8x8x8xf32, #tpu.memory_space<vmem>>, vector<8x8x8xf32>
    %117 = vector.extract_strided_slice %115 {offsets = [0, 1, 0], sizes = [8, 8, 8], strides = [1, 1, 1]} : vector<8x10x8xf32> to vector<8x8x8xf32>
    %118 = arith.addf %116, %117 : vector<8x8x8xf32>
    %c0_116 = arith.constant 0 : index
    %c0_117 = arith.constant 0 : index
    %c0_118 = arith.constant 0 : index
    %119 = vector.load %arg5[%c0_116, %c0_117, %c0_118] : memref<8x8x8xf32, #tpu.memory_space<vmem>>, vector<8x8x8xf32>
    tpu.vector_store %arg5[%c0_116, %c0_117, %c0_118], %118 {strides = array<i32>} : memref<8x8x8xf32, #tpu.memory_space<vmem>>, vector<8x8x8xf32>,
    %120 = arith.index_cast %c2_i32 : i32 to index
    %c2_119 = arith.constant 2 : index
    %c0_120 = arith.constant 0 : index
    %c0_121 = arith.constant 0 : index
    %121 = vector.load %arg2[%120, %c2_119, %c0_120, %c0_121] : memref<3x3x4x8xf32, #tpu.memory_space<vmem>>, vector<1x1x4x8xf32>
    %122 = vector.shape_cast %121 : vector<1x1x4x8xf32> to vector<4x8xf32>
    %cst_122 = arith.constant dense<0.000000e+00> : vector<80x8xf32>
    %123 = tpu.matmul %101, %122, %cst_122 {dimension_numbers = #tpu.dot_dimension_numbers<[1], [0], [0], [1], [0, 0, 1, 1], [], []>} : vector<80x4xf32>, vector<4x8xf32>, vector<80x8xf32> -> vector<80x8xf32>
    %124 = vector.shape_cast %123 : vector<80x8xf32> to vector<8x10x8xf32>
    %c0_123 = arith.constant 0 : index
    %c0_124 = arith.constant 0 : index
    %c0_125 = arith.constant 0 : index
    %125 = vector.load %arg5[%c0_123, %c0_124, %c0_125] : memref<8x8x8xf32, #tpu.memory_space<vmem>>, vector<8x8x8xf32>
    %126 = vector.extract_strided_slice %124 {offsets = [0, 2, 0], sizes = [8, 8, 8], strides = [1, 1, 1]} : vector<8x10x8xf32> to vector<8x8x8xf32>
    %127 = arith.addf %125, %126 : vector<8x8x8xf32>
    %c0_126 = arith.constant 0 : index
    %c0_127 = arith.constant 0 : index
    %c0_128 = arith.constant 0 : index
    %128 = vector.load %arg5[%c0_126, %c0_127, %c0_128] : memref<8x8x8xf32, #tpu.memory_space<vmem>>, vector<8x8x8xf32>
    tpu.vector_store %arg5[%c0_126, %c0_127, %c0_128], %127 {strides = array<i32>} : memref<8x8x8xf32, #tpu.memory_space<vmem>>, vector<8x8x8xf32>,
    %c3_i32 = arith.constant 3 : i32
    %c0_129 = arith.constant 0 : index
    %c0_130 = arith.constant 0 : index
    %c0_131 = arith.constant 0 : index
    %129 = vector.load %arg5[%c0_129, %c0_130, %c0_131] : memref<8x8x8xf32, #tpu.memory_space<vmem>>, vector<8x8x8xf32>
    %c0_132 = arith.constant 0 : index
    %c0_133 = arith.constant 0 : index
    %c0_134 = arith.constant 0 : index
    %c16 = arith.constant 16 : index
    %130 = vector.load %arg3[%c0_132, %c0_133, %c0_134, %c16] : memref<1x8x8x24xf32, #tpu.memory_space<vmem>>, vector<1x8x8x8xf32>
    %131 = vector.shape_cast %130 : vector<1x8x8x8xf32> to vector<8x8x8xf32>
    %132 = vector.shape_cast %129 : vector<8x8x8xf32> to vector<1x8x8x8xf32>
    tpu.vector_store %arg3[%c0_132, %c0_133, %c0_134, %c16], %132 {strides = array<i32>} : memref<1x8x8x24xf32, #tpu.memory_space<vmem>>, vector<1x8x8x8xf32>,
    return
  }
  func.func @transform_0(%arg0: i32) -> (i32, i32, i32, i32) {
    %c0_i32 = arith.constant 0 : i32
    %c0_i32_0 = arith.constant 0 : i32
    %c0_i32_1 = arith.constant 0 : i32
    %c0_i32_2 = arith.constant 0 : i32
    return %arg0, %c0_i32, %c0_i32_0, %c0_i32_1 : i32, i32, i32, i32
  }
  func.func @transform_1(%arg0: i32) -> (i32, i32, i32, i32) {
    %c0_i32 = arith.constant 0 : i32
    %c0_i32_0 = arith.constant 0 : i32
    %c0_i32_1 = arith.constant 0 : i32
    %c0_i32_2 = arith.constant 0 : i32
    %c0_i32_3 = arith.constant 0 : i32
    return %c0_i32, %c0_i32_0, %c0_i32_1, %c0_i32_2 : i32, i32, i32, i32
  }
  func.func @transform_2(%arg0: i32) -> (i32, i32, i32, i32) {
    %c0_i32 = arith.constant 0 : i32
    %c0_i32_0 = arith.constant 0 : i32
    %c0_i32_1 = arith.constant 0 : i32
    %c0_i32_2 = arith.constant 0 : i32
    return %arg0, %c0_i32, %c0_i32_0, %c0_i32_1 : i32, i32, i32, i32
  }
}

</mosaic_0001>

<llo_original>
// kernel: tpu_custom_call.1
$region0: #{tpu_custom_call.1}
  #allocation0 [shape = 'u32[]', space=smem, size = 0x4, offset = 0x4, fixed_abs, tag = 'smem constant byte address 0x4 - core index']
  #allocation1 [shape = 'u32[144,128]{1,0:T(1,128)}', space=vmem, size = 0x12000, scoped, tag = 'internal scratch']
  #allocation2 [shape = 'f32[10,10,4]{2,1,0:T(8,128)}', space=vmem, size = 0x14000, scoped, tag = 'scratch operand']
  #allocation3 [shape = 'f32[8,8,8]{2,1,0:T(8,128)}', space=vmem, size = 0x8000, scoped, tag = 'scratch operand']
  %s0 = inlined_call_operand.vmem [shape: f32[2,16,16,4], index: 0, kind: input, shape index: {}]
  %s1 = inlined_call_operand.vmem [shape: f32[3,3,4,8], index: 1, kind: input, shape index: {}]
  %s2 = inlined_call_operand.hbm [shape: f32[2,8,8,24], index: 2, kind: output, shape index: {}]
  %s3 = sld [smem:[#allocation0]]
  $region41: #{tpu_custom_call.1} parent=0
    _
  %s5 = ssub.s32 1, %s3
  %s6 = scalar_select 0, %s5, %s3
  $region1: #{tpu_custom_call.1} parent=0
    #allocation4 [shape = 'u8[65536]{0}', space=vmem, size = 0x10000, scoped, tag = 'output window, operand 0']
    #allocation5 [shape = 's32[2]{0}', space=sflag, size = 0x8, scoped, tag = 'scoped memory for tpu_custom_call.1']
    %7 = vsyncpa [#allocation5], 0
    %s8 = scalar_lea.sflag [#allocation5], 1
    %9 = vsyncpa %s8, 0
    loop: start=0, step=1, limit=4
    $region2: #{tpu_custom_call.1} parent=1 // loop_pre_header
      _
    $region3: #{tpu_custom_call.1} parent=1 // loop_header
      %s11 = sphi 0, %s15
      %p12 = scmp.ge.s32.totalorder %s11, 4
      %s21 = sphi 0, %s23
      %s24 = sphi 0, %s21
      %s25 = sphi 0, %s24
      %s41 = sphi 0, %s25
      %s45 = sphi 0, %s45
      %s47 = sphi 0, %s45
      %s48 = sphi 0, %s47
      %s62 = sphi 0, %s48
      %s68 = sphi 0, %s70
      %s71 = sphi 0, %s68
      %s72 = sphi 0, %s71
      %s88 = sphi 0, %s72
    $region4: #{tpu_custom_call.1} parent=1 // loop_header_branch
      %14 = sbr.rel (%p12) target = $region8
    $region5: #{tpu_custom_call.1} parent=1 // loop_body
      %s16 = ssub.s32 %s11, 1
      %s17 = ssub.s32 %s11, 2
      %s18 = sadd.s32 %s11, 1
      %s19 = ssub.s32 %s11, %s18
      %p20 = scmp.eq.s32.totalorder %s19, 0
      %s22 = sadd.s32 %s21, 1
      %s23 = scalar_select %p20, %s21, %s22
      %p26 = pneg %p20
      %p27 = scmp.eq.s32.totalorder %s11, 1
      %p28 = por %p26, %p27
      %p29 = scmp.ne.s32.totalorder %s21, %s24
      %p30 = scmp.eq.s32.totalorder %s11, 0
      %p31 = por %p29, %p30
      %p32 = scmp.ne.s32.totalorder %s21, %s24
      %p33 = scmp.eq.s32.totalorder %s16, 1
      %p34 = por %p32, %p33
      %p35 = scmp.ne.s32.totalorder %s24, %s25
      %p36 = scmp.eq.s32.totalorder %s16, 0
      %p37 = por %p35, %p36
      %p38 = scmp.ne.s32.totalorder %s24, %s25
      %p39 = scmp.eq.s32.totalorder %s17, 1
      %p40 = por %p38, %p39
      %p42 = scmp.ne.s32.totalorder %s25, %s41
      %p43 = scmp.eq.s32.totalorder %s17, 0
      %p44 = por %p42, %p43
      %s46 = sadd.s32 %s45, 1
      %p49 = scmp.eq.s32.totalorder %s11, 1
      %p50 = scmp.ne.s32.totalorder %s45, %s47
      %p51 = scmp.eq.s32.totalorder %s11, 0
      %p52 = por %p50, %p51
      %p53 = scmp.ne.s32.totalorder %s45, %s47
      %p54 = scmp.eq.s32.totalorder %s16, 1
      %p55 = por %p53, %p54
      %p56 = scmp.ne.s32.totalorder %s47, %s48
      %p57 = scmp.eq.s32.totalorder %s16, 0
      %p58 = por %p56, %p57
      %p59 = scmp.ne.s32.totalorder %s47, %s48
      %p60 = scmp.eq.s32.totalorder %s17, 1
      %p61 = por %p59, %p60
      %p63 = scmp.ne.s32.totalorder %s48, %s62
      %p64 = scmp.eq.s32.totalorder %s17, 0
      %p65 = por %p63, %p64
      %s66 = ssub.s32 %s11, %s18
      %p67 = scmp.eq.s32.totalorder %s66, 0
      %s69 = sadd.s32 %s68, 1
      %s70 = scalar_select %p67, %s68, %s69
      %p73 = pneg %p67
      %p74 = scmp.eq.s32.totalorder %s11, 1
      %p75 = por %p73, %p74
      %p76 = scmp.ne.s32.totalorder %s68, %s71
      %p77 = scmp.eq.s32.totalorder %s11, 0
      %p78 = por %p76, %p77
      %p79 = scmp.ne.s32.totalorder %s68, %s71
      %p80 = scmp.eq.s32.totalorder %s16, 1
      %p81 = por %p79, %p80
      %p82 = scmp.ne.s32.totalorder %s71, %s72
      %p83 = scmp.eq.s32.totalorder %s16, 0
      %p84 = por %p82, %p83
      %p85 = scmp.ne.s32.totalorder %s71, %s72
      %p86 = scmp.eq.s32.totalorder %s17, 1
      %p87 = por %p85, %p86
      %p89 = scmp.ne.s32.totalorder %s72, %s88
      %p90 = scmp.eq.s32.totalorder %s17, 0
      %p91 = por %p89, %p90
      %p92 = scmp.le.s32.totalorder 1, %s11
      %p93 = scmp.lt.s32.totalorder %s11, 3
      %p94 = pnand %p92, %p93
      %p95 = pneg %p94
      // Predicated region
      $region9: #{tpu_custom_call.1} parent=5 // pred_check
        _
      $region10: #{tpu_custom_call.1} parent=5 // pred_check_branch
        %97 = sbr.rel (%p94) target = $region12
      $region11: #{tpu_custom_call.1} parent=5 // pred_region
        %s98 = ssub.s32 %s11, 1
        // Predicated region
        $region13: #{tpu_custom_call.1} parent=11 // pred_check
          %p99 = pneg %p58
        $region14: #{tpu_custom_call.1} parent=11 // pred_check_branch
          %101 = sbr.rel (%p99) target = $region16
        $region15: #{tpu_custom_call.1} parent=11 // pred_region
          _
        $region16: #{tpu_custom_call.1} parent=11 // pred_fallthru
          _
      $region12: #{tpu_custom_call.1} parent=5 // pred_fallthru
        _
      %p102 = scmp.lt.s32.totalorder %s11, 2
      // Predicated region
      $region17: #{tpu_custom_call.1} parent=5 // pred_check
        %p103 = pneg %p102
      $region18: #{tpu_custom_call.1} parent=5 // pred_check_branch
        %105 = sbr.rel (%p103) target = $region20
      $region19: #{tpu_custom_call.1} parent=5 // pred_region
        // Predicated region
        $region21: #{tpu_custom_call.1} parent=19 // pred_check
          %p106 = pneg %p31
        $region22: #{tpu_custom_call.1} parent=19 // pred_check_branch
          %108 = sbr.rel (%p106) target = $region24
        $region23: #{tpu_custom_call.1} parent=19 // pred_region
          %p109 = scmp.lt.s32.totalorder %s11, 1
          %s110 = scalar_select %p109, %s11, 1
          %s111 = smul.addr %s110, 32
          %s112 = smul.addr %s111, 8
          %s113 = scalar_lea.vmem %s0, %s112
        $region24: #{tpu_custom_call.1} parent=19 // pred_fallthru
          _
      $region20: #{tpu_custom_call.1} parent=5 // pred_fallthru
        _
      %p114 = scmp.le.s32.totalorder 1, %s11
      %p115 = scmp.lt.s32.totalorder %s11, 3
      %p116 = pnand %p114, %p115
      %p117 = pneg %p116
      // Predicated region
      $region25: #{tpu_custom_call.1} parent=5 // pred_check
        _
      $region26: #{tpu_custom_call.1} parent=5 // pred_check_branch
        %119 = sbr.rel (%p116) target = $region28
      $region27: #{tpu_custom_call.1} parent=5 // pred_region
        %s120 = ssub.s32 %s11, 1
        %p121 = scmp.lt.s32.totalorder %s16, 1
        %s122 = scalar_select %p121, %s16, 1
        %s123 = smul.addr %s122, 32
        %s124 = smul.addr %s123, 8
        %s125 = scalar_lea.vmem %s0, %s124
        %p126 = pneg %p37
        %p127 = pneg %p34
        %p128 = pneg %p58
        %p129 = pneg %p55
        %p130 = pneg %p84
        %p131 = pneg %p81
        %s132 = sand.u32 %s71, 1
        %s133 = scalar_lea.sflag [#allocation5], %s132
        %s134 = sand.u32 %s71, 1
        %s135 = smul.addr %s134, 64
        %s136 = scalar_lea.vmem [#allocation4], %s135
        %p137 = scmp.lt.s32.totalorder %s16, 1
        %s138 = scalar_select %p137, %s16, 1
        %s139 = smul.addr %s138, 32
        %s140 = smul.addr %s139, 8
        %s141 = scalar_lea.vmem %s0, %s140
        %v142 = vld [vmem:[%s141] sm:$0xff]
        %v143 = vld [vmem:[%s141 + $0x8] sm:$0xff]
        %v144 = vld [vmem:[%s141 + $0x10] sm:$0xff]
        %v145 = vld [vmem:[%s141 + $0x18] sm:$0xff]
        %v146 = vld [vmem:[%s141 + $0x20] sm:$0xff]
        %v147 = vld [vmem:[%s141 + $0x28] sm:$0xff]
        %v148 = vld [vmem:[%s141 + $0x30] sm:$0xff]
        %v149 = vld [vmem:[%s141 + $0x38] sm:$0xff]
        %v150 = vld [vmem:[%s141 + $0x40] sm:$0xff]
        %v151 = vld [vmem:[%s141 + $0x48] sm:$0xff]
        %v152 = vld [vmem:[%s141 + $0x50] sm:$0xff]
        %v153 = vld [vmem:[%s141 + $0x58] sm:$0xff]
        %v154 = vld [vmem:[%s141 + $0x60] sm:$0xff]
        %v155 = vld [vmem:[%s141 + $0x68] sm:$0xff]
        %v156 = vld [vmem:[%s141 + $0x70] sm:$0xff]
        %v157 = vld [vmem:[%s141 + $0x78] sm:$0xff]
        %v158 = vld [vmem:[%s141 + $0x80] sm:$0xff]
        %v159 = vld [vmem:[%s141 + $0x88] sm:$0xff]
        %v160 = vld [vmem:[%s141 + $0x90] sm:$0xff]
        %v161 = vld [vmem:[%s141 + $0x98] sm:$0xff]
        %v162 = vld [vmem:[%s141 + $0xa0] sm:$0xff]
        %v163 = vld [vmem:[%s141 + $0xa8] sm:$0xff]
        %v164 = vld [vmem:[%s141 + $0xb0] sm:$0xff]
        %v165 = vld [vmem:[%s141 + $0xb8] sm:$0xff]
        %v166 = vld [vmem:[%s141 + $0xc0] sm:$0xff]
        %v167 = vld [vmem:[%s141 + $0xc8] sm:$0xff]
        %v168 = vld [vmem:[%s141 + $0xd0] sm:$0xff]
        %v169 = vld [vmem:[%s141 + $0xd8] sm:$0xff]
        %v170 = vld [vmem:[%s141 + $0xe0] sm:$0xff]
        %v171 = vld [vmem:[%s141 + $0xe8] sm:$0xff]
        %v172 = vld [vmem:[%s141 + $0xf0] sm:$0xff]
        %v173 = vld [vmem:[%s141 + $0xf8] sm:$0xff]
        %vm174 = vcmask 31744
        %175 = vst.msk [vmem:[%s136] sm:$0xff] %vm174, %v142
        %176 = vst.msk [vmem:[%s136 + $0x8] sm:$0xff] %vm174, %v144
        %177 = vst.msk [vmem:[%s136 + $0x10] sm:$0xff] %vm174, %v146
        %178 = vst.msk [vmem:[%s136 + $0x18] sm:$0xff] %vm174, %v148
        %179 = vst.msk [vmem:[%s136 + $0x20] sm:$0xff] %vm174, %v150
        %180 = vst.msk [vmem:[%s136 + $0x28] sm:$0xff] %vm174, %v152
        %181 = vst.msk [vmem:[%s136 + $0x30] sm:$0xff] %vm174, %v154
        %182 = vst.msk [vmem:[%s136 + $0x38] sm:$0xff] %vm174, %v156
        %191 = vrot.lane.b32.xlu0 %v158, 4
        %v192 = vpop.permute.xlu0 %191
        %193 = vrot.lane.b32.xlu0 %v160, 4
        %v194 = vpop.permute.xlu0 %193
        %195 = vrot.lane.b32.xlu0 %v162, 4
        %v196 = vpop.permute.xlu0 %195
        %197 = vrot.lane.b32.xlu0 %v164, 4
        %v198 = vpop.permute.xlu0 %197
        %199 = vrot.lane.b32.xlu0 %v166, 4
        %v200 = vpop.permute.xlu0 %199
        %201 = vrot.lane.b32.xlu0 %v168, 4
        %v202 = vpop.permute.xlu0 %201
        %203 = vrot.lane.b32.xlu0 %v170, 4
        %v204 = vpop.permute.xlu0 %203
        %205 = vrot.lane.b32.xlu0 %v172, 4
        %v206 = vpop.permute.xlu0 %205
        %vm215 = vcmask 64544
        %216 = vst.msk [vmem:[%s136] sm:$0xff] %vm215, %v192
        %217 = vst.msk [vmem:[%s136 + $0x8] sm:$0xff] %vm215, %v194
        %218 = vst.msk [vmem:[%s136 + $0x10] sm:$0xff] %vm215, %v196
        %219 = vst.msk [vmem:[%s136 + $0x18] sm:$0xff] %vm215, %v198
        %220 = vst.msk [vmem:[%s136 + $0x20] sm:$0xff] %vm215, %v200
        %221 = vst.msk [vmem:[%s136 + $0x28] sm:$0xff] %vm215, %v202
        %222 = vst.msk [vmem:[%s136 + $0x30] sm:$0xff] %vm215, %v204
        %223 = vst.msk [vmem:[%s136 + $0x38] sm:$0xff] %vm215, %v206
        %232 = vrot.lane.b32.xlu0 %v143, 8
        %v233 = vpop.permute.xlu0 %232
        %234 = vrot.lane.b32.xlu0 %v145, 8
        %v235 = vpop.permute.xlu0 %234
        %236 = vrot.lane.b32.xlu0 %v147, 8
        %v237 = vpop.permute.xlu0 %236
        %238 = vrot.lane.b32.xlu0 %v149, 8
        %v239 = vpop.permute.xlu0 %238
        %240 = vrot.lane.b32.xlu0 %v151, 8
        %v241 = vpop.permute.xlu0 %240
        %242 = vrot.lane.b32.xlu0 %v153, 8
        %v243 = vpop.permute.xlu0 %242
        %244 = vrot.lane.b32.xlu0 %v155, 8
        %v245 = vpop.permute.xlu0 %244
        %246 = vrot.lane.b32.xlu0 %v157, 8
        %v247 = vpop.permute.xlu0 %246
        %vm256 = vcmask 97344
        %257 = vst.msk [vmem:[%s136] sm:$0xff] %vm256, %v233
        %258 = vst.msk [vmem:[%s136 + $0x8] sm:$0xff] %vm256, %v235
        %259 = vst.msk [vmem:[%s136 + $0x10] sm:$0xff] %vm256, %v237
        %260 = vst.msk [vmem:[%s136 + $0x18] sm:$0xff] %vm256, %v239
        %261 = vst.msk [vmem:[%s136 + $0x20] sm:$0xff] %vm256, %v241
        %262 = vst.msk [vmem:[%s136 + $0x28] sm:$0xff] %vm256, %v243
        %263 = vst.msk [vmem:[%s136 + $0x30] sm:$0xff] %vm256, %v245
        %264 = vst.msk [vmem:[%s136 + $0x38] sm:$0xff] %vm256, %v247
        %273 = vrot.lane.b32.xlu0 %v159, 12
        %v274 = vpop.permute.xlu0 %273
        %275 = vrot.lane.b32.xlu0 %v161, 12
        %v276 = vpop.permute.xlu0 %275
        %277 = vrot.lane.b32.xlu0 %v163, 12
        %v278 = vpop.permute.xlu0 %277
        %279 = vrot.lane.b32.xlu0 %v165, 12
        %v280 = vpop.permute.xlu0 %279
        %281 = vrot.lane.b32.xlu0 %v167, 12
        %v282 = vpop.permute.xlu0 %281
        %283 = vrot.lane.b32.xlu0 %v169, 12
        %v284 = vpop.permute.xlu0 %283
        %285 = vrot.lane.b32.xlu0 %v171, 12
        %v286 = vpop.permute.xlu0 %285
        %287 = vrot.lane.b32.xlu0 %v173, 12
        %v288 = vpop.permute.xlu0 %287
        %vm297 = vcmask 130144
        %298 = vst.msk [vmem:[%s136] sm:$0xff] %vm297, %v274
        %299 = vst.msk [vmem:[%s136 + $0x8] sm:$0xff] %vm297, %v276
        %300 = vst.msk [vmem:[%s136 + $0x10] sm:$0xff] %vm297, %v278
        %301 = vst.msk [vmem:[%s136 + $0x18] sm:$0xff] %vm297, %v280
        %302 = vst.msk [vmem:[%s136 + $0x20] sm:$0xff] %vm297, %v282
        %303 = vst.msk [vmem:[%s136 + $0x28] sm:$0xff] %vm297, %v284
        %304 = vst.msk [vmem:[%s136 + $0x30] sm:$0xff] %vm297, %v286
        %305 = vst.msk [vmem:[%s136 + $0x38] sm:$0xff] %vm297, %v288
        %v306 = vmax.f32 %v142, %v144
        %v307 = vmax.f32 %v143, %v145
        %v308 = vmax.f32 %v146, %v148
        %v309 = vmax.f32 %v147, %v149
        %v310 = vmax.f32 %v150, %v152
        %v311 = vmax.f32 %v151, %v153
        %v312 = vmax.f32 %v154, %v156
        %v313 = vmax.f32 %v155, %v157
        %v314 = vmax.f32 %v158, %v160
        %v315 = vmax.f32 %v159, %v161
        %v316 = vmax.f32 %v162, %v164
        %v317 = vmax.f32 %v163, %v165
        %v318 = vmax.f32 %v166, %v168
        %v319 = vmax.f32 %v167, %v169
        %v320 = vmax.f32 %v170, %v172
        %v321 = vmax.f32 %v171, %v173
        %v338 = vcombine.high %v306, %v306
        %v340 = vunpack.c.l.s4 1983009808
        %v341 = vunpack.c.0.s8 %v340
        %v342 = vlaneseq
        %v343 = vshrl.u32 %v342, 7
        %v344 = vsub.s32 %v341, %v343
        %v345 = vrot.slane %v306, %v344
        %v347 = vunpack.c.l.s4 1983009808
        %v348 = vunpack.c.0.s8 %v347
        %v349 = vlaneseq
        %v350 = vshrl.u32 %v349, 7
        %v351 = vsub.s32 %v348, %v350
        %v352 = vrot.slane %v338, %v351
        %v353 = vcombine.high %v345, %v345
        %v354 = vcombine.high %v352, %v352
        %v355 = vcombine.high %v307, %v307
        %v357 = vunpack.c.l.s4 1983009808
        %v358 = vunpack.c.0.s8 %v357
        %v359 = vlaneseq
        %v360 = vshrl.u32 %v359, 7
        %v361 = vsub.s32 %v358, %v360
        %v362 = vrot.slane %v307, %v361
        %v364 = vunpack.c.l.s4 1983009808
        %v365 = vunpack.c.0.s8 %v364
        %v366 = vlaneseq
        %v367 = vshrl.u32 %v366, 7
        %v368 = vsub.s32 %v365, %v367
        %v369 = vrot.slane %v355, %v368
        %v370 = vcombine.high %v362, %v362
        %v371 = vcombine.high %v369, %v369
        %v372 = vcombine.high %v308, %v308
        %v374 = vunpack.c.l.s4 1983009808
        %v375 = vunpack.c.0.s8 %v374
        %v376 = vlaneseq
        %v377 = vshrl.u32 %v376, 7
        %v378 = vsub.s32 %v375, %v377
        %v379 = vrot.slane %v308, %v378
        %v381 = vunpack.c.l.s4 1983009808
        %v382 = vunpack.c.0.s8 %v381
        %v383 = vlaneseq
        %v384 = vshrl.u32 %v383, 7
        %v385 = vsub.s32 %v382, %v384
        %v386 = vrot.slane %v372, %v385
        %v387 = vcombine.high %v379, %v379
        %v388 = vcombine.high %v386, %v386
        %v389 = vcombine.high %v309, %v309
        %v391 = vunpack.c.l.s4 1983009808
        %v392 = vunpack.c.0.s8 %v391
        %v393 = vlaneseq
        %v394 = vshrl.u32 %v393, 7
        %v395 = vsub.s32 %v392, %v394
        %v396 = vrot.slane %v309, %v395
        %v398 = vunpack.c.l.s4 1983009808
        %v399 = vunpack.c.0.s8 %v398
        %v400 = vlaneseq
        %v401 = vshrl.u32 %v400, 7
        %v402 = vsub.s32 %v399, %v401
        %v403 = vrot.slane %v389, %v402
        %v404 = vcombine.high %v396, %v396
        %v405 = vcombine.high %v403, %v403
        %v406 = vcombine.high %v310, %v310
        %v408 = vunpack.c.l.s4 1983009808
        %v409 = vunpack.c.0.s8 %v408
        %v410 = vlaneseq
        %v411 = vshrl.u32 %v410, 7
        %v412 = vsub.s32 %v409, %v411
        %v413 = vrot.slane %v310, %v412
        %v415 = vunpack.c.l.s4 1983009808
        %v416 = vunpack.c.0.s8 %v415
        %v417 = vlaneseq
        %v418 = vshrl.u32 %v417, 7
        %v419 = vsub.s32 %v416, %v418
        %v420 = vrot.slane %v406, %v419
        %v421 = vcombine.high %v413, %v413
        %v422 = vcombine.high %v420, %v420
        %v423 = vcombine.high %v311, %v311
        %v425 = vunpack.c.l.s4 1983009808
        %v426 = vunpack.c.0.s8 %v425
        %v427 = vlaneseq
        %v428 = vshrl.u32 %v427, 7
        %v429 = vsub.s32 %v426, %v428
        %v430 = vrot.slane %v311, %v429
        %v432 = vunpack.c.l.s4 1983009808
        %v433 = vunpack.c.0.s8 %v432
        %v434 = vlaneseq
        %v435 = vshrl.u32 %v434, 7
        %v436 = vsub.s32 %v433, %v435
        %v437 = vrot.slane %v423, %v436
        %v438 = vcombine.high %v430, %v430
        %v439 = vcombine.high %v437, %v437
        %v440 = vcombine.high %v312, %v312
        %v442 = vunpack.c.l.s4 1983009808
        %v443 = vunpack.c.0.s8 %v442
        %v444 = vlaneseq
        %v445 = vshrl.u32 %v444, 7
        %v446 = vsub.s32 %v443, %v445
        %v447 = vrot.slane %v312, %v446
        %v449 = vunpack.c.l.s4 1983009808
        %v450 = vunpack.c.0.s8 %v449
        %v451 = vlaneseq
        %v452 = vshrl.u32 %v451, 7
        %v453 = vsub.s32 %v450, %v452
        %v454 = vrot.slane %v440, %v453
        %v455 = vcombine.high %v447, %v447
        %v456 = vcombine.high %v454, %v454
        %v457 = vcombine.high %v313, %v313
        %v459 = vunpack.c.l.s4 1983009808
        %v460 = vunpack.c.0.s8 %v459
        %v461 = vlaneseq
        %v462 = vshrl.u32 %v461, 7
        %v463 = vsub.s32 %v460, %v462
        %v464 = vrot.slane %v313, %v463
        %v466 = vunpack.c.l.s4 1983009808
        %v467 = vunpack.c.0.s8 %v466
        %v468 = vlaneseq
        %v469 = vshrl.u32 %v468, 7
        %v470 = vsub.s32 %v467, %v469
        %v471 = vrot.slane %v457, %v470
        %v472 = vcombine.high %v464, %v464
        %v473 = vcombine.high %v471, %v471
        %v474 = vcombine.high %v314, %v314
        %v476 = vunpack.c.l.s4 1983009808
        %v477 = vunpack.c.0.s8 %v476
        %v478 = vlaneseq
        %v479 = vshrl.u32 %v478, 7
        %v480 = vsub.s32 %v477, %v479
        %v481 = vrot.slane %v314, %v480
        %v483 = vunpack.c.l.s4 1983009808
        %v484 = vunpack.c.0.s8 %v483
        %v485 = vlaneseq
        %v486 = vshrl.u32 %v485, 7
        %v487 = vsub.s32 %v484, %v486
        %v488 = vrot.slane %v474, %v487
        %v489 = vcombine.high %v481, %v481
        %v490 = vcombine.high %v488, %v488
        %v491 = vcombine.high %v315, %v315
        %v493 = vunpack.c.l.s4 1983009808
        %v494 = vunpack.c.0.s8 %v493
        %v495 = vlaneseq
        %v496 = vshrl.u32 %v495, 7
        %v497 = vsub.s32 %v494, %v496
        %v498 = vrot.slane %v315, %v497
        %v500 = vunpack.c.l.s4 1983009808
        %v501 = vunpack.c.0.s8 %v500
        %v502 = vlaneseq
        %v503 = vshrl.u32 %v502, 7
        %v504 = vsub.s32 %v501, %v503
        %v505 = vrot.slane %v491, %v504
        %v506 = vcombine.high %v498, %v498
        %v507 = vcombine.high %v505, %v505
        %v508 = vcombine.high %v316, %v316
        %v510 = vunpack.c.l.s4 1983009808
        %v511 = vunpack.c.0.s8 %v510
        %v512 = vlaneseq
        %v513 = vshrl.u32 %v512, 7
        %v514 = vsub.s32 %v511, %v513
        %v515 = vrot.slane %v316, %v514
        %v517 = vunpack.c.l.s4 1983009808
        %v518 = vunpack.c.0.s8 %v517
        %v519 = vlaneseq
        %v520 = vshrl.u32 %v519, 7
        %v521 = vsub.s32 %v518, %v520
        %v522 = vrot.slane %v508, %v521
        %v523 = vcombine.high %v515, %v515
        %v524 = vcombine.high %v522, %v522
        %v525 = vcombine.high %v317, %v317
        %v527 = vunpack.c.l.s4 1983009808
        %v528 = vunpack.c.0.s8 %v527
        %v529 = vlaneseq
        %v530 = vshrl.u32 %v529, 7
        %v531 = vsub.s32 %v528, %v530
        %v532 = vrot.slane %v317, %v531
        %v534 = vunpack.c.l.s4 1983009808
        %v535 = vunpack.c.0.s8 %v534
        %v536 = vlaneseq
        %v537 = vshrl.u32 %v536, 7
        %v538 = vsub.s32 %v535, %v537
        %v539 = vrot.slane %v525, %v538
        %v540 = vcombine.high %v532, %v532
        %v541 = vcombine.high %v539, %v539
        %v542 = vcombine.high %v318, %v318
        %v544 = vunpack.c.l.s4 1983009808
        %v545 = vunpack.c.0.s8 %v544
        %v546 = vlaneseq
        %v547 = vshrl.u32 %v546, 7
        %v548 = vsub.s32 %v545, %v547
        %v549 = vrot.slane %v318, %v548
        %v551 = vunpack.c.l.s4 1983009808
        %v552 = vunpack.c.0.s8 %v551
        %v553 = vlaneseq
        %v554 = vshrl.u32 %v553, 7
        %v555 = vsub.s32 %v552, %v554
        %v556 = vrot.slane %v542, %v555
        %v557 = vcombine.high %v549, %v549
        %v558 = vcombine.high %v556, %v556
        %v559 = vcombine.high %v319, %v319
        %v561 = vunpack.c.l.s4 1983009808
        %v562 = vunpack.c.0.s8 %v561
        %v563 = vlaneseq
        %v564 = vshrl.u32 %v563, 7
        %v565 = vsub.s32 %v562, %v564
        %v566 = vrot.slane %v319, %v565
        %v568 = vunpack.c.l.s4 1983009808
        %v569 = vunpack.c.0.s8 %v568
        %v570 = vlaneseq
        %v571 = vshrl.u32 %v570, 7
        %v572 = vsub.s32 %v569, %v571
        %v573 = vrot.slane %v559, %v572
        %v574 = vcombine.high %v566, %v566
        %v575 = vcombine.high %v573, %v573
        %v576 = vcombine.high %v320, %v320
        %v578 = vunpack.c.l.s4 1983009808
        %v579 = vunpack.c.0.s8 %v578
        %v580 = vlaneseq
        %v581 = vshrl.u32 %v580, 7
        %v582 = vsub.s32 %v579, %v581
        %v583 = vrot.slane %v320, %v582
        %v585 = vunpack.c.l.s4 1983009808
        %v586 = vunpack.c.0.s8 %v585
        %v587 = vlaneseq
        %v588 = vshrl.u32 %v587, 7
        %v589 = vsub.s32 %v586, %v588
        %v590 = vrot.slane %v576, %v589
        %v591 = vcombine.high %v583, %v583
        %v592 = vcombine.high %v590, %v590
        %v593 = vcombine.high %v321, %v321
        %v595 = vunpack.c.l.s4 1983009808
        %v596 = vunpack.c.0.s8 %v595
        %v597 = vlaneseq
        %v598 = vshrl.u32 %v597, 7
        %v599 = vsub.s32 %v596, %v598
        %v600 = vrot.slane %v321, %v599
        %v602 = vunpack.c.l.s4 1983009808
        %v603 = vunpack.c.0.s8 %v602
        %v604 = vlaneseq
        %v605 = vshrl.u32 %v604, 7
        %v606 = vsub.s32 %v603, %v605
        %v607 = vrot.slane %v593, %v606
        %v608 = vcombine.high %v600, %v600
        %v609 = vcombine.high %v607, %v607
        %v674 = vrot.slane %v345, 7
        %v675 = vrot.slane %v674, 2
        %v676 = vrot.slane %v353, 7
        %v677 = vrot.slane %v676, 2
        %v678 = vrot.slane %v352, 7
        %v679 = vrot.slane %v678, 2
        %v680 = vrot.slane %v354, 7
        %v681 = vrot.slane %v680, 2
        %v682 = vrot.slane %v362, 7
        %v683 = vrot.slane %v682, 2
        %v684 = vrot.slane %v370, 7
        %v685 = vrot.slane %v684, 2
        %v686 = vrot.slane %v369, 7
        %v687 = vrot.slane %v686, 2
        %v688 = vrot.slane %v371, 7
        %v689 = vrot.slane %v688, 2
        %v690 = vrot.slane %v379, 7
        %v691 = vrot.slane %v690, 2
        %v692 = vrot.slane %v387, 7
        %v693 = vrot.slane %v692, 2
        %v694 = vrot.slane %v386, 7
        %v695 = vrot.slane %v694, 2
        %v696 = vrot.slane %v388, 7
        %v697 = vrot.slane %v696, 2
        %v698 = vrot.slane %v396, 7
        %v699 = vrot.slane %v698, 2
        %v700 = vrot.slane %v404, 7
        %v701 = vrot.slane %v700, 2
        %v702 = vrot.slane %v403, 7
        %v703 = vrot.slane %v702, 2
        %v704 = vrot.slane %v405, 7
        %v705 = vrot.slane %v704, 2
        %v706 = vrot.slane %v413, 7
        %v707 = vrot.slane %v706, 2
        %v708 = vrot.slane %v421, 7
        %v709 = vrot.slane %v708, 2
        %v710 = vrot.slane %v420, 7
        %v711 = vrot.slane %v710, 2
        %v712 = vrot.slane %v422, 7
        %v713 = vrot.slane %v712, 2
        %v714 = vrot.slane %v430, 7
        %v715 = vrot.slane %v714, 2
        %v716 = vrot.slane %v438, 7
        %v717 = vrot.slane %v716, 2
        %v718 = vrot.slane %v437, 7
        %v719 = vrot.slane %v718, 2
        %v720 = vrot.slane %v439, 7
        %v721 = vrot.slane %v720, 2
        %v722 = vrot.slane %v447, 7
        %v723 = vrot.slane %v722, 2
        %v724 = vrot.slane %v455, 7
        %v725 = vrot.slane %v724, 2
        %v726 = vrot.slane %v454, 7
        %v727 = vrot.slane %v726, 2
        %v728 = vrot.slane %v456, 7
        %v729 = vrot.slane %v728, 2
        %v730 = vrot.slane %v464, 7
        %v731 = vrot.slane %v730, 2
        %v732 = vrot.slane %v472, 7
        %v733 = vrot.slane %v732, 2
        %v734 = vrot.slane %v471, 7
        %v735 = vrot.slane %v734, 2
        %v736 = vrot.slane %v473, 7
        %v737 = vrot.slane %v736, 2
        %v738 = vrot.slane %v481, 7
        %v739 = vrot.slane %v738, 2
        %v740 = vrot.slane %v489, 7
        %v741 = vrot.slane %v740, 2
        %v742 = vrot.slane %v488, 7
        %v743 = vrot.slane %v742, 2
        %v744 = vrot.slane %v490, 7
        %v745 = vrot.slane %v744, 2
        %v746 = vrot.slane %v498, 7
        %v747 = vrot.slane %v746, 2
        %v748 = vrot.slane %v506, 7
        %v749 = vrot.slane %v748, 2
        %v750 = vrot.slane %v505, 7
        %v751 = vrot.slane %v750, 2
        %v752 = vrot.slane %v507, 7
        %v753 = vrot.slane %v752, 2
        %v754 = vrot.slane %v515, 7
        %v755 = vrot.slane %v754, 2
        %v756 = vrot.slane %v523, 7
        %v757 = vrot.slane %v756, 2
        %v758 = vrot.slane %v522, 7
        %v759 = vrot.slane %v758, 2
        %v760 = vrot.slane %v524, 7
        %v761 = vrot.slane %v760, 2
        %v762 = vrot.slane %v532, 7
        %v763 = vrot.slane %v762, 2
        %v764 = vrot.slane %v540, 7
        %v765 = vrot.slane %v764, 2
        %v766 = vrot.slane %v539, 7
        %v767 = vrot.slane %v766, 2
        %v768 = vrot.slane %v541, 7
        %v769 = vrot.slane %v768, 2
        %v770 = vrot.slane %v549, 7
        %v771 = vrot.slane %v770, 2
        %v772 = vrot.slane %v557, 7
        %v773 = vrot.slane %v772, 2
        %v774 = vrot.slane %v556, 7
        %v775 = vrot.slane %v774, 2
        %v776 = vrot.slane %v558, 7
        %v777 = vrot.slane %v776, 2
        %v778 = vrot.slane %v566, 7
        %v779 = vrot.slane %v778, 2
        %v780 = vrot.slane %v574, 7
        %v781 = vrot.slane %v780, 2
        %v782 = vrot.slane %v573, 7
        %v783 = vrot.slane %v782, 2
        %v784 = vrot.slane %v575, 7
        %v785 = vrot.slane %v784, 2
        %v786 = vrot.slane %v583, 7
        %v787 = vrot.slane %v786, 2
        %v788 = vrot.slane %v591, 7
        %v789 = vrot.slane %v788, 2
        %v790 = vrot.slane %v590, 7
        %v791 = vrot.slane %v790, 2
        %v792 = vrot.slane %v592, 7
        %v793 = vrot.slane %v792, 2
        %v794 = vrot.slane %v600, 7
        %v795 = vrot.slane %v794, 2
        %v796 = vrot.slane %v608, 7
        %v797 = vrot.slane %v796, 2
        %v798 = vrot.slane %v607, 7
        %v799 = vrot.slane %v798, 2
        %v800 = vrot.slane %v609, 7
        %v801 = vrot.slane %v800, 2
        %v866 = vmax.f32 %v345, %v675
        %v867 = vmax.f32 %v353, %v677
        %v868 = vmax.f32 %v352, %v679
        %v869 = vmax.f32 %v354, %v681
        %v870 = vmax.f32 %v362, %v683
        %v871 = vmax.f32 %v370, %v685
        %v872 = vmax.f32 %v369, %v687
        %v873 = vmax.f32 %v371, %v689
        %v874 = vmax.f32 %v379, %v691
        %v875 = vmax.f32 %v387, %v693
        %v876 = vmax.f32 %v386, %v695
        %v877 = vmax.f32 %v388, %v697
        %v878 = vmax.f32 %v396, %v699
        %v879 = vmax.f32 %v404, %v701
        %v880 = vmax.f32 %v403, %v703
        %v881 = vmax.f32 %v405, %v705
        %v882 = vmax.f32 %v413, %v707
        %v883 = vmax.f32 %v421, %v709
        %v884 = vmax.f32 %v420, %v711
        %v885 = vmax.f32 %v422, %v713
        %v886 = vmax.f32 %v430, %v715
        %v887 = vmax.f32 %v438, %v717
        %v888 = vmax.f32 %v437, %v719
        %v889 = vmax.f32 %v439, %v721
        %v890 = vmax.f32 %v447, %v723
        %v891 = vmax.f32 %v455, %v725
        %v892 = vmax.f32 %v454, %v727
        %v893 = vmax.f32 %v456, %v729
        %v894 = vmax.f32 %v464, %v731
        %v895 = vmax.f32 %v472, %v733
        %v896 = vmax.f32 %v471, %v735
        %v897 = vmax.f32 %v473, %v737
        %v898 = vmax.f32 %v481, %v739
        %v899 = vmax.f32 %v489, %v741
        %v900 = vmax.f32 %v488, %v743
        %v901 = vmax.f32 %v490, %v745
        %v902 = vmax.f32 %v498, %v747
        %v903 = vmax.f32 %v506, %v749
        %v904 = vmax.f32 %v505, %v751
        %v905 = vmax.f32 %v507, %v753
        %v906 = vmax.f32 %v515, %v755
        %v907 = vmax.f32 %v523, %v757
        %v908 = vmax.f32 %v522, %v759
        %v909 = vmax.f32 %v524, %v761
        %v910 = vmax.f32 %v532, %v763
        %v911 = vmax.f32 %v540, %v765
        %v912 = vmax.f32 %v539, %v767
        %v913 = vmax.f32 %v541, %v769
        %v914 = vmax.f32 %v549, %v771
        %v915 = vmax.f32 %v557, %v773
        %v916 = vmax.f32 %v556, %v775
        %v917 = vmax.f32 %v558, %v777
        %v918 = vmax.f32 %v566, %v779
        %v919 = vmax.f32 %v574, %v781
        %v920 = vmax.f32 %v573, %v783
        %v921 = vmax.f32 %v575, %v785
        %v922 = vmax.f32 %v583, %v787
        %v923 = vmax.f32 %v591, %v789
        %v924 = vmax.f32 %v590, %v791
        %v925 = vmax.f32 %v592, %v793
        %v926 = vmax.f32 %v600, %v795
        %v927 = vmax.f32 %v608, %v797
        %v928 = vmax.f32 %v607, %v799
        %v929 = vmax.f32 %v609, %v801
        %930 = vst.msk [vmem:[#allocation2] sm:$0xff] %vm174, 0.0
        %vm931 = vcmask 25600
        %932 = vst.msk [vmem:[#allocation2 + $0x8] sm:$0x3] %vm931, 0.0
        %s933 = scalar_lea.vmem [#allocation2], 144
        %934 = vst.msk [vmem:[%s933] sm:$0xff] %vm174, 0.0
        %935 = vst.msk [vmem:[%s933 + $0x8] sm:$0x3] %vm931, 0.0
        %vm936 = vcmask 24576
        %937 = vst.msk [vmem:[#allocation2] sm:$0x1] %vm936, 0.0
        %938 = vst.msk [vmem:[#allocation2 + $0x10] sm:$0x1] %vm936, 0.0
        %939 = vst.msk [vmem:[#allocation2 + $0x20] sm:$0x1] %vm936, 0.0
        %940 = vst.msk [vmem:[#allocation2 + $0x30] sm:$0x1] %vm936, 0.0
        %941 = vst.msk [vmem:[#allocation2 + $0x40] sm:$0x1] %vm936, 0.0
        %942 = vst.msk [vmem:[#allocation2 + $0x50] sm:$0x1] %vm936, 0.0
        %943 = vst.msk [vmem:[#allocation2 + $0x60] sm:$0x1] %vm936, 0.0
        %944 = vst.msk [vmem:[#allocation2 + $0x70] sm:$0x1] %vm936, 0.0
        %945 = vst.msk [vmem:[#allocation2 + $0x80] sm:$0x1] %vm936, 0.0
        %946 = vst.msk [vmem:[#allocation2 + $0x90] sm:$0x1] %vm936, 0.0
        %947 = vst.msk [vmem:[#allocation2 + $0x9] sm:$0x1] %vm936, 0.0
        %948 = vst.msk [vmem:[#allocation2 + $0x19] sm:$0x1] %vm936, 0.0
        %949 = vst.msk [vmem:[#allocation2 + $0x29] sm:$0x1] %vm936, 0.0
        %950 = vst.msk [vmem:[#allocation2 + $0x39] sm:$0x1] %vm936, 0.0
        %951 = vst.msk [vmem:[#allocation2 + $0x49] sm:$0x1] %vm936, 0.0
        %952 = vst.msk [vmem:[#allocation2 + $0x59] sm:$0x1] %vm936, 0.0
        %953 = vst.msk [vmem:[#allocation2 + $0x69] sm:$0x1] %vm936, 0.0
        %954 = vst.msk [vmem:[#allocation2 + $0x79] sm:$0x1] %vm936, 0.0
        %955 = vst.msk [vmem:[#allocation2 + $0x89] sm:$0x1] %vm936, 0.0
        %956 = vst.msk [vmem:[#allocation2 + $0x99] sm:$0x1] %vm936, 0.0
        %v1021 = vlaneseq
        %v1022 = vshrl.u32 %v1021, 7
        %v1023 = vsub.s32 0, %v1022
        %v1024 = vrot.slane %v866, %v1023
        %v1025 = vlaneseq
        %v1026 = vshrl.u32 %v1025, 7
        %v1027 = vsub.s32 0, %v1026
        %v1028 = vrot.slane %v867, %v1027
        %v1029 = vlaneseq
        %v1030 = vshrl.u32 %v1029, 7
        %v1031 = vsub.s32 0, %v1030
        %v1032 = vrot.slane %v868, %v1031
        %v1033 = vlaneseq
        %v1034 = vshrl.u32 %v1033, 7
        %v1035 = vsub.s32 0, %v1034
        %v1036 = vrot.slane %v869, %v1035
        %v1037 = vlaneseq
        %v1038 = vshrl.u32 %v1037, 7
        %v1039 = vsub.s32 0, %v1038
        %v1040 = vrot.slane %v870, %v1039
        %v1041 = vlaneseq
        %v1042 = vshrl.u32 %v1041, 7
        %v1043 = vsub.s32 0, %v1042
        %v1044 = vrot.slane %v871, %v1043
        %v1045 = vlaneseq
        %v1046 = vshrl.u32 %v1045, 7
        %v1047 = vsub.s32 0, %v1046
        %v1048 = vrot.slane %v872, %v1047
        %v1049 = vlaneseq
        %v1050 = vshrl.u32 %v1049, 7
        %v1051 = vsub.s32 0, %v1050
        %v1052 = vrot.slane %v873, %v1051
        %v1053 = vlaneseq
        %v1054 = vshrl.u32 %v1053, 7
        %v1055 = vsub.s32 0, %v1054
        %v1056 = vrot.slane %v874, %v1055
        %v1057 = vlaneseq
        %v1058 = vshrl.u32 %v1057, 7
        %v1059 = vsub.s32 0, %v1058
        %v1060 = vrot.slane %v875, %v1059
        %v1061 = vlaneseq
        %v1062 = vshrl.u32 %v1061, 7
        %v1063 = vsub.s32 0, %v1062
        %v1064 = vrot.slane %v876, %v1063
        %v1065 = vlaneseq
        %v1066 = vshrl.u32 %v1065, 7
        %v1067 = vsub.s32 0, %v1066
        %v1068 = vrot.slane %v877, %v1067
        %v1069 = vlaneseq
        %v1070 = vshrl.u32 %v1069, 7
        %v1071 = vsub.s32 0, %v1070
        %v1072 = vrot.slane %v878, %v1071
        %v1073 = vlaneseq
        %v1074 = vshrl.u32 %v1073, 7
        %v1075 = vsub.s32 0, %v1074
        %v1076 = vrot.slane %v879, %v1075
        %v1077 = vlaneseq
        %v1078 = vshrl.u32 %v1077, 7
        %v1079 = vsub.s32 0, %v1078
        %v1080 = vrot.slane %v880, %v1079
        %v1081 = vlaneseq
        %v1082 = vshrl.u32 %v1081, 7
        %v1083 = vsub.s32 0, %v1082
        %v1084 = vrot.slane %v881, %v1083
        %v1085 = vlaneseq
        %v1086 = vshrl.u32 %v1085, 7
        %v1087 = vsub.s32 0, %v1086
        %v1088 = vrot.slane %v882, %v1087
        %v1089 = vlaneseq
        %v1090 = vshrl.u32 %v1089, 7
        %v1091 = vsub.s32 0, %v1090
        %v1092 = vrot.slane %v883, %v1091
        %v1093 = vlaneseq
        %v1094 = vshrl.u32 %v1093, 7
        %v1095 = vsub.s32 0, %v1094
        %v1096 = vrot.slane %v884, %v1095
        %v1097 = vlaneseq
        %v1098 = vshrl.u32 %v1097, 7
        %v1099 = vsub.s32 0, %v1098
        %v1100 = vrot.slane %v885, %v1099
        %v1101 = vlaneseq
        %v1102 = vshrl.u32 %v1101, 7
        %v1103 = vsub.s32 0, %v1102
        %v1104 = vrot.slane %v886, %v1103
        %v1105 = vlaneseq
        %v1106 = vshrl.u32 %v1105, 7
        %v1107 = vsub.s32 0, %v1106
        %v1108 = vrot.slane %v887, %v1107
        %v1109 = vlaneseq
        %v1110 = vshrl.u32 %v1109, 7
        %v1111 = vsub.s32 0, %v1110
        %v1112 = vrot.slane %v888, %v1111
        %v1113 = vlaneseq
        %v1114 = vshrl.u32 %v1113, 7
        %v1115 = vsub.s32 0, %v1114
        %v1116 = vrot.slane %v889, %v1115
        %v1117 = vlaneseq
        %v1118 = vshrl.u32 %v1117, 7
        %v1119 = vsub.s32 0, %v1118
        %v1120 = vrot.slane %v890, %v1119
        %v1121 = vlaneseq
        %v1122 = vshrl.u32 %v1121, 7
        %v1123 = vsub.s32 0, %v1122
        %v1124 = vrot.slane %v891, %v1123
        %v1125 = vlaneseq
        %v1126 = vshrl.u32 %v1125, 7
        %v1127 = vsub.s32 0, %v1126
        %v1128 = vrot.slane %v892, %v1127
        %v1129 = vlaneseq
        %v1130 = vshrl.u32 %v1129, 7
        %v1131 = vsub.s32 0, %v1130
        %v1132 = vrot.slane %v893, %v1131
        %v1133 = vlaneseq
        %v1134 = vshrl.u32 %v1133, 7
        %v1135 = vsub.s32 0, %v1134
        %v1136 = vrot.slane %v894, %v1135
        %v1137 = vlaneseq
        %v1138 = vshrl.u32 %v1137, 7
        %v1139 = vsub.s32 0, %v1138
        %v1140 = vrot.slane %v895, %v1139
        %v1141 = vlaneseq
        %v1142 = vshrl.u32 %v1141, 7
        %v1143 = vsub.s32 0, %v1142
        %v1144 = vrot.slane %v896, %v1143
        %v1145 = vlaneseq
        %v1146 = vshrl.u32 %v1145, 7
        %v1147 = vsub.s32 0, %v1146
        %v1148 = vrot.slane %v897, %v1147
        %v1149 = vlaneseq
        %v1150 = vshrl.u32 %v1149, 7
        %v1151 = vsub.s32 0, %v1150
        %v1152 = vrot.slane %v898, %v1151
        %v1153 = vlaneseq
        %v1154 = vshrl.u32 %v1153, 7
        %v1155 = vsub.s32 0, %v1154
        %v1156 = vrot.slane %v899, %v1155
        %v1157 = vlaneseq
        %v1158 = vshrl.u32 %v1157, 7
        %v1159 = vsub.s32 0, %v1158
        %v1160 = vrot.slane %v900, %v1159
        %v1161 = vlaneseq
        %v1162 = vshrl.u32 %v1161, 7
        %v1163 = vsub.s32 0, %v1162
        %v1164 = vrot.slane %v901, %v1163
        %v1165 = vlaneseq
        %v1166 = vshrl.u32 %v1165, 7
        %v1167 = vsub.s32 0, %v1166
        %v1168 = vrot.slane %v902, %v1167
        %v1169 = vlaneseq
        %v1170 = vshrl.u32 %v1169, 7
        %v1171 = vsub.s32 0, %v1170
        %v1172 = vrot.slane %v903, %v1171
        %v1173 = vlaneseq
        %v1174 = vshrl.u32 %v1173, 7
        %v1175 = vsub.s32 0, %v1174
        %v1176 = vrot.slane %v904, %v1175
        %v1177 = vlaneseq
        %v1178 = vshrl.u32 %v1177, 7
        %v1179 = vsub.s32 0, %v1178
        %v1180 = vrot.slane %v905, %v1179
        %v1181 = vlaneseq
        %v1182 = vshrl.u32 %v1181, 7
        %v1183 = vsub.s32 0, %v1182
        %v1184 = vrot.slane %v906, %v1183
        %v1185 = vlaneseq
        %v1186 = vshrl.u32 %v1185, 7
        %v1187 = vsub.s32 0, %v1186
        %v1188 = vrot.slane %v907, %v1187
        %v1189 = vlaneseq
        %v1190 = vshrl.u32 %v1189, 7
        %v1191 = vsub.s32 0, %v1190
        %v1192 = vrot.slane %v908, %v1191
        %v1193 = vlaneseq
        %v1194 = vshrl.u32 %v1193, 7
        %v1195 = vsub.s32 0, %v1194
        %v1196 = vrot.slane %v909, %v1195
        %v1197 = vlaneseq
        %v1198 = vshrl.u32 %v1197, 7
        %v1199 = vsub.s32 0, %v1198
        %v1200 = vrot.slane %v910, %v1199
        %v1201 = vlaneseq
        %v1202 = vshrl.u32 %v1201, 7
        %v1203 = vsub.s32 0, %v1202
        %v1204 = vrot.slane %v911, %v1203
        %v1205 = vlaneseq
        %v1206 = vshrl.u32 %v1205, 7
        %v1207 = vsub.s32 0, %v1206
        %v1208 = vrot.slane %v912, %v1207
        %v1209 = vlaneseq
        %v1210 = vshrl.u32 %v1209, 7
        %v1211 = vsub.s32 0, %v1210
        %v1212 = vrot.slane %v913, %v1211
        %v1213 = vlaneseq
        %v1214 = vshrl.u32 %v1213, 7
        %v1215 = vsub.s32 0, %v1214
        %v1216 = vrot.slane %v914, %v1215
        %v1217 = vlaneseq
        %v1218 = vshrl.u32 %v1217, 7
        %v1219 = vsub.s32 0, %v1218
        %v1220 = vrot.slane %v915, %v1219
        %v1221 = vlaneseq
        %v1222 = vshrl.u32 %v1221, 7
        %v1223 = vsub.s32 0, %v1222
        %v1224 = vrot.slane %v916, %v1223
        %v1225 = vlaneseq
        %v1226 = vshrl.u32 %v1225, 7
        %v1227 = vsub.s32 0, %v1226
        %v1228 = vrot.slane %v917, %v1227
        %v1229 = vlaneseq
        %v1230 = vshrl.u32 %v1229, 7
        %v1231 = vsub.s32 0, %v1230
        %v1232 = vrot.slane %v918, %v1231
        %v1233 = vlaneseq
        %v1234 = vshrl.u32 %v1233, 7
        %v1235 = vsub.s32 0, %v1234
        %v1236 = vrot.slane %v919, %v1235
        %v1237 = vlaneseq
        %v1238 = vshrl.u32 %v1237, 7
        %v1239 = vsub.s32 0, %v1238
        %v1240 = vrot.slane %v920, %v1239
        %v1241 = vlaneseq
        %v1242 = vshrl.u32 %v1241, 7
        %v1243 = vsub.s32 0, %v1242
        %v1244 = vrot.slane %v921, %v1243
        %v1245 = vlaneseq
        %v1246 = vshrl.u32 %v1245, 7
        %v1247 = vsub.s32 0, %v1246
        %v1248 = vrot.slane %v922, %v1247
        %v1249 = vlaneseq
        %v1250 = vshrl.u32 %v1249, 7
        %v1251 = vsub.s32 0, %v1250
        %v1252 = vrot.slane %v923, %v1251
        %v1253 = vlaneseq
        %v1254 = vshrl.u32 %v1253, 7
        %v1255 = vsub.s32 0, %v1254
        %v1256 = vrot.slane %v924, %v1255
        %v1257 = vlaneseq
        %v1258 = vshrl.u32 %v1257, 7
        %v1259 = vsub.s32 0, %v1258
        %v1260 = vrot.slane %v925, %v1259
        %v1261 = vlaneseq
        %v1262 = vshrl.u32 %v1261, 7
        %v1263 = vsub.s32 0, %v1262
        %v1264 = vrot.slane %v926, %v1263
        %v1265 = vlaneseq
        %v1266 = vshrl.u32 %v1265, 7
        %v1267 = vsub.s32 0, %v1266
        %v1268 = vrot.slane %v927, %v1267
        %v1269 = vlaneseq
        %v1270 = vshrl.u32 %v1269, 7
        %v1271 = vsub.s32 0, %v1270
        %v1272 = vrot.slane %v928, %v1271
        %v1273 = vlaneseq
        %v1274 = vshrl.u32 %v1273, 7
        %v1275 = vsub.s32 0, %v1274
        %v1276 = vrot.slane %v929, %v1275
        %vm1277 = vcmask 1041409
        %v1278 = vsel %vm1277, %v1028, %v1024
        %vm1279 = vcmask 1042434
        %v1280 = vsel %vm1279, %v1032, %v1278
        %vm1281 = vcmask 1043459
        %v1282 = vsel %vm1281, %v1036, %v1280
        %vm1283 = vcmask 1044484
        %v1284 = vsel %vm1283, %v1040, %v1282
        %vm1285 = vcmask 1045509
        %v1286 = vsel %vm1285, %v1044, %v1284
        %vm1287 = vcmask 1046534
        %v1288 = vsel %vm1287, %v1048, %v1286
        %vm1289 = vcmask 1047559
        %v1290 = vsel %vm1289, %v1052, %v1288
        %v1291 = vsel %vm1277, %v1060, %v1056
        %v1292 = vsel %vm1279, %v1064, %v1291
        %v1293 = vsel %vm1281, %v1068, %v1292
        %v1294 = vsel %vm1283, %v1072, %v1293
        %v1295 = vsel %vm1285, %v1076, %v1294
        %v1296 = vsel %vm1287, %v1080, %v1295
        %v1297 = vsel %vm1289, %v1084, %v1296
        %v1298 = vsel %vm1277, %v1092, %v1088
        %v1299 = vsel %vm1279, %v1096, %v1298
        %v1300 = vsel %vm1281, %v1100, %v1299
        %v1301 = vsel %vm1283, %v1104, %v1300
        %v1302 = vsel %vm1285, %v1108, %v1301
        %v1303 = vsel %vm1287, %v1112, %v1302
        %v1304 = vsel %vm1289, %v1116, %v1303
        %v1305 = vsel %vm1277, %v1124, %v1120
        %v1306 = vsel %vm1279, %v1128, %v1305
        %v1307 = vsel %vm1281, %v1132, %v1306
        %v1308 = vsel %vm1283, %v1136, %v1307
        %v1309 = vsel %vm1285, %v1140, %v1308
        %v1310 = vsel %vm1287, %v1144, %v1309
        %v1311 = vsel %vm1289, %v1148, %v1310
        %v1312 = vsel %vm1277, %v1156, %v1152
        %v1313 = vsel %vm1279, %v1160, %v1312
        %v1314 = vsel %vm1281, %v1164, %v1313
        %v1315 = vsel %vm1283, %v1168, %v1314
        %v1316 = vsel %vm1285, %v1172, %v1315
        %v1317 = vsel %vm1287, %v1176, %v1316
        %v1318 = vsel %vm1289, %v1180, %v1317
        %v1319 = vsel %vm1277, %v1188, %v1184
        %v1320 = vsel %vm1279, %v1192, %v1319
        %v1321 = vsel %vm1281, %v1196, %v1320
        %v1322 = vsel %vm1283, %v1200, %v1321
        %v1323 = vsel %vm1285, %v1204, %v1322
        %v1324 = vsel %vm1287, %v1208, %v1323
        %v1325 = vsel %vm1289, %v1212, %v1324
        %v1326 = vsel %vm1277, %v1220, %v1216
        %v1327 = vsel %vm1279, %v1224, %v1326
        %v1328 = vsel %vm1281, %v1228, %v1327
        %v1329 = vsel %vm1283, %v1232, %v1328
        %v1330 = vsel %vm1285, %v1236, %v1329
        %v1331 = vsel %vm1287, %v1240, %v1330
        %v1332 = vsel %vm1289, %v1244, %v1331
        %v1333 = vsel %vm1277, %v1252, %v1248
        %v1334 = vsel %vm1279, %v1256, %v1333
        %v1335 = vsel %vm1281, %v1260, %v1334
        %v1336 = vsel %vm1283, %v1264, %v1335
        %v1337 = vsel %vm1285, %v1268, %v1336
        %v1338 = vsel %vm1287, %v1272, %v1337
        %v1339 = vsel %vm1289, %v1276, %v1338
        %s1348 = scalar_lea.vmem [#allocation2], 16
        %1349 = vst.msk [vmem:[%s1348 + $0x1] sm:$0xff] %vm174, %v1290
        %1350 = vst.msk [vmem:[%s1348 + $0x11] sm:$0xff] %vm174, %v1297
        %1351 = vst.msk [vmem:[%s1348 + $0x21] sm:$0xff] %vm174, %v1304
        %1352 = vst.msk [vmem:[%s1348 + $0x31] sm:$0xff] %vm174, %v1311
        %1353 = vst.msk [vmem:[%s1348 + $0x41] sm:$0xff] %vm174, %v1318
        %1354 = vst.msk [vmem:[%s1348 + $0x51] sm:$0xff] %vm174, %v1325
        %1355 = vst.msk [vmem:[%s1348 + $0x61] sm:$0xff] %vm174, %v1332
        %1356 = vst.msk [vmem:[%s1348 + $0x71] sm:$0xff] %vm174, %v1339
        %vm1357 = vcmask 64512
        %1358 = vst.msk [vmem:[#allocation3] sm:$0xff] %vm1357, 0.0
        %1359 = vst.msk [vmem:[#allocation3 + $0x8] sm:$0xff] %vm1357, 0.0
        %1360 = vst.msk [vmem:[#allocation3 + $0x10] sm:$0xff] %vm1357, 0.0
        %1361 = vst.msk [vmem:[#allocation3 + $0x18] sm:$0xff] %vm1357, 0.0
        %1362 = vst.msk [vmem:[#allocation3 + $0x20] sm:$0xff] %vm1357, 0.0
        %1363 = vst.msk [vmem:[#allocation3 + $0x28] sm:$0xff] %vm1357, 0.0
        %1364 = vst.msk [vmem:[#allocation3 + $0x30] sm:$0xff] %vm1357, 0.0
        %1365 = vst.msk [vmem:[#allocation3 + $0x38] sm:$0xff] %vm1357, 0.0
        %v1366 = vld [vmem:[#allocation2] sm:$0xff]
        %v1367 = vld [vmem:[#allocation2 + $0x8] sm:$0x3]
        %v1368 = vld [vmem:[#allocation2 + $0x10] sm:$0xff]
        %v1369 = vld [vmem:[#allocation2 + $0x18] sm:$0x3]
        %v1370 = vld [vmem:[#allocation2 + $0x20] sm:$0xff]
        %v1371 = vld [vmem:[#allocation2 + $0x28] sm:$0x3]
        %v1372 = vld [vmem:[#allocation2 + $0x30] sm:$0xff]
        %v1373 = vld [vmem:[#allocation2 + $0x38] sm:$0x3]
        %v1374 = vld [vmem:[#allocation2 + $0x40] sm:$0xff]
        %v1375 = vld [vmem:[#allocation2 + $0x48] sm:$0x3]
        %v1376 = vld [vmem:[#allocation2 + $0x50] sm:$0xff]
        %v1377 = vld [vmem:[#allocation2 + $0x58] sm:$0x3]
        %v1378 = vld [vmem:[#allocation2 + $0x60] sm:$0xff]
        %v1379 = vld [vmem:[#allocation2 + $0x68] sm:$0x3]
        %v1380 = vld [vmem:[#allocation2 + $0x70] sm:$0xff]
        %v1381 = vld [vmem:[#allocation2 + $0x78] sm:$0x3]
        %v1398 = vcombine.high %v1366, %v1366
        %v1400 = vunpack.c.l.s4 1983009808
        %v1401 = vunpack.c.0.s8 %v1400
        %v1402 = vlaneseq
        %v1403 = vshrl.u32 %v1402, 7
        %v1404 = vsub.s32 %v1401, %v1403
        %v1405 = vrot.slane %v1366, %v1404
        %v1407 = vunpack.c.l.s4 1983009808
        %v1408 = vunpack.c.0.s8 %v1407
        %v1409 = vlaneseq
        %v1410 = vshrl.u32 %v1409, 7
        %v1411 = vsub.s32 %v1408, %v1410
        %v1412 = vrot.slane %v1398, %v1411
        %v1413 = vcombine.high %v1405, %v1405
        %v1414 = vcombine.high %v1412, %v1412
        %v1416 = vunpack.c.l.s4 1983009808
        %v1417 = vunpack.c.0.s8 %v1416
        %v1418 = vlaneseq
        %v1419 = vshrl.u32 %v1418, 7
        %v1420 = vsub.s32 %v1417, %v1419
        %v1421 = vrot.slane %v1367, %v1420
        %v1422 = vcombine.high %v1368, %v1368
        %v1424 = vunpack.c.l.s4 1983009808
        %v1425 = vunpack.c.0.s8 %v1424
        %v1426 = vlaneseq
        %v1427 = vshrl.u32 %v1426, 7
        %v1428 = vsub.s32 %v1425, %v1427
        %v1429 = vrot.slane %v1368, %v1428
        %v1431 = vunpack.c.l.s4 1983009808
        %v1432 = vunpack.c.0.s8 %v1431
        %v1433 = vlaneseq
        %v1434 = vshrl.u32 %v1433, 7
        %v1435 = vsub.s32 %v1432, %v1434
        %v1436 = vrot.slane %v1422, %v1435
        %v1437 = vcombine.high %v1429, %v1429
        %v1438 = vcombine.high %v1436, %v1436
        %v1440 = vunpack.c.l.s4 1983009808
        %v1441 = vunpack.c.0.s8 %v1440
        %v1442 = vlaneseq
        %v1443 = vshrl.u32 %v1442, 7
        %v1444 = vsub.s32 %v1441, %v1443
        %v1445 = vrot.slane %v1369, %v1444
        %v1446 = vcombine.high %v1370, %v1370
        %v1448 = vunpack.c.l.s4 1983009808
        %v1449 = vunpack.c.0.s8 %v1448
        %v1450 = vlaneseq
        %v1451 = vshrl.u32 %v1450, 7
        %v1452 = vsub.s32 %v1449, %v1451
        %v1453 = vrot.slane %v1370, %v1452
        %v1455 = vunpack.c.l.s4 1983009808
        %v1456 = vunpack.c.0.s8 %v1455
        %v1457 = vlaneseq
        %v1458 = vshrl.u32 %v1457, 7
        %v1459 = vsub.s32 %v1456, %v1458
        %v1460 = vrot.slane %v1446, %v1459
        %v1461 = vcombine.high %v1453, %v1453
        %v1462 = vcombine.high %v1460, %v1460
        %v1464 = vunpack.c.l.s4 1983009808
        %v1465 = vunpack.c.0.s8 %v1464
        %v1466 = vlaneseq
        %v1467 = vshrl.u32 %v1466, 7
        %v1468 = vsub.s32 %v1465, %v1467
        %v1469 = vrot.slane %v1371, %v1468
        %v1470 = vcombine.high %v1372, %v1372
        %v1472 = vunpack.c.l.s4 1983009808
        %v1473 = vunpack.c.0.s8 %v1472
        %v1474 = vlaneseq
        %v1475 = vshrl.u32 %v1474, 7
        %v1476 = vsub.s32 %v1473, %v1475
        %v1477 = vrot.slane %v1372, %v1476
        %v1479 = vunpack.c.l.s4 1983009808
        %v1480 = vunpack.c.0.s8 %v1479
        %v1481 = vlaneseq
        %v1482 = vshrl.u32 %v1481, 7
        %v1483 = vsub.s32 %v1480, %v1482
        %v1484 = vrot.slane %v1470, %v1483
        %v1485 = vcombine.high %v1477, %v1477
        %v1486 = vcombine.high %v1484, %v1484
        %v1488 = vunpack.c.l.s4 1983009808
        %v1489 = vunpack.c.0.s8 %v1488
        %v1490 = vlaneseq
        %v1491 = vshrl.u32 %v1490, 7
        %v1492 = vsub.s32 %v1489, %v1491
        %v1493 = vrot.slane %v1373, %v1492
        %v1494 = vcombine.high %v1374, %v1374
        %v1496 = vunpack.c.l.s4 1983009808
        %v1497 = vunpack.c.0.s8 %v1496
        %v1498 = vlaneseq
        %v1499 = vshrl.u32 %v1498, 7
        %v1500 = vsub.s32 %v1497, %v1499
        %v1501 = vrot.slane %v1374, %v1500
        %v1503 = vunpack.c.l.s4 1983009808
        %v1504 = vunpack.c.0.s8 %v1503
        %v1505 = vlaneseq
        %v1506 = vshrl.u32 %v1505, 7
        %v1507 = vsub.s32 %v1504, %v1506
        %v1508 = vrot.slane %v1494, %v1507
        %v1509 = vcombine.high %v1501, %v1501
        %v1510 = vcombine.high %v1508, %v1508
        %v1512 = vunpack.c.l.s4 1983009808
        %v1513 = vunpack.c.0.s8 %v1512
        %v1514 = vlaneseq
        %v1515 = vshrl.u32 %v1514, 7
        %v1516 = vsub.s32 %v1513, %v1515
        %v1517 = vrot.slane %v1375, %v1516
        %v1518 = vcombine.high %v1376, %v1376
        %v1520 = vunpack.c.l.s4 1983009808
        %v1521 = vunpack.c.0.s8 %v1520
        %v1522 = vlaneseq
        %v1523 = vshrl.u32 %v1522, 7
        %v1524 = vsub.s32 %v1521, %v1523
        %v1525 = vrot.slane %v1376, %v1524
        %v1527 = vunpack.c.l.s4 1983009808
        %v1528 = vunpack.c.0.s8 %v1527
        %v1529 = vlaneseq
        %v1530 = vshrl.u32 %v1529, 7
        %v1531 = vsub.s32 %v1528, %v1530
        %v1532 = vrot.slane %v1518, %v1531
        %v1533 = vcombine.high %v1525, %v1525
        %v1534 = vcombine.high %v1532, %v1532
        %v1536 = vunpack.c.l.s4 1983009808
        %v1537 = vunpack.c.0.s8 %v1536
        %v1538 = vlaneseq
        %v1539 = vshrl.u32 %v1538, 7
        %v1540 = vsub.s32 %v1537, %v1539
        %v1541 = vrot.slane %v1377, %v1540
        %v1542 = vcombine.high %v1378, %v1378
        %v1544 = vunpack.c.l.s4 1983009808
        %v1545 = vunpack.c.0.s8 %v1544
        %v1546 = vlaneseq
        %v1547 = vshrl.u32 %v1546, 7
        %v1548 = vsub.s32 %v1545, %v1547
        %v1549 = vrot.slane %v1378, %v1548
        %v1551 = vunpack.c.l.s4 1983009808
        %v1552 = vunpack.c.0.s8 %v1551
        %v1553 = vlaneseq
        %v1554 = vshrl.u32 %v1553, 7
        %v1555 = vsub.s32 %v1552, %v1554
        %v1556 = vrot.slane %v1542, %v1555
        %v1557 = vcombine.high %v1549, %v1549
        %v1558 = vcombine.high %v1556, %v1556
        %v1560 = vunpack.c.l.s4 1983009808
        %v1561 = vunpack.c.0.s8 %v1560
        %v1562 = vlaneseq
        %v1563 = vshrl.u32 %v1562, 7
        %v1564 = vsub.s32 %v1561, %v1563
        %v1565 = vrot.slane %v1379, %v1564
        %v1566 = vcombine.high %v1380, %v1380
        %v1568 = vunpack.c.l.s4 1983009808
        %v1569 = vunpack.c.0.s8 %v1568
        %v1570 = vlaneseq
        %v1571 = vshrl.u32 %v1570, 7
        %v1572 = vsub.s32 %v1569, %v1571
        %v1573 = vrot.slane %v1380, %v1572
        %v1575 = vunpack.c.l.s4 1983009808
        %v1576 = vunpack.c.0.s8 %v1575
        %v1577 = vlaneseq
        %v1578 = vshrl.u32 %v1577, 7
        %v1579 = vsub.s32 %v1576, %v1578
        %v1580 = vrot.slane %v1566, %v1579
        %v1581 = vcombine.high %v1573, %v1573
        %v1582 = vcombine.high %v1580, %v1580
        %v1584 = vunpack.c.l.s4 1983009808
        %v1585 = vunpack.c.0.s8 %v1584
        %v1586 = vlaneseq
        %v1587 = vshrl.u32 %v1586, 7
        %v1588 = vsub.s32 %v1585, %v1587
        %v1589 = vrot.slane %v1381, %v1588
        %v1590 = vld [vmem:[%s1] sm:$0xf]
        %v1591 = vcombine.low %v1405, %v1413
        %v1592 = vcombine.low %v1412, %v1414
        %v1594 = vunpack.c.l.s4 1983009808
        %v1595 = vunpack.c.0.s8 %v1594
        %v1596 = vlaneseq
        %v1597 = vshrl.u32 %v1596, 7
        %v1598 = vsub.s32 %v1595, %v1597
        %v1599 = vrot.slane %v1591, %v1598
        %v1601 = vunpack.c.l.s4 1983009808
        %v1602 = vunpack.c.0.s8 %v1601
        %v1603 = vlaneseq
        %v1604 = vshrl.u32 %v1603, 7
        %v1605 = vsub.s32 %v1602, %v1604
        %v1606 = vrot.slane %v1592, %v1605
        %v1607 = vcombine.low %v1599, %v1606
        %v1608 = vcombine.low %v1421, %v1429
        %v1609 = vcombine.low %v1437, %v1436
        %v1611 = vunpack.c.l.s4 1983009808
        %v1612 = vunpack.c.0.s8 %v1611
        %v1613 = vlaneseq
        %v1614 = vshrl.u32 %v1613, 7
        %v1615 = vsub.s32 %v1612, %v1614
        %v1616 = vrot.slane %v1608, %v1615
        %v1618 = vunpack.c.l.s4 1983009808
        %v1619 = vunpack.c.0.s8 %v1618
        %v1620 = vlaneseq
        %v1621 = vshrl.u32 %v1620, 7
        %v1622 = vsub.s32 %v1619, %v1621
        %v1623 = vrot.slane %v1609, %v1622
        %v1624 = vcombine.low %v1616, %v1623
        %v1625 = vcombine.low %v1438, %v1445
        %v1626 = vcombine.low %v1453, %v1461
        %v1628 = vunpack.c.l.s4 1983009808
        %v1629 = vunpack.c.0.s8 %v1628
        %v1630 = vlaneseq
        %v1631 = vshrl.u32 %v1630, 7
        %v1632 = vsub.s32 %v1629, %v1631
        %v1633 = vrot.slane %v1625, %v1632
        %v1635 = vunpack.c.l.s4 1983009808
        %v1636 = vunpack.c.0.s8 %v1635
        %v1637 = vlaneseq
        %v1638 = vshrl.u32 %v1637, 7
        %v1639 = vsub.s32 %v1636, %v1638
        %v1640 = vrot.slane %v1626, %v1639
        %v1641 = vcombine.low %v1633, %v1640
        %v1642 = vcombine.low %v1460, %v1462
        %v1643 = vcombine.low %v1469, %v1477
        %v1645 = vunpack.c.l.s4 1983009808
        %v1646 = vunpack.c.0.s8 %v1645
        %v1647 = vlaneseq
        %v1648 = vshrl.u32 %v1647, 7
        %v1649 = vsub.s32 %v1646, %v1648
        %v1650 = vrot.slane %v1642, %v1649
        %v1652 = vunpack.c.l.s4 1983009808
        %v1653 = vunpack.c.0.s8 %v1652
        %v1654 = vlaneseq
        %v1655 = vshrl.u32 %v1654, 7
        %v1656 = vsub.s32 %v1653, %v1655
        %v1657 = vrot.slane %v1643, %v1656
        %v1658 = vcombine.low %v1650, %v1657
        %v1659 = vcombine.low %v1485, %v1484
        %v1660 = vcombine.low %v1486, %v1493
        %v1662 = vunpack.c.l.s4 1983009808
        %v1663 = vunpack.c.0.s8 %v1662
        %v1664 = vlaneseq
        %v1665 = vshrl.u32 %v1664, 7
        %v1666 = vsub.s32 %v1663, %v1665
        %v1667 = vrot.slane %v1659, %v1666
        %v1669 = vunpack.c.l.s4 1983009808
        %v1670 = vunpack.c.0.s8 %v1669
        %v1671 = vlaneseq
        %v1672 = vshrl.u32 %v1671, 7
        %v1673 = vsub.s32 %v1670, %v1672
        %v1674 = vrot.slane %v1660, %v1673
        %v1675 = vcombine.low %v1667, %v1674
        %v1676 = vcombine.low %v1501, %v1509
        %v1677 = vcombine.low %v1508, %v1510
        %v1679 = vunpack.c.l.s4 1983009808
        %v1680 = vunpack.c.0.s8 %v1679
        %v1681 = vlaneseq
        %v1682 = vshrl.u32 %v1681, 7
        %v1683 = vsub.s32 %v1680, %v1682
        %v1684 = vrot.slane %v1676, %v1683
        %v1686 = vunpack.c.l.s4 1983009808
        %v1687 = vunpack.c.0.s8 %v1686
        %v1688 = vlaneseq
        %v1689 = vshrl.u32 %v1688, 7
        %v1690 = vsub.s32 %v1687, %v1689
        %v1691 = vrot.slane %v1677, %v1690
        %v1692 = vcombine.low %v1684, %v1691
        %v1693 = vcombine.low %v1517, %v1525
        %v1694 = vcombine.low %v1533, %v1532
        %v1696 = vunpack.c.l.s4 1983009808
        %v1697 = vunpack.c.0.s8 %v1696
        %v1698 = vlaneseq
        %v1699 = vshrl.u32 %v1698, 7
        %v1700 = vsub.s32 %v1697, %v1699
        %v1701 = vrot.slane %v1693, %v1700
        %v1703 = vunpack.c.l.s4 1983009808
        %v1704 = vunpack.c.0.s8 %v1703
        %v1705 = vlaneseq
        %v1706 = vshrl.u32 %v1705, 7
        %v1707 = vsub.s32 %v1704, %v1706
        %v1708 = vrot.slane %v1694, %v1707
        %v1709 = vcombine.low %v1701, %v1708
        %v1710 = vcombine.low %v1534, %v1541
        %v1711 = vcombine.low %v1549, %v1557
        %v1713 = vunpack.c.l.s4 1983009808
        %v1714 = vunpack.c.0.s8 %v1713
        %v1715 = vlaneseq
        %v1716 = vshrl.u32 %v1715, 7
        %v1717 = vsub.s32 %v1714, %v1716
        %v1718 = vrot.slane %v1710, %v1717
        %v1720 = vunpack.c.l.s4 1983009808
        %v1721 = vunpack.c.0.s8 %v1720
        %v1722 = vlaneseq
        %v1723 = vshrl.u32 %v1722, 7
        %v1724 = vsub.s32 %v1721, %v1723
        %v1725 = vrot.slane %v1711, %v1724
        %v1726 = vcombine.low %v1718, %v1725
        %v1727 = vcombine.low %v1556, %v1558
        %v1728 = vcombine.low %v1565, %v1573
        %v1730 = vunpack.c.l.s4 1983009808
        %v1731 = vunpack.c.0.s8 %v1730
        %v1732 = vlaneseq
        %v1733 = vshrl.u32 %v1732, 7
        %v1734 = vsub.s32 %v1731, %v1733
        %v1735 = vrot.slane %v1727, %v1734
        %v1737 = vunpack.c.l.s4 1983009808
        %v1738 = vunpack.c.0.s8 %v1737
        %v1739 = vlaneseq
        %v1740 = vshrl.u32 %v1739, 7
        %v1741 = vsub.s32 %v1738, %v1740
        %v1742 = vrot.slane %v1728, %v1741
        %v1743 = vcombine.low %v1735, %v1742
        %v1744 = vcombine.low %v1581, %v1580
        %v1745 = vcombine.low %v1582, %v1589
        %v1747 = vunpack.c.l.s4 1983009808
        %v1748 = vunpack.c.0.s8 %v1747
        %v1749 = vlaneseq
        %v1750 = vshrl.u32 %v1749, 7
        %v1751 = vsub.s32 %v1748, %v1750
        %v1752 = vrot.slane %v1744, %v1751
        %v1754 = vunpack.c.l.s4 1983009808
        %v1755 = vunpack.c.0.s8 %v1754
        %v1756 = vlaneseq
        %v1757 = vshrl.u32 %v1756, 7
        %v1758 = vsub.s32 %v1755, %v1757
        %v1759 = vrot.slane %v1745, %v1758
        %v1760 = vcombine.low %v1752, %v1759
        %v1761 = vsel %vm174, %v1607, 0
        %v1763 = vsel %vm174, %v1624, 0
        %v1765 = vsel %vm174, %v1641, 0
        %v1767 = vsel %vm174, %v1658, 0
        %v1769 = vsel %vm174, %v1675, 0
        %v1771 = vsel %vm174, %v1692, 0
        %v1773 = vsel %vm174, %v1709, 0
        %v1775 = vsel %vm174, %v1726, 0
        %v1777 = vsel %vm174, %v1743, 0
        %v1779 = vsel %vm174, %v1760, 0
        %vm1781 = vcmask 1043456
        %v1783 = vsel %vm1781, %v1590, 0
        %1785 = vmatprep.subr.mxu0 0.0
        %1786 = vmatpush1.msra.mxu0 %v1783
        %1787 = vmatprep.subr.mxu0 0.0
        %1788 = vmatpush1.msra.mxu0 0.0
        %1789 = vmatprep.subr.mxu0 0.0
        %1790 = vmatpush1.msra.mxu0 0.0
        %1791 = vmatprep.subr.mxu0 0.0
        %1792 = vmatpush1.msra.mxu0 0.0
        %1793 = vmatprep.subr.mxu0 0.0
        %1794 = vmatpush1.msra.mxu0 0.0
        %1795 = vmatprep.subr.mxu0 0.0
        %1796 = vmatpush1.msra.mxu0 0.0
        %1797 = vmatprep.subr.mxu0 0.0
        %1798 = vmatpush1.msra.mxu0 0.0
        %1799 = vmatprep.subr.mxu0 0.0
        %1800 = vmatpush1.msra.mxu0 0.0
        %1801 = vmatprep.subr.mxu0 0.0
        %1802 = vmatpush1.msra.mxu0 0.0
        %1803 = vmatprep.subr.mxu0 0.0
        %1804 = vmatpush1.msra.mxu0 0.0
        %1805 = vmatprep.subr.mxu0 0.0
        %1806 = vmatpush1.msra.mxu0 0.0
        %1807 = vmatprep.subr.mxu0 0.0
        %1808 = vmatpush1.msra.mxu0 0.0
        %1809 = vmatprep.subr.mxu0 0.0
        %1810 = vmatpush1.msra.mxu0 0.0
        %1811 = vmatprep.subr.mxu0 0.0
        %1812 = vmatpush1.msra.mxu0 0.0
        %1813 = vmatprep.subr.mxu0 0.0
        %1814 = vmatpush1.msra.mxu0 0.0
        %1815 = vmatprep.subr.mxu0 0.0
        %1816 = vmatpush1.msra.mxu0 0.0
        %1817 = vmatprep.subr.mxu0 0.0
        %1818 = vmatpush1.msra.mxu0 0.0
        %1819 = vmatprep.subr.mxu0 0.0
        %1820 = vmatpush1.msra.mxu0 0.0
        %1821 = vmatprep.subr.mxu0 0.0
        %1822 = vmatpush1.msra.mxu0 0.0
        %1823 = vmatprep.subr.mxu0 0.0
        %1824 = vmatpush1.msra.mxu0 0.0
        %1825 = vmatprep.subr.mxu0 0.0
        %1826 = vmatpush1.msra.mxu0 0.0
        %1827 = vmatprep.subr.mxu0 0.0
        %1828 = vmatpush1.msra.mxu0 0.0
        %1829 = vmatprep.subr.mxu0 0.0
        %1830 = vmatpush1.msra.mxu0 0.0
        %1831 = vmatprep.subr.mxu0 0.0
        %1832 = vmatpush1.msra.mxu0 0.0
        %1833 = vmatprep.subr.mxu0 0.0
        %1834 = vmatpush1.msra.mxu0 0.0
        %1835 = vmatprep.subr.mxu0 0.0
        %1836 = vmatpush1.msra.mxu0 0.0
        %1837 = vmatprep.subr.mxu0 0.0
        %1838 = vmatpush1.msra.mxu0 0.0
        %1839 = vmatprep.subr.mxu0 0.0
        %1840 = vmatpush1.msra.mxu0 0.0
        %1841 = vmatprep.subr.mxu0 0.0
        %1842 = vmatpush1.msra.mxu0 0.0
        %1843 = vmatprep.subr.mxu0 0.0
        %1844 = vmatpush1.msra.mxu0 0.0
        %1845 = vmatprep.subr.mxu0 0.0
        %1846 = vmatpush1.msra.mxu0 0.0
        %1847 = vmatprep.subr.mxu0 0.0
        %1848 = vmatpush1.msra.mxu0 0.0
        %1849 = vmatprep.mubr.f32.mxu0 0.0
        %1850 = vmatmul.mubr.f32.gmra.mrb[0].mxu0 %v1761
        %v1851 = vpop.f32.mrb[0].mxu0
        %v1852 = vadd.f32 0.0, %v1851
        %v1853 = vpop.f32.mrb[0].mxu0
        %1854 = vmatprep.mubr.f32.mxu0 0.0
        %1855 = vmatmul.mubr.f32.gmra.mrb[0].mxu0 %v1763
        %v1856 = vpop.f32.mrb[0].mxu0
        %v1857 = vadd.f32 0.0, %v1856
        %v1858 = vpop.f32.mrb[0].mxu0
        %1859 = vmatprep.mubr.f32.mxu0 0.0
        %1860 = vmatmul.mubr.f32.gmra.mrb[0].mxu0 %v1765
        %v1861 = vpop.f32.mrb[0].mxu0
        %v1862 = vadd.f32 0.0, %v1861
        %v1863 = vpop.f32.mrb[0].mxu0
        %1864 = vmatprep.mubr.f32.mxu0 0.0
        %1865 = vmatmul.mubr.f32.gmra.mrb[0].mxu0 %v1767
        %v1866 = vpop.f32.mrb[0].mxu0
        %v1867 = vadd.f32 0.0, %v1866
        %v1868 = vpop.f32.mrb[0].mxu0
        %1869 = vmatprep.mubr.f32.mxu0 0.0
        %1870 = vmatmul.mubr.f32.gmra.mrb[0].mxu0 %v1769
        %v1871 = vpop.f32.mrb[0].mxu0
        %v1872 = vadd.f32 0.0, %v1871
        %v1873 = vpop.f32.mrb[0].mxu0
        %1874 = vmatprep.mubr.f32.mxu0 0.0
        %1875 = vmatmul.mubr.f32.gmra.mrb[0].mxu0 %v1771
        %v1876 = vpop.f32.mrb[0].mxu0
        %v1877 = vadd.f32 0.0, %v1876
        %v1878 = vpop.f32.mrb[0].mxu0
        %1879 = vmatprep.mubr.f32.mxu0 0.0
        %1880 = vmatmul.mubr.f32.gmra.mrb[0].mxu0 %v1773
        %v1881 = vpop.f32.mrb[0].mxu0
        %v1882 = vadd.f32 0.0, %v1881
        %v1883 = vpop.f32.mrb[0].mxu0
        %1884 = vmatprep.mubr.f32.mxu0 0.0
        %1885 = vmatmul.mubr.f32.gmra.mrb[0].mxu0 %v1775
        %v1886 = vpop.f32.mrb[0].mxu0
        %v1887 = vadd.f32 0.0, %v1886
        %v1888 = vpop.f32.mrb[0].mxu0
        %1889 = vmatprep.mubr.f32.mxu0 0.0
        %1890 = vmatmul.mubr.f32.gmra.mrb[0].mxu0 %v1777
        %v1891 = vpop.f32.mrb[0].mxu0
        %v1892 = vadd.f32 0.0, %v1891
        %v1893 = vpop.f32.mrb[0].mxu0
        %1894 = vmatprep.mubr.f32.mxu0 0.0
        %1895 = vmatmul.mubr.f32.gmra.mrb[0].mxu0 %v1779
        %v1896 = vpop.f32.mrb[0].mxu0
        %v1897 = vadd.f32 0.0, %v1896
        %v1898 = vpop.f32.mrb[0].mxu0
        %1899 = vdwg.mxu0
        %v1910 = vcombine.high %v1852, %v1852
        %v1912 = vunpack.c.l.s4 1983009808
        %v1913 = vunpack.c.0.s8 %v1912
        %v1914 = vlaneseq
        %v1915 = vshrl.u32 %v1914, 7
        %v1916 = vsub.s32 %v1913, %v1915
        %v1917 = vrot.slane %v1852, %v1916
        %v1919 = vunpack.c.l.s4 1983009808
        %v1920 = vunpack.c.0.s8 %v1919
        %v1921 = vlaneseq
        %v1922 = vshrl.u32 %v1921, 7
        %v1923 = vsub.s32 %v1920, %v1922
        %v1924 = vrot.slane %v1910, %v1923
        %v1925 = vcombine.high %v1917, %v1917
        %v1926 = vcombine.high %v1924, %v1924
        %v1927 = vcombine.high %v1857, %v1857
        %v1929 = vunpack.c.l.s4 1983009808
        %v1930 = vunpack.c.0.s8 %v1929
        %v1931 = vlaneseq
        %v1932 = vshrl.u32 %v1931, 7
        %v1933 = vsub.s32 %v1930, %v1932
        %v1934 = vrot.slane %v1857, %v1933
        %v1936 = vunpack.c.l.s4 1983009808
        %v1937 = vunpack.c.0.s8 %v1936
        %v1938 = vlaneseq
        %v1939 = vshrl.u32 %v1938, 7
        %v1940 = vsub.s32 %v1937, %v1939
        %v1941 = vrot.slane %v1927, %v1940
        %v1942 = vcombine.high %v1934, %v1934
        %v1943 = vcombine.high %v1941, %v1941
        %v1944 = vcombine.high %v1862, %v1862
        %v1946 = vunpack.c.l.s4 1983009808
        %v1947 = vunpack.c.0.s8 %v1946
        %v1948 = vlaneseq
        %v1949 = vshrl.u32 %v1948, 7
        %v1950 = vsub.s32 %v1947, %v1949
        %v1951 = vrot.slane %v1862, %v1950
        %v1953 = vunpack.c.l.s4 1983009808
        %v1954 = vunpack.c.0.s8 %v1953
        %v1955 = vlaneseq
        %v1956 = vshrl.u32 %v1955, 7
        %v1957 = vsub.s32 %v1954, %v1956
        %v1958 = vrot.slane %v1944, %v1957
        %v1959 = vcombine.high %v1958, %v1958
        %v1960 = vcombine.high %v1867, %v1867
        %v1962 = vunpack.c.l.s4 1983009808
        %v1963 = vunpack.c.0.s8 %v1962
        %v1964 = vlaneseq
        %v1965 = vshrl.u32 %v1964, 7
        %v1966 = vsub.s32 %v1963, %v1965
        %v1967 = vrot.slane %v1867, %v1966
        %v1969 = vunpack.c.l.s4 1983009808
        %v1970 = vunpack.c.0.s8 %v1969
        %v1971 = vlaneseq
        %v1972 = vshrl.u32 %v1971, 7
        %v1973 = vsub.s32 %v1970, %v1972
        %v1974 = vrot.slane %v1960, %v1973
        %v1975 = vcombine.high %v1967, %v1967
        %v1976 = vcombine.high %v1974, %v1974
        %v1977 = vcombine.high %v1872, %v1872
        %v1979 = vunpack.c.l.s4 1983009808
        %v1980 = vunpack.c.0.s8 %v1979
        %v1981 = vlaneseq
        %v1982 = vshrl.u32 %v1981, 7
        %v1983 = vsub.s32 %v1980, %v1982
        %v1984 = vrot.slane %v1872, %v1983
        %v1986 = vunpack.c.l.s4 1983009808
        %v1987 = vunpack.c.0.s8 %v1986
        %v1988 = vlaneseq
        %v1989 = vshrl.u32 %v1988, 7
        %v1990 = vsub.s32 %v1987, %v1989
        %v1991 = vrot.slane %v1977, %v1990
        %v1992 = vcombine.high %v1984, %v1984
        %v1993 = vcombine.high %v1877, %v1877
        %v1995 = vunpack.c.l.s4 1983009808
        %v1996 = vunpack.c.0.s8 %v1995
        %v1997 = vlaneseq
        %v1998 = vshrl.u32 %v1997, 7
        %v1999 = vsub.s32 %v1996, %v1998
        %v2000 = vrot.slane %v1877, %v1999
        %v2002 = vunpack.c.l.s4 1983009808
        %v2003 = vunpack.c.0.s8 %v2002
        %v2004 = vlaneseq
        %v2005 = vshrl.u32 %v2004, 7
        %v2006 = vsub.s32 %v2003, %v2005
        %v2007 = vrot.slane %v1993, %v2006
        %v2008 = vcombine.high %v2000, %v2000
        %v2009 = vcombine.high %v2007, %v2007
        %v2010 = vcombine.high %v1882, %v1882
        %v2012 = vunpack.c.l.s4 1983009808
        %v2013 = vunpack.c.0.s8 %v2012
        %v2014 = vlaneseq
        %v2015 = vshrl.u32 %v2014, 7
        %v2016 = vsub.s32 %v2013, %v2015
        %v2017 = vrot.slane %v1882, %v2016
        %v2019 = vunpack.c.l.s4 1983009808
        %v2020 = vunpack.c.0.s8 %v2019
        %v2021 = vlaneseq
        %v2022 = vshrl.u32 %v2021, 7
        %v2023 = vsub.s32 %v2020, %v2022
        %v2024 = vrot.slane %v2010, %v2023
        %v2025 = vcombine.high %v2017, %v2017
        %v2026 = vcombine.high %v2024, %v2024
        %v2027 = vcombine.high %v1887, %v1887
        %v2029 = vunpack.c.l.s4 1983009808
        %v2030 = vunpack.c.0.s8 %v2029
        %v2031 = vlaneseq
        %v2032 = vshrl.u32 %v2031, 7
        %v2033 = vsub.s32 %v2030, %v2032
        %v2034 = vrot.slane %v1887, %v2033
        %v2036 = vunpack.c.l.s4 1983009808
        %v2037 = vunpack.c.0.s8 %v2036
        %v2038 = vlaneseq
        %v2039 = vshrl.u32 %v2038, 7
        %v2040 = vsub.s32 %v2037, %v2039
        %v2041 = vrot.slane %v2027, %v2040
        %v2042 = vcombine.high %v2041, %v2041
        %v2043 = vcombine.high %v1892, %v1892
        %v2045 = vunpack.c.l.s4 1983009808
        %v2046 = vunpack.c.0.s8 %v2045
        %v2047 = vlaneseq
        %v2048 = vshrl.u32 %v2047, 7
        %v2049 = vsub.s32 %v2046, %v2048
        %v2050 = vrot.slane %v1892, %v2049
        %v2052 = vunpack.c.l.s4 1983009808
        %v2053 = vunpack.c.0.s8 %v2052
        %v2054 = vlaneseq
        %v2055 = vshrl.u32 %v2054, 7
        %v2056 = vsub.s32 %v2053, %v2055
        %v2057 = vrot.slane %v2043, %v2056
        %v2058 = vcombine.high %v2050, %v2050
        %v2059 = vcombine.high %v2057, %v2057
        %v2060 = vcombine.high %v1897, %v1897
        %v2062 = vunpack.c.l.s4 1983009808
        %v2063 = vunpack.c.0.s8 %v2062
        %v2064 = vlaneseq
        %v2065 = vshrl.u32 %v2064, 7
        %v2066 = vsub.s32 %v2063, %v2065
        %v2067 = vrot.slane %v1897, %v2066
        %v2069 = vunpack.c.l.s4 1983009808
        %v2070 = vunpack.c.0.s8 %v2069
        %v2071 = vlaneseq
        %v2072 = vshrl.u32 %v2071, 7
        %v2073 = vsub.s32 %v2070, %v2072
        %v2074 = vrot.slane %v2060, %v2073
        %v2075 = vcombine.high %v2067, %v2067
        %v2076 = vld [vmem:[#allocation3] sm:$0xff]
        %v2077 = vld [vmem:[#allocation3 + $0x8] sm:$0xff]
        %v2078 = vld [vmem:[#allocation3 + $0x10] sm:$0xff]
        %v2079 = vld [vmem:[#allocation3 + $0x18] sm:$0xff]
        %v2080 = vld [vmem:[#allocation3 + $0x20] sm:$0xff]
        %v2081 = vld [vmem:[#allocation3 + $0x28] sm:$0xff]
        %v2082 = vld [vmem:[#allocation3 + $0x30] sm:$0xff]
        %v2083 = vld [vmem:[#allocation3 + $0x38] sm:$0xff]
        %v2084 = vcombine.low %v1917, %v1925
        %v2085 = vcombine.low %v1924, %v1926
        %v2087 = vunpack.c.l.s4 1983009808
        %v2088 = vunpack.c.0.s8 %v2087
        %v2089 = vlaneseq
        %v2090 = vshrl.u32 %v2089, 7
        %v2091 = vsub.s32 %v2088, %v2090
        %v2092 = vrot.slane %v2084, %v2091
        %v2094 = vunpack.c.l.s4 1983009808
        %v2095 = vunpack.c.0.s8 %v2094
        %v2096 = vlaneseq
        %v2097 = vshrl.u32 %v2096, 7
        %v2098 = vsub.s32 %v2095, %v2097
        %v2099 = vrot.slane %v2085, %v2098
        %v2100 = vcombine.low %v2092, %v2099
        %v2101 = vcombine.low %v1942, %v1941
        %v2102 = vcombine.low %v1943, %v1951
        %v2104 = vunpack.c.l.s4 1983009808
        %v2105 = vunpack.c.0.s8 %v2104
        %v2106 = vlaneseq
        %v2107 = vshrl.u32 %v2106, 7
        %v2108 = vsub.s32 %v2105, %v2107
        %v2109 = vrot.slane %v2101, %v2108
        %v2111 = vunpack.c.l.s4 1983009808
        %v2112 = vunpack.c.0.s8 %v2111
        %v2113 = vlaneseq
        %v2114 = vshrl.u32 %v2113, 7
        %v2115 = vsub.s32 %v2112, %v2114
        %v2116 = vrot.slane %v2102, %v2115
        %v2117 = vcombine.low %v2109, %v2116
        %v2118 = vcombine.low %v1958, %v1959
        %v2119 = vcombine.low %v1967, %v1975
        %v2121 = vunpack.c.l.s4 1983009808
        %v2122 = vunpack.c.0.s8 %v2121
        %v2123 = vlaneseq
        %v2124 = vshrl.u32 %v2123, 7
        %v2125 = vsub.s32 %v2122, %v2124
        %v2126 = vrot.slane %v2118, %v2125
        %v2128 = vunpack.c.l.s4 1983009808
        %v2129 = vunpack.c.0.s8 %v2128
        %v2130 = vlaneseq
        %v2131 = vshrl.u32 %v2130, 7
        %v2132 = vsub.s32 %v2129, %v2131
        %v2133 = vrot.slane %v2119, %v2132
        %v2134 = vcombine.low %v2126, %v2133
        %v2135 = vcombine.low %v1976, %v1984
        %v2136 = vcombine.low %v1992, %v1991
        %v2138 = vunpack.c.l.s4 1983009808
        %v2139 = vunpack.c.0.s8 %v2138
        %v2140 = vlaneseq
        %v2141 = vshrl.u32 %v2140, 7
        %v2142 = vsub.s32 %v2139, %v2141
        %v2143 = vrot.slane %v2135, %v2142
        %v2145 = vunpack.c.l.s4 1983009808
        %v2146 = vunpack.c.0.s8 %v2145
        %v2147 = vlaneseq
        %v2148 = vshrl.u32 %v2147, 7
        %v2149 = vsub.s32 %v2146, %v2148
        %v2150 = vrot.slane %v2136, %v2149
        %v2151 = vcombine.low %v2143, %v2150
        %v2152 = vcombine.low %v2000, %v2008
        %v2153 = vcombine.low %v2007, %v2009
        %v2155 = vunpack.c.l.s4 1983009808
        %v2156 = vunpack.c.0.s8 %v2155
        %v2157 = vlaneseq
        %v2158 = vshrl.u32 %v2157, 7
        %v2159 = vsub.s32 %v2156, %v2158
        %v2160 = vrot.slane %v2152, %v2159
        %v2162 = vunpack.c.l.s4 1983009808
        %v2163 = vunpack.c.0.s8 %v2162
        %v2164 = vlaneseq
        %v2165 = vshrl.u32 %v2164, 7
        %v2166 = vsub.s32 %v2163, %v2165
        %v2167 = vrot.slane %v2153, %v2166
        %v2168 = vcombine.low %v2160, %v2167
        %v2169 = vcombine.low %v2025, %v2024
        %v2170 = vcombine.low %v2026, %v2034
        %v2172 = vunpack.c.l.s4 1983009808
        %v2173 = vunpack.c.0.s8 %v2172
        %v2174 = vlaneseq
        %v2175 = vshrl.u32 %v2174, 7
        %v2176 = vsub.s32 %v2173, %v2175
        %v2177 = vrot.slane %v2169, %v2176
        %v2179 = vunpack.c.l.s4 1983009808
        %v2180 = vunpack.c.0.s8 %v2179
        %v2181 = vlaneseq
        %v2182 = vshrl.u32 %v2181, 7
        %v2183 = vsub.s32 %v2180, %v2182
        %v2184 = vrot.slane %v2170, %v2183
        %v2185 = vcombine.low %v2177, %v2184
        %v2186 = vcombine.low %v2041, %v2042
        %v2187 = vcombine.low %v2050, %v2058
        %v2189 = vunpack.c.l.s4 1983009808
        %v2190 = vunpack.c.0.s8 %v2189
        %v2191 = vlaneseq
        %v2192 = vshrl.u32 %v2191, 7
        %v2193 = vsub.s32 %v2190, %v2192
        %v2194 = vrot.slane %v2186, %v2193
        %v2196 = vunpack.c.l.s4 1983009808
        %v2197 = vunpack.c.0.s8 %v2196
        %v2198 = vlaneseq
        %v2199 = vshrl.u32 %v2198, 7
        %v2200 = vsub.s32 %v2197, %v2199
        %v2201 = vrot.slane %v2187, %v2200
        %v2202 = vcombine.low %v2194, %v2201
        %v2203 = vcombine.low %v2059, %v2067
        %v2204 = vcombine.low %v2075, %v2074
        %v2206 = vunpack.c.l.s4 1983009808
        %v2207 = vunpack.c.0.s8 %v2206
        %v2208 = vlaneseq
        %v2209 = vshrl.u32 %v2208, 7
        %v2210 = vsub.s32 %v2207, %v2209
        %v2211 = vrot.slane %v2203, %v2210
        %v2213 = vunpack.c.l.s4 1983009808
        %v2214 = vunpack.c.0.s8 %v2213
        %v2215 = vlaneseq
        %v2216 = vshrl.u32 %v2215, 7
        %v2217 = vsub.s32 %v2214, %v2216
        %v2218 = vrot.slane %v2204, %v2217
        %v2219 = vcombine.low %v2211, %v2218
        %v2228 = vadd.f32 %v2076, %v2100
        %v2229 = vadd.f32 %v2077, %v2117
        %v2230 = vadd.f32 %v2078, %v2134
        %v2231 = vadd.f32 %v2079, %v2151
        %v2232 = vadd.f32 %v2080, %v2168
        %v2233 = vadd.f32 %v2081, %v2185
        %v2234 = vadd.f32 %v2082, %v2202
        %v2235 = vadd.f32 %v2083, %v2219
        %2236 = vst.msk [vmem:[#allocation3] sm:$0xff] %vm1357, %v2228
        %2237 = vst.msk [vmem:[#allocation3 + $0x8] sm:$0xff] %vm1357, %v2229
        %2238 = vst.msk [vmem:[#allocation3 + $0x10] sm:$0xff] %vm1357, %v2230
        %2239 = vst.msk [vmem:[#allocation3 + $0x18] sm:$0xff] %vm1357, %v2231
        %2240 = vst.msk [vmem:[#allocation3 + $0x20] sm:$0xff] %vm1357, %v2232
        %2241 = vst.msk [vmem:[#allocation3 + $0x28] sm:$0xff] %vm1357, %v2233
        %2242 = vst.msk [vmem:[#allocation3 + $0x30] sm:$0xff] %vm1357, %v2234
        %2243 = vst.msk [vmem:[#allocation3 + $0x38] sm:$0xff] %vm1357, %v2235
        %s2244 = scalar_lea.vmem %s1, 4
        %v2245 = vld [vmem:[%s2244] sm:$0xf]
        %v2247 = vsel %vm1781, %v2245, 0
        %2249 = vmatprep.subr.mxu0 0.0
        %2250 = vmatpush1.msra.mxu0 %v2247
        %2251 = vmatprep.subr.mxu0 0.0
        %2252 = vmatpush1.msra.mxu0 0.0
        %2253 = vmatprep.subr.mxu0 0.0
        %2254 = vmatpush1.msra.mxu0 0.0
        %2255 = vmatprep.subr.mxu0 0.0
        %2256 = vmatpush1.msra.mxu0 0.0
        %2257 = vmatprep.subr.mxu0 0.0
        %2258 = vmatpush1.msra.mxu0 0.0
        %2259 = vmatprep.subr.mxu0 0.0
        %2260 = vmatpush1.msra.mxu0 0.0
        %2261 = vmatprep.subr.mxu0 0.0
        %2262 = vmatpush1.msra.mxu0 0.0
        %2263 = vmatprep.subr.mxu0 0.0
        %2264 = vmatpush1.msra.mxu0 0.0
        %2265 = vmatprep.subr.mxu0 0.0
        %2266 = vmatpush1.msra.mxu0 0.0
        %2267 = vmatprep.subr.mxu0 0.0
        %2268 = vmatpush1.msra.mxu0 0.0
        %2269 = vmatprep.subr.mxu0 0.0
        %2270 = vmatpush1.msra.mxu0 0.0
        %2271 = vmatprep.subr.mxu0 0.0
        %2272 = vmatpush1.msra.mxu0 0.0
        %2273 = vmatprep.subr.mxu0 0.0
        %2274 = vmatpush1.msra.mxu0 0.0
        %2275 = vmatprep.subr.mxu0 0.0
        %2276 = vmatpush1.msra.mxu0 0.0
        %2277 = vmatprep.subr.mxu0 0.0
        %2278 = vmatpush1.msra.mxu0 0.0
        %2279 = vmatprep.subr.mxu0 0.0
        %2280 = vmatpush1.msra.mxu0 0.0
        %2281 = vmatprep.subr.mxu0 0.0
        %2282 = vmatpush1.msra.mxu0 0.0
        %2283 = vmatprep.subr.mxu0 0.0
        %2284 = vmatpush1.msra.mxu0 0.0
        %2285 = vmatprep.subr.mxu0 0.0
        %2286 = vmatpush1.msra.mxu0 0.0
        %2287 = vmatprep.subr.mxu0 0.0
        %2288 = vmatpush1.msra.mxu0 0.0
        %2289 = vmatprep.subr.mxu0 0.0
        %2290 = vmatpush1.msra.mxu0 0.0
        %2291 = vmatprep.subr.mxu0 0.0
        %2292 = vmatpush1.msra.mxu0 0.0
        %2293 = vmatprep.subr.mxu0 0.0
        %2294 = vmatpush1.msra.mxu0 0.0
        %2295 = vmatprep.subr.mxu0 0.0
        %2296 = vmatpush1.msra.mxu0 0.0
        %2297 = vmatprep.subr.mxu0 0.0
        %2298 = vmatpush1.msra.mxu0 0.0
        %2299 = vmatprep.subr.mxu0 0.0
        %2300 = vmatpush1.msra.mxu0 0.0
        %2301 = vmatprep.subr.mxu0 0.0
        %2302 = vmatpush1.msra.mxu0 0.0
        %2303 = vmatprep.subr.mxu0 0.0
        %2304 = vmatpush1.msra.mxu0 0.0
        %2305 = vmatprep.subr.mxu0 0.0
        %2306 = vmatpush1.msra.mxu0 0.0
        %2307 = vmatprep.subr.mxu0 0.0
        %2308 = vmatpush1.msra.mxu0 0.0
        %2309 = vmatprep.subr.mxu0 0.0
        %2310 = vmatpush1.msra.mxu0 0.0
        %2311 = vmatprep.subr.mxu0 0.0
        %2312 = vmatpush1.msra.mxu0 0.0
        %2313 = vmatprep.mubr.f32.mxu0 0.0
        %2314 = vmatmul.mubr.f32.gmra.mrb[0].mxu0 %v1761
        %v2315 = vpop.f32.mrb[0].mxu0
        %v2316 = vadd.f32 0.0, %v2315
        %v2317 = vpop.f32.mrb[0].mxu0
        %2318 = vmatprep.mubr.f32.mxu0 0.0
        %2319 = vmatmul.mubr.f32.gmra.mrb[0].mxu0 %v1763
        %v2320 = vpop.f32.mrb[0].mxu0
        %v2321 = vadd.f32 0.0, %v2320
        %v2322 = vpop.f32.mrb[0].mxu0
        %2323 = vmatprep.mubr.f32.mxu0 0.0
        %2324 = vmatmul.mubr.f32.gmra.mrb[0].mxu0 %v1765
        %v2325 = vpop.f32.mrb[0].mxu0
        %v2326 = vadd.f32 0.0, %v2325
        %v2327 = vpop.f32.mrb[0].mxu0
        %2328 = vmatprep.mubr.f32.mxu0 0.0
        %2329 = vmatmul.mubr.f32.gmra.mrb[0].mxu0 %v1767
        %v2330 = vpop.f32.mrb[0].mxu0
        %v2331 = vadd.f32 0.0, %v2330
        %v2332 = vpop.f32.mrb[0].mxu0
        %2333 = vmatprep.mubr.f32.mxu0 0.0
        %2334 = vmatmul.mubr.f32.gmra.mrb[0].mxu0 %v1769
        %v2335 = vpop.f32.mrb[0].mxu0
        %v2336 = vadd.f32 0.0, %v2335
        %v2337 = vpop.f32.mrb[0].mxu0
        %2338 = vmatprep.mubr.f32.mxu0 0.0
        %2339 = vmatmul.mubr.f32.gmra.mrb[0].mxu0 %v1771
        %v2340 = vpop.f32.mrb[0].mxu0
        %v2341 = vadd.f32 0.0, %v2340
        %v2342 = vpop.f32.mrb[0].mxu0
        %2343 = vmatprep.mubr.f32.mxu0 0.0
        %2344 = vmatmul.mubr.f32.gmra.mrb[0].mxu0 %v1773
        %v2345 = vpop.f32.mrb[0].mxu0
        %v2346 = vadd.f32 0.0, %v2345
        %v2347 = vpop.f32.mrb[0].mxu0
        %2348 = vmatprep.mubr.f32.mxu0 0.0
        %2349 = vmatmul.mubr.f32.gmra.mrb[0].mxu0 %v1775
        %v2350 = vpop.f32.mrb[0].mxu0
        %v2351 = vadd.f32 0.0, %v2350
        %v2352 = vpop.f32.mrb[0].mxu0
        %2353 = vmatprep.mubr.f32.mxu0 0.0
        %2354 = vmatmul.mubr.f32.gmra.mrb[0].mxu0 %v1777
        %v2355 = vpop.f32.mrb[0].mxu0
        %v2356 = vadd.f32 0.0, %v2355
        %v2357 = vpop.f32.mrb[0].mxu0
        %2358 = vmatprep.mubr.f32.mxu0 0.0
        %2359 = vmatmul.mubr.f32.gmra.mrb[0].mxu0 %v1779
        %v2360 = vpop.f32.mrb[0].mxu0
        %v2361 = vadd.f32 0.0, %v2360
        %v2362 = vpop.f32.mrb[0].mxu0
        %2363 = vdwg.mxu0
        %v2374 = vcombine.high %v2316, %v2316
        %v2376 = vunpack.c.l.s4 1983009808
        %v2377 = vunpack.c.0.s8 %v2376
        %v2378 = vlaneseq
        %v2379 = vshrl.u32 %v2378, 7
        %v2380 = vsub.s32 %v2377, %v2379
        %v2381 = vrot.slane %v2316, %v2380
        %v2383 = vunpack.c.l.s4 1983009808
        %v2384 = vunpack.c.0.s8 %v2383
        %v2385 = vlaneseq
        %v2386 = vshrl.u32 %v2385, 7
        %v2387 = vsub.s32 %v2384, %v2386
        %v2388 = vrot.slane %v2374, %v2387
        %v2389 = vcombine.high %v2381, %v2381
        %v2390 = vcombine.high %v2388, %v2388
        %v2391 = vcombine.high %v2321, %v2321
        %v2393 = vunpack.c.l.s4 1983009808
        %v2394 = vunpack.c.0.s8 %v2393
        %v2395 = vlaneseq
        %v2396 = vshrl.u32 %v2395, 7
        %v2397 = vsub.s32 %v2394, %v2396
        %v2398 = vrot.slane %v2321, %v2397
        %v2400 = vunpack.c.l.s4 1983009808
        %v2401 = vunpack.c.0.s8 %v2400
        %v2402 = vlaneseq
        %v2403 = vshrl.u32 %v2402, 7
        %v2404 = vsub.s32 %v2401, %v2403
        %v2405 = vrot.slane %v2391, %v2404
        %v2406 = vcombine.high %v2398, %v2398
        %v2407 = vcombine.high %v2405, %v2405
        %v2408 = vcombine.high %v2326, %v2326
        %v2410 = vunpack.c.l.s4 1983009808
        %v2411 = vunpack.c.0.s8 %v2410
        %v2412 = vlaneseq
        %v2413 = vshrl.u32 %v2412, 7
        %v2414 = vsub.s32 %v2411, %v2413
        %v2415 = vrot.slane %v2326, %v2414
        %v2417 = vunpack.c.l.s4 1983009808
        %v2418 = vunpack.c.0.s8 %v2417
        %v2419 = vlaneseq
        %v2420 = vshrl.u32 %v2419, 7
        %v2421 = vsub.s32 %v2418, %v2420
        %v2422 = vrot.slane %v2408, %v2421
        %v2423 = vcombine.high %v2415, %v2415
        %v2424 = vcombine.high %v2422, %v2422
        %v2425 = vcombine.high %v2331, %v2331
        %v2427 = vunpack.c.l.s4 1983009808
        %v2428 = vunpack.c.0.s8 %v2427
        %v2429 = vlaneseq
        %v2430 = vshrl.u32 %v2429, 7
        %v2431 = vsub.s32 %v2428, %v2430
        %v2432 = vrot.slane %v2331, %v2431
        %v2434 = vunpack.c.l.s4 1983009808
        %v2435 = vunpack.c.0.s8 %v2434
        %v2436 = vlaneseq
        %v2437 = vshrl.u32 %v2436, 7
        %v2438 = vsub.s32 %v2435, %v2437
        %v2439 = vrot.slane %v2425, %v2438
        %v2440 = vcombine.high %v2432, %v2432
        %v2441 = vcombine.high %v2439, %v2439
        %v2442 = vcombine.high %v2336, %v2336
        %v2444 = vunpack.c.l.s4 1983009808
        %v2445 = vunpack.c.0.s8 %v2444
        %v2446 = vlaneseq
        %v2447 = vshrl.u32 %v2446, 7
        %v2448 = vsub.s32 %v2445, %v2447
        %v2449 = vrot.slane %v2336, %v2448
        %v2451 = vunpack.c.l.s4 1983009808
        %v2452 = vunpack.c.0.s8 %v2451
        %v2453 = vlaneseq
        %v2454 = vshrl.u32 %v2453, 7
        %v2455 = vsub.s32 %v2452, %v2454
        %v2456 = vrot.slane %v2442, %v2455
        %v2457 = vcombine.high %v2449, %v2449
        %v2458 = vcombine.high %v2456, %v2456
        %v2459 = vcombine.high %v2341, %v2341
        %v2461 = vunpack.c.l.s4 1983009808
        %v2462 = vunpack.c.0.s8 %v2461
        %v2463 = vlaneseq
        %v2464 = vshrl.u32 %v2463, 7
        %v2465 = vsub.s32 %v2462, %v2464
        %v2466 = vrot.slane %v2341, %v2465
        %v2468 = vunpack.c.l.s4 1983009808
        %v2469 = vunpack.c.0.s8 %v2468
        %v2470 = vlaneseq
        %v2471 = vshrl.u32 %v2470, 7
        %v2472 = vsub.s32 %v2469, %v2471
        %v2473 = vrot.slane %v2459, %v2472
        %v2474 = vcombine.high %v2466, %v2466
        %v2475 = vcombine.high %v2473, %v2473
        %v2476 = vcombine.high %v2346, %v2346
        %v2478 = vunpack.c.l.s4 1983009808
        %v2479 = vunpack.c.0.s8 %v2478
        %v2480 = vlaneseq
        %v2481 = vshrl.u32 %v2480, 7
        %v2482 = vsub.s32 %v2479, %v2481
        %v2483 = vrot.slane %v2346, %v2482
        %v2485 = vunpack.c.l.s4 1983009808
        %v2486 = vunpack.c.0.s8 %v2485
        %v2487 = vlaneseq
        %v2488 = vshrl.u32 %v2487, 7
        %v2489 = vsub.s32 %v2486, %v2488
        %v2490 = vrot.slane %v2476, %v2489
        %v2491 = vcombine.high %v2483, %v2483
        %v2492 = vcombine.high %v2490, %v2490
        %v2493 = vcombine.high %v2351, %v2351
        %v2495 = vunpack.c.l.s4 1983009808
        %v2496 = vunpack.c.0.s8 %v2495
        %v2497 = vlaneseq
        %v2498 = vshrl.u32 %v2497, 7
        %v2499 = vsub.s32 %v2496, %v2498
        %v2500 = vrot.slane %v2351, %v2499
        %v2502 = vunpack.c.l.s4 1983009808
        %v2503 = vunpack.c.0.s8 %v2502
        %v2504 = vlaneseq
        %v2505 = vshrl.u32 %v2504, 7
        %v2506 = vsub.s32 %v2503, %v2505
        %v2507 = vrot.slane %v2493, %v2506
        %v2508 = vcombine.high %v2500, %v2500
        %v2509 = vcombine.high %v2507, %v2507
        %v2510 = vcombine.high %v2356, %v2356
        %v2512 = vunpack.c.l.s4 1983009808
        %v2513 = vunpack.c.0.s8 %v2512
        %v2514 = vlaneseq
        %v2515 = vshrl.u32 %v2514, 7
        %v2516 = vsub.s32 %v2513, %v2515
        %v2517 = vrot.slane %v2356, %v2516
        %v2519 = vunpack.c.l.s4 1983009808
        %v2520 = vunpack.c.0.s8 %v2519
        %v2521 = vlaneseq
        %v2522 = vshrl.u32 %v2521, 7
        %v2523 = vsub.s32 %v2520, %v2522
        %v2524 = vrot.slane %v2510, %v2523
        %v2525 = vcombine.high %v2517, %v2517
        %v2526 = vcombine.high %v2524, %v2524
        %v2527 = vcombine.high %v2361, %v2361
        %v2529 = vunpack.c.l.s4 1983009808
        %v2530 = vunpack.c.0.s8 %v2529
        %v2531 = vlaneseq
        %v2532 = vshrl.u32 %v2531, 7
        %v2533 = vsub.s32 %v2530, %v2532
        %v2534 = vrot.slane %v2361, %v2533
        %v2536 = vunpack.c.l.s4 1983009808
        %v2537 = vunpack.c.0.s8 %v2536
        %v2538 = vlaneseq
        %v2539 = vshrl.u32 %v2538, 7
        %v2540 = vsub.s32 %v2537, %v2539
        %v2541 = vrot.slane %v2527, %v2540
        %v2542 = vcombine.high %v2534, %v2534
        %v2543 = vcombine.high %v2541, %v2541
        %v2544 = vld [vmem:[#allocation3] sm:$0xff]
        %v2545 = vld [vmem:[#allocation3 + $0x8] sm:$0xff]
        %v2546 = vld [vmem:[#allocation3 + $0x10] sm:$0xff]
        %v2547 = vld [vmem:[#allocation3 + $0x18] sm:$0xff]
        %v2548 = vld [vmem:[#allocation3 + $0x20] sm:$0xff]
        %v2549 = vld [vmem:[#allocation3 + $0x28] sm:$0xff]
        %v2550 = vld [vmem:[#allocation3 + $0x30] sm:$0xff]
        %v2551 = vld [vmem:[#allocation3 + $0x38] sm:$0xff]
        %v2552 = vcombine.low %v2381, %v2389
        %v2553 = vcombine.low %v2388, %v2390
        %v2555 = vunpack.c.l.s4 1983009808
        %v2556 = vunpack.c.0.s8 %v2555
        %v2557 = vlaneseq
        %v2558 = vshrl.u32 %v2557, 7
        %v2559 = vsub.s32 %v2556, %v2558
        %v2560 = vrot.slane %v2552, %v2559
        %v2562 = vunpack.c.l.s4 1983009808
        %v2563 = vunpack.c.0.s8 %v2562
        %v2564 = vlaneseq
        %v2565 = vshrl.u32 %v2564, 7
        %v2566 = vsub.s32 %v2563, %v2565
        %v2567 = vrot.slane %v2553, %v2566
        %v2568 = vcombine.low %v2560, %v2567
        %v2570 = vunpack.c.l.s4 1983009808
        %v2571 = vunpack.c.0.s8 %v2570
        %v2572 = vlaneseq
        %v2573 = vshrl.u32 %v2572, 7
        %v2574 = vsub.s32 %v2571, %v2573
        %v2575 = vrot.slane %v2398, %v2574
        %v2576 = vcombine.low %v2406, %v2405
        %v2577 = vcombine.low %v2407, %v2415
        %v2579 = vunpack.c.l.s4 1983009808
        %v2580 = vunpack.c.0.s8 %v2579
        %v2581 = vlaneseq
        %v2582 = vshrl.u32 %v2581, 7
        %v2583 = vsub.s32 %v2580, %v2582
        %v2584 = vrot.slane %v2576, %v2583
        %v2586 = vunpack.c.l.s4 1983009808
        %v2587 = vunpack.c.0.s8 %v2586
        %v2588 = vlaneseq
        %v2589 = vshrl.u32 %v2588, 7
        %v2590 = vsub.s32 %v2587, %v2589
        %v2591 = vrot.slane %v2577, %v2590
        %v2592 = vcombine.low %v2584, %v2591
        %v2594 = vunpack.c.l.s4 1983009808
        %v2595 = vunpack.c.0.s8 %v2594
        %v2596 = vlaneseq
        %v2597 = vshrl.u32 %v2596, 7
        %v2598 = vsub.s32 %v2595, %v2597
        %v2599 = vrot.slane %v2423, %v2598
        %v2600 = vcombine.low %v2422, %v2424
        %v2601 = vcombine.low %v2432, %v2440
        %v2603 = vunpack.c.l.s4 1983009808
        %v2604 = vunpack.c.0.s8 %v2603
        %v2605 = vlaneseq
        %v2606 = vshrl.u32 %v2605, 7
        %v2607 = vsub.s32 %v2604, %v2606
        %v2608 = vrot.slane %v2600, %v2607
        %v2610 = vunpack.c.l.s4 1983009808
        %v2611 = vunpack.c.0.s8 %v2610
        %v2612 = vlaneseq
        %v2613 = vshrl.u32 %v2612, 7
        %v2614 = vsub.s32 %v2611, %v2613
        %v2615 = vrot.slane %v2601, %v2614
        %v2616 = vcombine.low %v2608, %v2615
        %v2618 = vunpack.c.l.s4 1983009808
        %v2619 = vunpack.c.0.s8 %v2618
        %v2620 = vlaneseq
        %v2621 = vshrl.u32 %v2620, 7
        %v2622 = vsub.s32 %v2619, %v2621
        %v2623 = vrot.slane %v2439, %v2622
        %v2624 = vcombine.low %v2441, %v2449
        %v2625 = vcombine.low %v2457, %v2456
        %v2627 = vunpack.c.l.s4 1983009808
        %v2628 = vunpack.c.0.s8 %v2627
        %v2629 = vlaneseq
        %v2630 = vshrl.u32 %v2629, 7
        %v2631 = vsub.s32 %v2628, %v2630
        %v2632 = vrot.slane %v2624, %v2631
        %v2634 = vunpack.c.l.s4 1983009808
        %v2635 = vunpack.c.0.s8 %v2634
        %v2636 = vlaneseq
        %v2637 = vshrl.u32 %v2636, 7
        %v2638 = vsub.s32 %v2635, %v2637
        %v2639 = vrot.slane %v2625, %v2638
        %v2640 = vcombine.low %v2632, %v2639
        %v2642 = vunpack.c.l.s4 1983009808
        %v2643 = vunpack.c.0.s8 %v2642
        %v2644 = vlaneseq
        %v2645 = vshrl.u32 %v2644, 7
        %v2646 = vsub.s32 %v2643, %v2645
        %v2647 = vrot.slane %v2458, %v2646
        %v2648 = vcombine.low %v2466, %v2474
        %v2649 = vcombine.low %v2473, %v2475
        %v2651 = vunpack.c.l.s4 1983009808
        %v2652 = vunpack.c.0.s8 %v2651
        %v2653 = vlaneseq
        %v2654 = vshrl.u32 %v2653, 7
        %v2655 = vsub.s32 %v2652, %v2654
        %v2656 = vrot.slane %v2648, %v2655
        %v2658 = vunpack.c.l.s4 1983009808
        %v2659 = vunpack.c.0.s8 %v2658
        %v2660 = vlaneseq
        %v2661 = vshrl.u32 %v2660, 7
        %v2662 = vsub.s32 %v2659, %v2661
        %v2663 = vrot.slane %v2649, %v2662
        %v2664 = vcombine.low %v2656, %v2663
        %v2666 = vunpack.c.l.s4 1983009808
        %v2667 = vunpack.c.0.s8 %v2666
        %v2668 = vlaneseq
        %v2669 = vshrl.u32 %v2668, 7
        %v2670 = vsub.s32 %v2667, %v2669
        %v2671 = vrot.slane %v2483, %v2670
        %v2672 = vcombine.low %v2491, %v2490
        %v2673 = vcombine.low %v2492, %v2500
        %v2675 = vunpack.c.l.s4 1983009808
        %v2676 = vunpack.c.0.s8 %v2675
        %v2677 = vlaneseq
        %v2678 = vshrl.u32 %v2677, 7
        %v2679 = vsub.s32 %v2676, %v2678
        %v2680 = vrot.slane %v2672, %v2679
        %v2682 = vunpack.c.l.s4 1983009808
        %v2683 = vunpack.c.0.s8 %v2682
        %v2684 = vlaneseq
        %v2685 = vshrl.u32 %v2684, 7
        %v2686 = vsub.s32 %v2683, %v2685
        %v2687 = vrot.slane %v2673, %v2686
        %v2688 = vcombine.low %v2680, %v2687
        %v2690 = vunpack.c.l.s4 1983009808
        %v2691 = vunpack.c.0.s8 %v2690
        %v2692 = vlaneseq
        %v2693 = vshrl.u32 %v2692, 7
        %v2694 = vsub.s32 %v2691, %v2693
        %v2695 = vrot.slane %v2508, %v2694
        %v2696 = vcombine.low %v2507, %v2509
        %v2697 = vcombine.low %v2517, %v2525
        %v2699 = vunpack.c.l.s4 1983009808
        %v2700 = vunpack.c.0.s8 %v2699
        %v2701 = vlaneseq
        %v2702 = vshrl.u32 %v2701, 7
        %v2703 = vsub.s32 %v2700, %v2702
        %v2704 = vrot.slane %v2696, %v2703
        %v2706 = vunpack.c.l.s4 1983009808
        %v2707 = vunpack.c.0.s8 %v2706
        %v2708 = vlaneseq
        %v2709 = vshrl.u32 %v2708, 7
        %v2710 = vsub.s32 %v2707, %v2709
        %v2711 = vrot.slane %v2697, %v2710
        %v2712 = vcombine.low %v2704, %v2711
        %v2714 = vunpack.c.l.s4 1983009808
        %v2715 = vunpack.c.0.s8 %v2714
        %v2716 = vlaneseq
        %v2717 = vshrl.u32 %v2716, 7
        %v2718 = vsub.s32 %v2715, %v2717
        %v2719 = vrot.slane %v2524, %v2718
        %v2720 = vcombine.low %v2526, %v2534
        %v2721 = vcombine.low %v2542, %v2541
        %v2723 = vunpack.c.l.s4 1983009808
        %v2724 = vunpack.c.0.s8 %v2723
        %v2725 = vlaneseq
        %v2726 = vshrl.u32 %v2725, 7
        %v2727 = vsub.s32 %v2724, %v2726
        %v2728 = vrot.slane %v2720, %v2727
        %v2730 = vunpack.c.l.s4 1983009808
        %v2731 = vunpack.c.0.s8 %v2730
        %v2732 = vlaneseq
        %v2733 = vshrl.u32 %v2732, 7
        %v2734 = vsub.s32 %v2731, %v2733
        %v2735 = vrot.slane %v2721, %v2734
        %v2736 = vcombine.low %v2728, %v2735
        %v2738 = vunpack.c.l.s4 1983009808
        %v2739 = vunpack.c.0.s8 %v2738
        %v2740 = vlaneseq
        %v2741 = vshrl.u32 %v2740, 7
        %v2742 = vsub.s32 %v2739, %v2741
        %v2743 = vrot.slane %v2543, %v2742
        %vm2744 = vcmask 1046528
        %v2745 = vrot.slane %v2568, 1
        %v2746 = vrot.slane %v2575, 1
        %v2747 = vsel %vm2744, %v2745, %v2746
        %v2748 = vrot.slane %v2592, 1
        %v2749 = vrot.slane %v2599, 1
        %v2750 = vsel %vm2744, %v2748, %v2749
        %v2751 = vrot.slane %v2616, 1
        %v2752 = vrot.slane %v2623, 1
        %v2753 = vsel %vm2744, %v2751, %v2752
        %v2754 = vrot.slane %v2640, 1
        %v2755 = vrot.slane %v2647, 1
        %v2756 = vsel %vm2744, %v2754, %v2755
        %v2757 = vrot.slane %v2664, 1
        %v2758 = vrot.slane %v2671, 1
        %v2759 = vsel %vm2744, %v2757, %v2758
        %v2760 = vrot.slane %v2688, 1
        %v2761 = vrot.slane %v2695, 1
        %v2762 = vsel %vm2744, %v2760, %v2761
        %v2763 = vrot.slane %v2712, 1
        %v2764 = vrot.slane %v2719, 1
        %v2765 = vsel %vm2744, %v2763, %v2764
        %v2766 = vrot.slane %v2736, 1
        %v2767 = vrot.slane %v2743, 1
        %v2768 = vsel %vm2744, %v2766, %v2767
        %v2777 = vadd.f32 %v2544, %v2747
        %v2778 = vadd.f32 %v2545, %v2750
        %v2779 = vadd.f32 %v2546, %v2753
        %v2780 = vadd.f32 %v2547, %v2756
        %v2781 = vadd.f32 %v2548, %v2759
        %v2782 = vadd.f32 %v2549, %v2762
        %v2783 = vadd.f32 %v2550, %v2765
        %v2784 = vadd.f32 %v2551, %v2768
        %2785 = vst.msk [vmem:[#allocation3] sm:$0xff] %vm1357, %v2777
        %2786 = vst.msk [vmem:[#allocation3 + $0x8] sm:$0xff] %vm1357, %v2778
        %2787 = vst.msk [vmem:[#allocation3 + $0x10] sm:$0xff] %vm1357, %v2779
        %2788 = vst.msk [vmem:[#allocation3 + $0x18] sm:$0xff] %vm1357, %v2780
        %2789 = vst.msk [vmem:[#allocation3 + $0x20] sm:$0xff] %vm1357, %v2781
        %2790 = vst.msk [vmem:[#allocation3 + $0x28] sm:$0xff] %vm1357, %v2782
        %2791 = vst.msk [vmem:[#allocation3 + $0x30] sm:$0xff] %vm1357, %v2783
        %2792 = vst.msk [vmem:[#allocation3 + $0x38] sm:$0xff] %vm1357, %v2784
        %s2793 = scalar_lea.vmem %s1, 8
        %v2794 = vld [vmem:[%s2793] sm:$0xf]
        %v2796 = vsel %vm1781, %v2794, 0
        %2798 = vmatprep.subr.mxu0 0.0
        %2799 = vmatpush1.msra.mxu0 %v2796
        %2800 = vmatprep.subr.mxu0 0.0
        %2801 = vmatpush1.msra.mxu0 0.0
        %2802 = vmatprep.subr.mxu0 0.0
        %2803 = vmatpush1.msra.mxu0 0.0
        %2804 = vmatprep.subr.mxu0 0.0
        %2805 = vmatpush1.msra.mxu0 0.0
        %2806 = vmatprep.subr.mxu0 0.0
        %2807 = vmatpush1.msra.mxu0 0.0
        %2808 = vmatprep.subr.mxu0 0.0
        %2809 = vmatpush1.msra.mxu0 0.0
        %2810 = vmatprep.subr.mxu0 0.0
        %2811 = vmatpush1.msra.mxu0 0.0
        %2812 = vmatprep.subr.mxu0 0.0
        %2813 = vmatpush1.msra.mxu0 0.0
        %2814 = vmatprep.subr.mxu0 0.0
        %2815 = vmatpush1.msra.mxu0 0.0
        %2816 = vmatprep.subr.mxu0 0.0
        %2817 = vmatpush1.msra.mxu0 0.0
        %2818 = vmatprep.subr.mxu0 0.0
        %2819 = vmatpush1.msra.mxu0 0.0
        %2820 = vmatprep.subr.mxu0 0.0
        %2821 = vmatpush1.msra.mxu0 0.0
        %2822 = vmatprep.subr.mxu0 0.0
        %2823 = vmatpush1.msra.mxu0 0.0
        %2824 = vmatprep.subr.mxu0 0.0
        %2825 = vmatpush1.msra.mxu0 0.0
        %2826 = vmatprep.subr.mxu0 0.0
        %2827 = vmatpush1.msra.mxu0 0.0
        %2828 = vmatprep.subr.mxu0 0.0
        %2829 = vmatpush1.msra.mxu0 0.0
        %2830 = vmatprep.subr.mxu0 0.0
        %2831 = vmatpush1.msra.mxu0 0.0
        %2832 = vmatprep.subr.mxu0 0.0
        %2833 = vmatpush1.msra.mxu0 0.0
        %2834 = vmatprep.subr.mxu0 0.0
        %2835 = vmatpush1.msra.mxu0 0.0
        %2836 = vmatprep.subr.mxu0 0.0
        %2837 = vmatpush1.msra.mxu0 0.0
        %2838 = vmatprep.subr.mxu0 0.0
        %2839 = vmatpush1.msra.mxu0 0.0
        %2840 = vmatprep.subr.mxu0 0.0
        %2841 = vmatpush1.msra.mxu0 0.0
        %2842 = vmatprep.subr.mxu0 0.0
        %2843 = vmatpush1.msra.mxu0 0.0
        %2844 = vmatprep.subr.mxu0 0.0
        %2845 = vmatpush1.msra.mxu0 0.0
        %2846 = vmatprep.subr.mxu0 0.0
        %2847 = vmatpush1.msra.mxu0 0.0
        %2848 = vmatprep.subr.mxu0 0.0
        %2849 = vmatpush1.msra.mxu0 0.0
        %2850 = vmatprep.subr.mxu0 0.0
        %2851 = vmatpush1.msra.mxu0 0.0
        %2852 = vmatprep.subr.mxu0 0.0
        %2853 = vmatpush1.msra.mxu0 0.0
        %2854 = vmatprep.subr.mxu0 0.0
        %2855 = vmatpush1.msra.mxu0 0.0
        %2856 = vmatprep.subr.mxu0 0.0
        %2857 = vmatpush1.msra.mxu0 0.0
        %2858 = vmatprep.subr.mxu0 0.0
        %2859 = vmatpush1.msra.mxu0 0.0
        %2860 = vmatprep.subr.mxu0 0.0
        %2861 = vmatpush1.msra.mxu0 0.0
        %2862 = vmatprep.mubr.f32.mxu0 0.0
        %2863 = vmatmul.mubr.f32.gmra.mrb[0].mxu0 %v1761
        %v2864 = vpop.f32.mrb[0].mxu0
        %v2865 = vadd.f32 0.0, %v2864
        %v2866 = vpop.f32.mrb[0].mxu0
        %2867 = vmatprep.mubr.f32.mxu0 0.0
        %2868 = vmatmul.mubr.f32.gmra.mrb[0].mxu0 %v1763
        %v2869 = vpop.f32.mrb[0].mxu0
        %v2870 = vadd.f32 0.0, %v2869
        %v2871 = vpop.f32.mrb[0].mxu0
        %2872 = vmatprep.mubr.f32.mxu0 0.0
        %2873 = vmatmul.mubr.f32.gmra.mrb[0].mxu0 %v1765
        %v2874 = vpop.f32.mrb[0].mxu0
        %v2875 = vadd.f32 0.0, %v2874
        %v2876 = vpop.f32.mrb[0].mxu0
        %2877 = vmatprep.mubr.f32.mxu0 0.0
        %2878 = vmatmul.mubr.f32.gmra.mrb[0].mxu0 %v1767
        %v2879 = vpop.f32.mrb[0].mxu0
        %v2880 = vadd.f32 0.0, %v2879
        %v2881 = vpop.f32.mrb[0].mxu0
        %2882 = vmatprep.mubr.f32.mxu0 0.0
        %2883 = vmatmul.mubr.f32.gmra.mrb[0].mxu0 %v1769
        %v2884 = vpop.f32.mrb[0].mxu0
        %v2885 = vadd.f32 0.0, %v2884
        %v2886 = vpop.f32.mrb[0].mxu0
        %2887 = vmatprep.mubr.f32.mxu0 0.0
        %2888 = vmatmul.mubr.f32.gmra.mrb[0].mxu0 %v1771
        %v2889 = vpop.f32.mrb[0].mxu0
        %v2890 = vadd.f32 0.0, %v2889
        %v2891 = vpop.f32.mrb[0].mxu0
        %2892 = vmatprep.mubr.f32.mxu0 0.0
        %2893 = vmatmul.mubr.f32.gmra.mrb[0].mxu0 %v1773
        %v2894 = vpop.f32.mrb[0].mxu0
        %v2895 = vadd.f32 0.0, %v2894
        %v2896 = vpop.f32.mrb[0].mxu0
        %2897 = vmatprep.mubr.f32.mxu0 0.0
        %2898 = vmatmul.mubr.f32.gmra.mrb[0].mxu0 %v1775
        %v2899 = vpop.f32.mrb[0].mxu0
        %v2900 = vadd.f32 0.0, %v2899
        %v2901 = vpop.f32.mrb[0].mxu0
        %2902 = vmatprep.mubr.f32.mxu0 0.0
        %2903 = vmatmul.mubr.f32.gmra.mrb[0].mxu0 %v1777
        %v2904 = vpop.f32.mrb[0].mxu0
        %v2905 = vadd.f32 0.0, %v2904
        %v2906 = vpop.f32.mrb[0].mxu0
        %2907 = vmatprep.mubr.f32.mxu0 0.0
        %2908 = vmatmul.mubr.f32.gmra.mrb[0].mxu0 %v1779
        %v2909 = vpop.f32.mrb[0].mxu0
        %v2910 = vadd.f32 0.0, %v2909
        %v2911 = vpop.f32.mrb[0].mxu0
        %2912 = vdwg.mxu0
        %v2923 = vcombine.high %v2865, %v2865
        %v2925 = vunpack.c.l.s4 1983009808
        %v2926 = vunpack.c.0.s8 %v2925
        %v2927 = vlaneseq
        %v2928 = vshrl.u32 %v2927, 7
        %v2929 = vsub.s32 %v2926, %v2928
        %v2930 = vrot.slane %v2865, %v2929
        %v2932 = vunpack.c.l.s4 1983009808
        %v2933 = vunpack.c.0.s8 %v2932
        %v2934 = vlaneseq
        %v2935 = vshrl.u32 %v2934, 7
        %v2936 = vsub.s32 %v2933, %v2935
        %v2937 = vrot.slane %v2923, %v2936
        %v2938 = vcombine.high %v2930, %v2930
        %v2939 = vcombine.high %v2937, %v2937
        %v2940 = vcombine.high %v2870, %v2870
        %v2942 = vunpack.c.l.s4 1983009808
        %v2943 = vunpack.c.0.s8 %v2942
        %v2944 = vlaneseq
        %v2945 = vshrl.u32 %v2944, 7
        %v2946 = vsub.s32 %v2943, %v2945
        %v2947 = vrot.slane %v2870, %v2946
        %v2949 = vunpack.c.l.s4 1983009808
        %v2950 = vunpack.c.0.s8 %v2949
        %v2951 = vlaneseq
        %v2952 = vshrl.u32 %v2951, 7
        %v2953 = vsub.s32 %v2950, %v2952
        %v2954 = vrot.slane %v2940, %v2953
        %v2955 = vcombine.high %v2954, %v2954
        %v2956 = vcombine.high %v2875, %v2875
        %v2958 = vunpack.c.l.s4 1983009808
        %v2959 = vunpack.c.0.s8 %v2958
        %v2960 = vlaneseq
        %v2961 = vshrl.u32 %v2960, 7
        %v2962 = vsub.s32 %v2959, %v2961
        %v2963 = vrot.slane %v2875, %v2962
        %v2965 = vunpack.c.l.s4 1983009808
        %v2966 = vunpack.c.0.s8 %v2965
        %v2967 = vlaneseq
        %v2968 = vshrl.u32 %v2967, 7
        %v2969 = vsub.s32 %v2966, %v2968
        %v2970 = vrot.slane %v2956, %v2969
        %v2971 = vcombine.high %v2963, %v2963
        %v2972 = vcombine.high %v2970, %v2970
        %v2973 = vcombine.high %v2880, %v2880
        %v2975 = vunpack.c.l.s4 1983009808
        %v2976 = vunpack.c.0.s8 %v2975
        %v2977 = vlaneseq
        %v2978 = vshrl.u32 %v2977, 7
        %v2979 = vsub.s32 %v2976, %v2978
        %v2980 = vrot.slane %v2880, %v2979
        %v2982 = vunpack.c.l.s4 1983009808
        %v2983 = vunpack.c.0.s8 %v2982
        %v2984 = vlaneseq
        %v2985 = vshrl.u32 %v2984, 7
        %v2986 = vsub.s32 %v2983, %v2985
        %v2987 = vrot.slane %v2973, %v2986
        %v2988 = vcombine.high %v2980, %v2980
        %v2989 = vcombine.high %v2885, %v2885
        %v2991 = vunpack.c.l.s4 1983009808
        %v2992 = vunpack.c.0.s8 %v2991
        %v2993 = vlaneseq
        %v2994 = vshrl.u32 %v2993, 7
        %v2995 = vsub.s32 %v2992, %v2994
        %v2996 = vrot.slane %v2885, %v2995
        %v2998 = vunpack.c.l.s4 1983009808
        %v2999 = vunpack.c.0.s8 %v2998
        %v3000 = vlaneseq
        %v3001 = vshrl.u32 %v3000, 7
        %v3002 = vsub.s32 %v2999, %v3001
        %v3003 = vrot.slane %v2989, %v3002
        %v3004 = vcombine.high %v2996, %v2996
        %v3005 = vcombine.high %v3003, %v3003
        %v3006 = vcombine.high %v2890, %v2890
        %v3008 = vunpack.c.l.s4 1983009808
        %v3009 = vunpack.c.0.s8 %v3008
        %v3010 = vlaneseq
        %v3011 = vshrl.u32 %v3010, 7
        %v3012 = vsub.s32 %v3009, %v3011
        %v3013 = vrot.slane %v2890, %v3012
        %v3015 = vunpack.c.l.s4 1983009808
        %v3016 = vunpack.c.0.s8 %v3015
        %v3017 = vlaneseq
        %v3018 = vshrl.u32 %v3017, 7
        %v3019 = vsub.s32 %v3016, %v3018
        %v3020 = vrot.slane %v3006, %v3019
        %v3021 = vcombine.high %v3013, %v3013
        %v3022 = vcombine.high %v3020, %v3020
        %v3023 = vcombine.high %v2895, %v2895
        %v3025 = vunpack.c.l.s4 1983009808
        %v3026 = vunpack.c.0.s8 %v3025
        %v3027 = vlaneseq
        %v3028 = vshrl.u32 %v3027, 7
        %v3029 = vsub.s32 %v3026, %v3028
        %v3030 = vrot.slane %v2895, %v3029
        %v3032 = vunpack.c.l.s4 1983009808
        %v3033 = vunpack.c.0.s8 %v3032
        %v3034 = vlaneseq
        %v3035 = vshrl.u32 %v3034, 7
        %v3036 = vsub.s32 %v3033, %v3035
        %v3037 = vrot.slane %v3023, %v3036
        %v3038 = vcombine.high %v3037, %v3037
        %v3039 = vcombine.high %v2900, %v2900
        %v3041 = vunpack.c.l.s4 1983009808
        %v3042 = vunpack.c.0.s8 %v3041
        %v3043 = vlaneseq
        %v3044 = vshrl.u32 %v3043, 7
        %v3045 = vsub.s32 %v3042, %v3044
        %v3046 = vrot.slane %v2900, %v3045
        %v3048 = vunpack.c.l.s4 1983009808
        %v3049 = vunpack.c.0.s8 %v3048
        %v3050 = vlaneseq
        %v3051 = vshrl.u32 %v3050, 7
        %v3052 = vsub.s32 %v3049, %v3051
        %v3053 = vrot.slane %v3039, %v3052
        %v3054 = vcombine.high %v3046, %v3046
        %v3055 = vcombine.high %v3053, %v3053
        %v3056 = vcombine.high %v2905, %v2905
        %v3058 = vunpack.c.l.s4 1983009808
        %v3059 = vunpack.c.0.s8 %v3058
        %v3060 = vlaneseq
        %v3061 = vshrl.u32 %v3060, 7
        %v3062 = vsub.s32 %v3059, %v3061
        %v3063 = vrot.slane %v2905, %v3062
        %v3065 = vunpack.c.l.s4 1983009808
        %v3066 = vunpack.c.0.s8 %v3065
        %v3067 = vlaneseq
        %v3068 = vshrl.u32 %v3067, 7
        %v3069 = vsub.s32 %v3066, %v3068
        %v3070 = vrot.slane %v3056, %v3069
        %v3071 = vcombine.high %v3063, %v3063
        %v3072 = vcombine.high %v2910, %v2910
        %v3074 = vunpack.c.l.s4 1983009808
        %v3075 = vunpack.c.0.s8 %v3074
        %v3076 = vlaneseq
        %v3077 = vshrl.u32 %v3076, 7
        %v3078 = vsub.s32 %v3075, %v3077
        %v3079 = vrot.slane %v2910, %v3078
        %v3081 = vunpack.c.l.s4 1983009808
        %v3082 = vunpack.c.0.s8 %v3081
        %v3083 = vlaneseq
        %v3084 = vshrl.u32 %v3083, 7
        %v3085 = vsub.s32 %v3082, %v3084
        %v3086 = vrot.slane %v3072, %v3085
        %v3087 = vcombine.high %v3079, %v3079
        %v3088 = vcombine.high %v3086, %v3086
        %v3089 = vld [vmem:[#allocation3] sm:$0xff]
        %v3090 = vld [vmem:[#allocation3 + $0x8] sm:$0xff]
        %v3091 = vld [vmem:[#allocation3 + $0x10] sm:$0xff]
        %v3092 = vld [vmem:[#allocation3 + $0x18] sm:$0xff]
        %v3093 = vld [vmem:[#allocation3 + $0x20] sm:$0xff]
        %v3094 = vld [vmem:[#allocation3 + $0x28] sm:$0xff]
        %v3095 = vld [vmem:[#allocation3 + $0x30] sm:$0xff]
        %v3096 = vld [vmem:[#allocation3 + $0x38] sm:$0xff]
        %v3097 = vcombine.low %v2938, %v2937
        %v3098 = vcombine.low %v2939, %v2947
        %v3100 = vunpack.c.l.s4 1983009808
        %v3101 = vunpack.c.0.s8 %v3100
        %v3102 = vlaneseq
        %v3103 = vshrl.u32 %v3102, 7
        %v3104 = vsub.s32 %v3101, %v3103
        %v3105 = vrot.slane %v3097, %v3104
        %v3107 = vunpack.c.l.s4 1983009808
        %v3108 = vunpack.c.0.s8 %v3107
        %v3109 = vlaneseq
        %v3110 = vshrl.u32 %v3109, 7
        %v3111 = vsub.s32 %v3108, %v3110
        %v3112 = vrot.slane %v3098, %v3111
        %v3113 = vcombine.low %v3105, %v3112
        %v3114 = vcombine.low %v2954, %v2955
        %v3115 = vcombine.low %v2963, %v2971
        %v3117 = vunpack.c.l.s4 1983009808
        %v3118 = vunpack.c.0.s8 %v3117
        %v3119 = vlaneseq
        %v3120 = vshrl.u32 %v3119, 7
        %v3121 = vsub.s32 %v3118, %v3120
        %v3122 = vrot.slane %v3114, %v3121
        %v3124 = vunpack.c.l.s4 1983009808
        %v3125 = vunpack.c.0.s8 %v3124
        %v3126 = vlaneseq
        %v3127 = vshrl.u32 %v3126, 7
        %v3128 = vsub.s32 %v3125, %v3127
        %v3129 = vrot.slane %v3115, %v3128
        %v3130 = vcombine.low %v3122, %v3129
        %v3131 = vcombine.low %v2972, %v2980
        %v3132 = vcombine.low %v2988, %v2987
        %v3134 = vunpack.c.l.s4 1983009808
        %v3135 = vunpack.c.0.s8 %v3134
        %v3136 = vlaneseq
        %v3137 = vshrl.u32 %v3136, 7
        %v3138 = vsub.s32 %v3135, %v3137
        %v3139 = vrot.slane %v3131, %v3138
        %v3141 = vunpack.c.l.s4 1983009808
        %v3142 = vunpack.c.0.s8 %v3141
        %v3143 = vlaneseq
        %v3144 = vshrl.u32 %v3143, 7
        %v3145 = vsub.s32 %v3142, %v3144
        %v3146 = vrot.slane %v3132, %v3145
        %v3147 = vcombine.low %v3139, %v3146
        %v3148 = vcombine.low %v2996, %v3004
        %v3149 = vcombine.low %v3003, %v3005
        %v3151 = vunpack.c.l.s4 1983009808
        %v3152 = vunpack.c.0.s8 %v3151
        %v3153 = vlaneseq
        %v3154 = vshrl.u32 %v3153, 7
        %v3155 = vsub.s32 %v3152, %v3154
        %v3156 = vrot.slane %v3148, %v3155
        %v3158 = vunpack.c.l.s4 1983009808
        %v3159 = vunpack.c.0.s8 %v3158
        %v3160 = vlaneseq
        %v3161 = vshrl.u32 %v3160, 7
        %v3162 = vsub.s32 %v3159, %v3161
        %v3163 = vrot.slane %v3149, %v3162
        %v3164 = vcombine.low %v3156, %v3163
        %v3165 = vcombine.low %v3021, %v3020
        %v3166 = vcombine.low %v3022, %v3030
        %v3168 = vunpack.c.l.s4 1983009808
        %v3169 = vunpack.c.0.s8 %v3168
        %v3170 = vlaneseq
        %v3171 = vshrl.u32 %v3170, 7
        %v3172 = vsub.s32 %v3169, %v3171
        %v3173 = vrot.slane %v3165, %v3172
        %v3175 = vunpack.c.l.s4 1983009808
        %v3176 = vunpack.c.0.s8 %v3175
        %v3177 = vlaneseq
        %v3178 = vshrl.u32 %v3177, 7
        %v3179 = vsub.s32 %v3176, %v3178
        %v3180 = vrot.slane %v3166, %v3179
        %v3181 = vcombine.low %v3173, %v3180
        %v3182 = vcombine.low %v3037, %v3038
        %v3183 = vcombine.low %v3046, %v3054
        %v3185 = vunpack.c.l.s4 1983009808
        %v3186 = vunpack.c.0.s8 %v3185
        %v3187 = vlaneseq
        %v3188 = vshrl.u32 %v3187, 7
        %v3189 = vsub.s32 %v3186, %v3188
        %v3190 = vrot.slane %v3182, %v3189
        %v3192 = vunpack.c.l.s4 1983009808
        %v3193 = vunpack.c.0.s8 %v3192
        %v3194 = vlaneseq
        %v3195 = vshrl.u32 %v3194, 7
        %v3196 = vsub.s32 %v3193, %v3195
        %v3197 = vrot.slane %v3183, %v3196
        %v3198 = vcombine.low %v3190, %v3197
        %v3199 = vcombine.low %v3055, %v3063
        %v3200 = vcombine.low %v3071, %v3070
        %v3202 = vunpack.c.l.s4 1983009808
        %v3203 = vunpack.c.0.s8 %v3202
        %v3204 = vlaneseq
        %v3205 = vshrl.u32 %v3204, 7
        %v3206 = vsub.s32 %v3203, %v3205
        %v3207 = vrot.slane %v3199, %v3206
        %v3209 = vunpack.c.l.s4 1983009808
        %v3210 = vunpack.c.0.s8 %v3209
        %v3211 = vlaneseq
        %v3212 = vshrl.u32 %v3211, 7
        %v3213 = vsub.s32 %v3210, %v3212
        %v3214 = vrot.slane %v3200, %v3213
        %v3215 = vcombine.low %v3207, %v3214
        %v3216 = vcombine.low %v3079, %v3087
        %v3217 = vcombine.low %v3086, %v3088
        %v3219 = vunpack.c.l.s4 1983009808
        %v3220 = vunpack.c.0.s8 %v3219
        %v3221 = vlaneseq
        %v3222 = vshrl.u32 %v3221, 7
        %v3223 = vsub.s32 %v3220, %v3222
        %v3224 = vrot.slane %v3216, %v3223
        %v3226 = vunpack.c.l.s4 1983009808
        %v3227 = vunpack.c.0.s8 %v3226
        %v3228 = vlaneseq
        %v3229 = vshrl.u32 %v3228, 7
        %v3230 = vsub.s32 %v3227, %v3229
        %v3231 = vrot.slane %v3217, %v3230
        %v3232 = vcombine.low %v3224, %v3231
        %v3241 = vadd.f32 %v3089, %v3113
        %v3242 = vadd.f32 %v3090, %v3130
        %v3243 = vadd.f32 %v3091, %v3147
        %v3244 = vadd.f32 %v3092, %v3164
        %v3245 = vadd.f32 %v3093, %v3181
        %v3246 = vadd.f32 %v3094, %v3198
        %v3247 = vadd.f32 %v3095, %v3215
        %v3248 = vadd.f32 %v3096, %v3232
        %3249 = vst.msk [vmem:[#allocation3] sm:$0xff] %vm1357, %v3241
        %3250 = vst.msk [vmem:[#allocation3 + $0x8] sm:$0xff] %vm1357, %v3242
        %3251 = vst.msk [vmem:[#allocation3 + $0x10] sm:$0xff] %vm1357, %v3243
        %3252 = vst.msk [vmem:[#allocation3 + $0x18] sm:$0xff] %vm1357, %v3244
        %3253 = vst.msk [vmem:[#allocation3 + $0x20] sm:$0xff] %vm1357, %v3245
        %3254 = vst.msk [vmem:[#allocation3 + $0x28] sm:$0xff] %vm1357, %v3246
        %3255 = vst.msk [vmem:[#allocation3 + $0x30] sm:$0xff] %vm1357, %v3247
        %3256 = vst.msk [vmem:[#allocation3 + $0x38] sm:$0xff] %vm1357, %v3248
        %v3257 = vld [vmem:[%s1348] sm:$0xff]
        %v3258 = vld [vmem:[%s1348 + $0x8] sm:$0x3]
        %v3259 = vld [vmem:[%s1348 + $0x10] sm:$0xff]
        %v3260 = vld [vmem:[%s1348 + $0x18] sm:$0x3]
        %v3261 = vld [vmem:[%s1348 + $0x20] sm:$0xff]
        %v3262 = vld [vmem:[%s1348 + $0x28] sm:$0x3]
        %v3263 = vld [vmem:[%s1348 + $0x30] sm:$0xff]
        %v3264 = vld [vmem:[%s1348 + $0x38] sm:$0x3]
        %v3265 = vld [vmem:[%s1348 + $0x40] sm:$0xff]
        %v3266 = vld [vmem:[%s1348 + $0x48] sm:$0x3]
        %v3267 = vld [vmem:[%s1348 + $0x50] sm:$0xff]
        %v3268 = vld [vmem:[%s1348 + $0x58] sm:$0x3]
        %v3269 = vld [vmem:[%s1348 + $0x60] sm:$0xff]
        %v3270 = vld [vmem:[%s1348 + $0x68] sm:$0x3]
        %v3271 = vld [vmem:[%s1348 + $0x70] sm:$0xff]
        %v3272 = vld [vmem:[%s1348 + $0x78] sm:$0x3]
        %v3289 = vcombine.high %v3257, %v3257
        %v3291 = vunpack.c.l.s4 1983009808
        %v3292 = vunpack.c.0.s8 %v3291
        %v3293 = vlaneseq
        %v3294 = vshrl.u32 %v3293, 7
        %v3295 = vsub.s32 %v3292, %v3294
        %v3296 = vrot.slane %v3257, %v3295
        %v3298 = vunpack.c.l.s4 1983009808
        %v3299 = vunpack.c.0.s8 %v3298
        %v3300 = vlaneseq
        %v3301 = vshrl.u32 %v3300, 7
        %v3302 = vsub.s32 %v3299, %v3301
        %v3303 = vrot.slane %v3289, %v3302
        %v3304 = vcombine.high %v3296, %v3296
        %v3305 = vcombine.high %v3303, %v3303
        %v3307 = vunpack.c.l.s4 1983009808
        %v3308 = vunpack.c.0.s8 %v3307
        %v3309 = vlaneseq
        %v3310 = vshrl.u32 %v3309, 7
        %v3311 = vsub.s32 %v3308, %v3310
        %v3312 = vrot.slane %v3258, %v3311
        %v3313 = vcombine.high %v3259, %v3259
        %v3315 = vunpack.c.l.s4 1983009808
        %v3316 = vunpack.c.0.s8 %v3315
        %v3317 = vlaneseq
        %v3318 = vshrl.u32 %v3317, 7
        %v3319 = vsub.s32 %v3316, %v3318
        %v3320 = vrot.slane %v3259, %v3319
        %v3322 = vunpack.c.l.s4 1983009808
        %v3323 = vunpack.c.0.s8 %v3322
        %v3324 = vlaneseq
        %v3325 = vshrl.u32 %v3324, 7
        %v3326 = vsub.s32 %v3323, %v3325
        %v3327 = vrot.slane %v3313, %v3326
        %v3328 = vcombine.high %v3320, %v3320
        %v3329 = vcombine.high %v3327, %v3327
        %v3331 = vunpack.c.l.s4 1983009808
        %v3332 = vunpack.c.0.s8 %v3331
        %v3333 = vlaneseq
        %v3334 = vshrl.u32 %v3333, 7
        %v3335 = vsub.s32 %v3332, %v3334
        %v3336 = vrot.slane %v3260, %v3335
        %v3337 = vcombine.high %v3261, %v3261
        %v3339 = vunpack.c.l.s4 1983009808
        %v3340 = vunpack.c.0.s8 %v3339
        %v3341 = vlaneseq
        %v3342 = vshrl.u32 %v3341, 7
        %v3343 = vsub.s32 %v3340, %v3342
        %v3344 = vrot.slane %v3261, %v3343
        %v3346 = vunpack.c.l.s4 1983009808
        %v3347 = vunpack.c.0.s8 %v3346
        %v3348 = vlaneseq
        %v3349 = vshrl.u32 %v3348, 7
        %v3350 = vsub.s32 %v3347, %v3349
        %v3351 = vrot.slane %v3337, %v3350
        %v3352 = vcombine.high %v3344, %v3344
        %v3353 = vcombine.high %v3351, %v3351
        %v3355 = vunpack.c.l.s4 1983009808
        %v3356 = vunpack.c.0.s8 %v3355
        %v3357 = vlaneseq
        %v3358 = vshrl.u32 %v3357, 7
        %v3359 = vsub.s32 %v3356, %v3358
        %v3360 = vrot.slane %v3262, %v3359
        %v3361 = vcombine.high %v3263, %v3263
        %v3363 = vunpack.c.l.s4 1983009808
        %v3364 = vunpack.c.0.s8 %v3363
        %v3365 = vlaneseq
        %v3366 = vshrl.u32 %v3365, 7
        %v3367 = vsub.s32 %v3364, %v3366
        %v3368 = vrot.slane %v3263, %v3367
        %v3370 = vunpack.c.l.s4 1983009808
        %v3371 = vunpack.c.0.s8 %v3370
        %v3372 = vlaneseq
        %v3373 = vshrl.u32 %v3372, 7
        %v3374 = vsub.s32 %v3371, %v3373
        %v3375 = vrot.slane %v3361, %v3374
        %v3376 = vcombine.high %v3368, %v3368
        %v3377 = vcombine.high %v3375, %v3375
        %v3379 = vunpack.c.l.s4 1983009808
        %v3380 = vunpack.c.0.s8 %v3379
        %v3381 = vlaneseq
        %v3382 = vshrl.u32 %v3381, 7
        %v3383 = vsub.s32 %v3380, %v3382
        %v3384 = vrot.slane %v3264, %v3383
        %v3385 = vcombine.high %v3265, %v3265
        %v3387 = vunpack.c.l.s4 1983009808
        %v3388 = vunpack.c.0.s8 %v3387
        %v3389 = vlaneseq
        %v3390 = vshrl.u32 %v3389, 7
        %v3391 = vsub.s32 %v3388, %v3390
        %v3392 = vrot.slane %v3265, %v3391
        %v3394 = vunpack.c.l.s4 1983009808
        %v3395 = vunpack.c.0.s8 %v3394
        %v3396 = vlaneseq
        %v3397 = vshrl.u32 %v3396, 7
        %v3398 = vsub.s32 %v3395, %v3397
        %v3399 = vrot.slane %v3385, %v3398
        %v3400 = vcombine.high %v3392, %v3392
        %v3401 = vcombine.high %v3399, %v3399
        %v3403 = vunpack.c.l.s4 1983009808
        %v3404 = vunpack.c.0.s8 %v3403
        %v3405 = vlaneseq
        %v3406 = vshrl.u32 %v3405, 7
        %v3407 = vsub.s32 %v3404, %v3406
        %v3408 = vrot.slane %v3266, %v3407
        %v3409 = vcombine.high %v3267, %v3267
        %v3411 = vunpack.c.l.s4 1983009808
        %v3412 = vunpack.c.0.s8 %v3411
        %v3413 = vlaneseq
        %v3414 = vshrl.u32 %v3413, 7
        %v3415 = vsub.s32 %v3412, %v3414
        %v3416 = vrot.slane %v3267, %v3415
        %v3418 = vunpack.c.l.s4 1983009808
        %v3419 = vunpack.c.0.s8 %v3418
        %v3420 = vlaneseq
        %v3421 = vshrl.u32 %v3420, 7
        %v3422 = vsub.s32 %v3419, %v3421
        %v3423 = vrot.slane %v3409, %v3422
        %v3424 = vcombine.high %v3416, %v3416
        %v3425 = vcombine.high %v3423, %v3423
        %v3427 = vunpack.c.l.s4 1983009808
        %v3428 = vunpack.c.0.s8 %v3427
        %v3429 = vlaneseq
        %v3430 = vshrl.u32 %v3429, 7
        %v3431 = vsub.s32 %v3428, %v3430
        %v3432 = vrot.slane %v3268, %v3431
        %v3433 = vcombine.high %v3269, %v3269
        %v3435 = vunpack.c.l.s4 1983009808
        %v3436 = vunpack.c.0.s8 %v3435
        %v3437 = vlaneseq
        %v3438 = vshrl.u32 %v3437, 7
        %v3439 = vsub.s32 %v3436, %v3438
        %v3440 = vrot.slane %v3269, %v3439
        %v3442 = vunpack.c.l.s4 1983009808
        %v3443 = vunpack.c.0.s8 %v3442
        %v3444 = vlaneseq
        %v3445 = vshrl.u32 %v3444, 7
        %v3446 = vsub.s32 %v3443, %v3445
        %v3447 = vrot.slane %v3433, %v3446
        %v3448 = vcombine.high %v3440, %v3440
        %v3449 = vcombine.high %v3447, %v3447
        %v3451 = vunpack.c.l.s4 1983009808
        %v3452 = vunpack.c.0.s8 %v3451
        %v3453 = vlaneseq
        %v3454 = vshrl.u32 %v3453, 7
        %v3455 = vsub.s32 %v3452, %v3454
        %v3456 = vrot.slane %v3270, %v3455
        %v3457 = vcombine.high %v3271, %v3271
        %v3459 = vunpack.c.l.s4 1983009808
        %v3460 = vunpack.c.0.s8 %v3459
        %v3461 = vlaneseq
        %v3462 = vshrl.u32 %v3461, 7
        %v3463 = vsub.s32 %v3460, %v3462
        %v3464 = vrot.slane %v3271, %v3463
        %v3466 = vunpack.c.l.s4 1983009808
        %v3467 = vunpack.c.0.s8 %v3466
        %v3468 = vlaneseq
        %v3469 = vshrl.u32 %v3468, 7
        %v3470 = vsub.s32 %v3467, %v3469
        %v3471 = vrot.slane %v3457, %v3470
        %v3472 = vcombine.high %v3464, %v3464
        %v3473 = vcombine.high %v3471, %v3471
        %v3475 = vunpack.c.l.s4 1983009808
        %v3476 = vunpack.c.0.s8 %v3475
        %v3477 = vlaneseq
        %v3478 = vshrl.u32 %v3477, 7
        %v3479 = vsub.s32 %v3476, %v3478
        %v3480 = vrot.slane %v3272, %v3479
        %s3481 = scalar_lea.vmem %s1, 12
        %v3482 = vld [vmem:[%s3481] sm:$0xf]
        %v3483 = vcombine.low %v3296, %v3304
        %v3484 = vcombine.low %v3303, %v3305
        %v3486 = vunpack.c.l.s4 1983009808
        %v3487 = vunpack.c.0.s8 %v3486
        %v3488 = vlaneseq
        %v3489 = vshrl.u32 %v3488, 7
        %v3490 = vsub.s32 %v3487, %v3489
        %v3491 = vrot.slane %v3483, %v3490
        %v3493 = vunpack.c.l.s4 1983009808
        %v3494 = vunpack.c.0.s8 %v3493
        %v3495 = vlaneseq
        %v3496 = vshrl.u32 %v3495, 7
        %v3497 = vsub.s32 %v3494, %v3496
        %v3498 = vrot.slane %v3484, %v3497
        %v3499 = vcombine.low %v3491, %v3498
        %v3500 = vcombine.low %v3312, %v3320
        %v3501 = vcombine.low %v3328, %v3327
        %v3503 = vunpack.c.l.s4 1983009808
        %v3504 = vunpack.c.0.s8 %v3503
        %v3505 = vlaneseq
        %v3506 = vshrl.u32 %v3505, 7
        %v3507 = vsub.s32 %v3504, %v3506
        %v3508 = vrot.slane %v3500, %v3507
        %v3510 = vunpack.c.l.s4 1983009808
        %v3511 = vunpack.c.0.s8 %v3510
        %v3512 = vlaneseq
        %v3513 = vshrl.u32 %v3512, 7
        %v3514 = vsub.s32 %v3511, %v3513
        %v3515 = vrot.slane %v3501, %v3514
        %v3516 = vcombine.low %v3508, %v3515
        %v3517 = vcombine.low %v3329, %v3336
        %v3518 = vcombine.low %v3344, %v3352
        %v3520 = vunpack.c.l.s4 1983009808
        %v3521 = vunpack.c.0.s8 %v3520
        %v3522 = vlaneseq
        %v3523 = vshrl.u32 %v3522, 7
        %v3524 = vsub.s32 %v3521, %v3523
        %v3525 = vrot.slane %v3517, %v3524
        %v3527 = vunpack.c.l.s4 1983009808
        %v3528 = vunpack.c.0.s8 %v3527
        %v3529 = vlaneseq
        %v3530 = vshrl.u32 %v3529, 7
        %v3531 = vsub.s32 %v3528, %v3530
        %v3532 = vrot.slane %v3518, %v3531
        %v3533 = vcombine.low %v3525, %v3532
        %v3534 = vcombine.low %v3351, %v3353
        %v3535 = vcombine.low %v3360, %v3368
        %v3537 = vunpack.c.l.s4 1983009808
        %v3538 = vunpack.c.0.s8 %v3537
        %v3539 = vlaneseq
        %v3540 = vshrl.u32 %v3539, 7
        %v3541 = vsub.s32 %v3538, %v3540
        %v3542 = vrot.slane %v3534, %v3541
        %v3544 = vunpack.c.l.s4 1983009808
        %v3545 = vunpack.c.0.s8 %v3544
        %v3546 = vlaneseq
        %v3547 = vshrl.u32 %v3546, 7
        %v3548 = vsub.s32 %v3545, %v3547
        %v3549 = vrot.slane %v3535, %v3548
        %v3550 = vcombine.low %v3542, %v3549
        %v3551 = vcombine.low %v3376, %v3375
        %v3552 = vcombine.low %v3377, %v3384
        %v3554 = vunpack.c.l.s4 1983009808
        %v3555 = vunpack.c.0.s8 %v3554
        %v3556 = vlaneseq
        %v3557 = vshrl.u32 %v3556, 7
        %v3558 = vsub.s32 %v3555, %v3557
        %v3559 = vrot.slane %v3551, %v3558
        %v3561 = vunpack.c.l.s4 1983009808
        %v3562 = vunpack.c.0.s8 %v3561
        %v3563 = vlaneseq
        %v3564 = vshrl.u32 %v3563, 7
        %v3565 = vsub.s32 %v3562, %v3564
        %v3566 = vrot.slane %v3552, %v3565
        %v3567 = vcombine.low %v3559, %v3566
        %v3568 = vcombine.low %v3392, %v3400
        %v3569 = vcombine.low %v3399, %v3401
        %v3571 = vunpack.c.l.s4 1983009808
        %v3572 = vunpack.c.0.s8 %v3571
        %v3573 = vlaneseq
        %v3574 = vshrl.u32 %v3573, 7
        %v3575 = vsub.s32 %v3572, %v3574
        %v3576 = vrot.slane %v3568, %v3575
        %v3578 = vunpack.c.l.s4 1983009808
        %v3579 = vunpack.c.0.s8 %v3578
        %v3580 = vlaneseq
        %v3581 = vshrl.u32 %v3580, 7
        %v3582 = vsub.s32 %v3579, %v3581
        %v3583 = vrot.slane %v3569, %v3582
        %v3584 = vcombine.low %v3576, %v3583
        %v3585 = vcombine.low %v3408, %v3416
        %v3586 = vcombine.low %v3424, %v3423
        %v3588 = vunpack.c.l.s4 1983009808
        %v3589 = vunpack.c.0.s8 %v3588
        %v3590 = vlaneseq
        %v3591 = vshrl.u32 %v3590, 7
        %v3592 = vsub.s32 %v3589, %v3591
        %v3593 = vrot.slane %v3585, %v3592
        %v3595 = vunpack.c.l.s4 1983009808
        %v3596 = vunpack.c.0.s8 %v3595
        %v3597 = vlaneseq
        %v3598 = vshrl.u32 %v3597, 7
        %v3599 = vsub.s32 %v3596, %v3598
        %v3600 = vrot.slane %v3586, %v3599
        %v3601 = vcombine.low %v3593, %v3600
        %v3602 = vcombine.low %v3425, %v3432
        %v3603 = vcombine.low %v3440, %v3448
        %v3605 = vunpack.c.l.s4 1983009808
        %v3606 = vunpack.c.0.s8 %v3605
        %v3607 = vlaneseq
        %v3608 = vshrl.u32 %v3607, 7
        %v3609 = vsub.s32 %v3606, %v3608
        %v3610 = vrot.slane %v3602, %v3609
        %v3612 = vunpack.c.l.s4 1983009808
        %v3613 = vunpack.c.0.s8 %v3612
        %v3614 = vlaneseq
        %v3615 = vshrl.u32 %v3614, 7
        %v3616 = vsub.s32 %v3613, %v3615
        %v3617 = vrot.slane %v3603, %v3616
        %v3618 = vcombine.low %v3610, %v3617
        %v3619 = vcombine.low %v3447, %v3449
        %v3620 = vcombine.low %v3456, %v3464
        %v3622 = vunpack.c.l.s4 1983009808
        %v3623 = vunpack.c.0.s8 %v3622
        %v3624 = vlaneseq
        %v3625 = vshrl.u32 %v3624, 7
        %v3626 = vsub.s32 %v3623, %v3625
        %v3627 = vrot.slane %v3619, %v3626
        %v3629 = vunpack.c.l.s4 1983009808
        %v3630 = vunpack.c.0.s8 %v3629
        %v3631 = vlaneseq
        %v3632 = vshrl.u32 %v3631, 7
        %v3633 = vsub.s32 %v3630, %v3632
        %v3634 = vrot.slane %v3620, %v3633
        %v3635 = vcombine.low %v3627, %v3634
        %v3636 = vcombine.low %v3472, %v3471
        %v3637 = vcombine.low %v3473, %v3480
        %v3639 = vunpack.c.l.s4 1983009808
        %v3640 = vunpack.c.0.s8 %v3639
        %v3641 = vlaneseq
        %v3642 = vshrl.u32 %v3641, 7
        %v3643 = vsub.s32 %v3640, %v3642
        %v3644 = vrot.slane %v3636, %v3643
        %v3646 = vunpack.c.l.s4 1983009808
        %v3647 = vunpack.c.0.s8 %v3646
        %v3648 = vlaneseq
        %v3649 = vshrl.u32 %v3648, 7
        %v3650 = vsub.s32 %v3647, %v3649
        %v3651 = vrot.slane %v3637, %v3650
        %v3652 = vcombine.low %v3644, %v3651
        %v3653 = vsel %vm174, %v3499, 0
        %v3655 = vsel %vm174, %v3516, 0
        %v3657 = vsel %vm174, %v3533, 0
        %v3659 = vsel %vm174, %v3550, 0
        %v3661 = vsel %vm174, %v3567, 0
        %v3663 = vsel %vm174, %v3584, 0
        %v3665 = vsel %vm174, %v3601, 0
        %v3667 = vsel %vm174, %v3618, 0
        %v3669 = vsel %vm174, %v3635, 0
        %v3671 = vsel %vm174, %v3652, 0
        %v3674 = vsel %vm1781, %v3482, 0
        %3676 = vmatprep.subr.mxu0 0.0
        %3677 = vmatpush1.msra.mxu0 %v3674
        %3678 = vmatprep.subr.mxu0 0.0
        %3679 = vmatpush1.msra.mxu0 0.0
        %3680 = vmatprep.subr.mxu0 0.0
        %3681 = vmatpush1.msra.mxu0 0.0
        %3682 = vmatprep.subr.mxu0 0.0
        %3683 = vmatpush1.msra.mxu0 0.0
        %3684 = vmatprep.subr.mxu0 0.0
        %3685 = vmatpush1.msra.mxu0 0.0
        %3686 = vmatprep.subr.mxu0 0.0
        %3687 = vmatpush1.msra.mxu0 0.0
        %3688 = vmatprep.subr.mxu0 0.0
        %3689 = vmatpush1.msra.mxu0 0.0
        %3690 = vmatprep.subr.mxu0 0.0
        %3691 = vmatpush1.msra.mxu0 0.0
        %3692 = vmatprep.subr.mxu0 0.0
        %3693 = vmatpush1.msra.mxu0 0.0
        %3694 = vmatprep.subr.mxu0 0.0
        %3695 = vmatpush1.msra.mxu0 0.0
        %3696 = vmatprep.subr.mxu0 0.0
        %3697 = vmatpush1.msra.mxu0 0.0
        %3698 = vmatprep.subr.mxu0 0.0
        %3699 = vmatpush1.msra.mxu0 0.0
        %3700 = vmatprep.subr.mxu0 0.0
        %3701 = vmatpush1.msra.mxu0 0.0
        %3702 = vmatprep.subr.mxu0 0.0
        %3703 = vmatpush1.msra.mxu0 0.0
        %3704 = vmatprep.subr.mxu0 0.0
        %3705 = vmatpush1.msra.mxu0 0.0
        %3706 = vmatprep.subr.mxu0 0.0
        %3707 = vmatpush1.msra.mxu0 0.0
        %3708 = vmatprep.subr.mxu0 0.0
        %3709 = vmatpush1.msra.mxu0 0.0
        %3710 = vmatprep.subr.mxu0 0.0
        %3711 = vmatpush1.msra.mxu0 0.0
        %3712 = vmatprep.subr.mxu0 0.0
        %3713 = vmatpush1.msra.mxu0 0.0
        %3714 = vmatprep.subr.mxu0 0.0
        %3715 = vmatpush1.msra.mxu0 0.0
        %3716 = vmatprep.subr.mxu0 0.0
        %3717 = vmatpush1.msra.mxu0 0.0
        %3718 = vmatprep.subr.mxu0 0.0
        %3719 = vmatpush1.msra.mxu0 0.0
        %3720 = vmatprep.subr.mxu0 0.0
        %3721 = vmatpush1.msra.mxu0 0.0
        %3722 = vmatprep.subr.mxu0 0.0
        %3723 = vmatpush1.msra.mxu0 0.0
        %3724 = vmatprep.subr.mxu0 0.0
        %3725 = vmatpush1.msra.mxu0 0.0
        %3726 = vmatprep.subr.mxu0 0.0
        %3727 = vmatpush1.msra.mxu0 0.0
        %3728 = vmatprep.subr.mxu0 0.0
        %3729 = vmatpush1.msra.mxu0 0.0
        %3730 = vmatprep.subr.mxu0 0.0
        %3731 = vmatpush1.msra.mxu0 0.0
        %3732 = vmatprep.subr.mxu0 0.0
        %3733 = vmatpush1.msra.mxu0 0.0
        %3734 = vmatprep.subr.mxu0 0.0
        %3735 = vmatpush1.msra.mxu0 0.0
        %3736 = vmatprep.subr.mxu0 0.0
        %3737 = vmatpush1.msra.mxu0 0.0
        %3738 = vmatprep.subr.mxu0 0.0
        %3739 = vmatpush1.msra.mxu0 0.0
        %3740 = vmatprep.mubr.f32.mxu0 0.0
        %3741 = vmatmul.mubr.f32.gmra.mrb[0].mxu0 %v3653
        %v3742 = vpop.f32.mrb[0].mxu0
        %v3743 = vadd.f32 0.0, %v3742
        %v3744 = vpop.f32.mrb[0].mxu0
        %3745 = vmatprep.mubr.f32.mxu0 0.0
        %3746 = vmatmul.mubr.f32.gmra.mrb[0].mxu0 %v3655
        %v3747 = vpop.f32.mrb[0].mxu0
        %v3748 = vadd.f32 0.0, %v3747
        %v3749 = vpop.f32.mrb[0].mxu0
        %3750 = vmatprep.mubr.f32.mxu0 0.0
        %3751 = vmatmul.mubr.f32.gmra.mrb[0].mxu0 %v3657
        %v3752 = vpop.f32.mrb[0].mxu0
        %v3753 = vadd.f32 0.0, %v3752
        %v3754 = vpop.f32.mrb[0].mxu0
        %3755 = vmatprep.mubr.f32.mxu0 0.0
        %3756 = vmatmul.mubr.f32.gmra.mrb[0].mxu0 %v3659
        %v3757 = vpop.f32.mrb[0].mxu0
        %v3758 = vadd.f32 0.0, %v3757
        %v3759 = vpop.f32.mrb[0].mxu0
        %3760 = vmatprep.mubr.f32.mxu0 0.0
        %3761 = vmatmul.mubr.f32.gmra.mrb[0].mxu0 %v3661
        %v3762 = vpop.f32.mrb[0].mxu0
        %v3763 = vadd.f32 0.0, %v3762
        %v3764 = vpop.f32.mrb[0].mxu0
        %3765 = vmatprep.mubr.f32.mxu0 0.0
        %3766 = vmatmul.mubr.f32.gmra.mrb[0].mxu0 %v3663
        %v3767 = vpop.f32.mrb[0].mxu0
        %v3768 = vadd.f32 0.0, %v3767
        %v3769 = vpop.f32.mrb[0].mxu0
        %3770 = vmatprep.mubr.f32.mxu0 0.0
        %3771 = vmatmul.mubr.f32.gmra.mrb[0].mxu0 %v3665
        %v3772 = vpop.f32.mrb[0].mxu0
        %v3773 = vadd.f32 0.0, %v3772
        %v3774 = vpop.f32.mrb[0].mxu0
        %3775 = vmatprep.mubr.f32.mxu0 0.0
        %3776 = vmatmul.mubr.f32.gmra.mrb[0].mxu0 %v3667
        %v3777 = vpop.f32.mrb[0].mxu0
        %v3778 = vadd.f32 0.0, %v3777
        %v3779 = vpop.f32.mrb[0].mxu0
        %3780 = vmatprep.mubr.f32.mxu0 0.0
        %3781 = vmatmul.mubr.f32.gmra.mrb[0].mxu0 %v3669
        %v3782 = vpop.f32.mrb[0].mxu0
        %v3783 = vadd.f32 0.0, %v3782
        %v3784 = vpop.f32.mrb[0].mxu0
        %3785 = vmatprep.mubr.f32.mxu0 0.0
        %3786 = vmatmul.mubr.f32.gmra.mrb[0].mxu0 %v3671
        %v3787 = vpop.f32.mrb[0].mxu0
        %v3788 = vadd.f32 0.0, %v3787
        %v3789 = vpop.f32.mrb[0].mxu0
        %3790 = vdwg.mxu0
        %v3801 = vcombine.high %v3743, %v3743
        %v3803 = vunpack.c.l.s4 1983009808
        %v3804 = vunpack.c.0.s8 %v3803
        %v3805 = vlaneseq
        %v3806 = vshrl.u32 %v3805, 7
        %v3807 = vsub.s32 %v3804, %v3806
        %v3808 = vrot.slane %v3743, %v3807
        %v3810 = vunpack.c.l.s4 1983009808
        %v3811 = vunpack.c.0.s8 %v3810
        %v3812 = vlaneseq
        %v3813 = vshrl.u32 %v3812, 7
        %v3814 = vsub.s32 %v3811, %v3813
        %v3815 = vrot.slane %v3801, %v3814
        %v3816 = vcombine.high %v3808, %v3808
        %v3817 = vcombine.high %v3815, %v3815
        %v3818 = vcombine.high %v3748, %v3748
        %v3820 = vunpack.c.l.s4 1983009808
        %v3821 = vunpack.c.0.s8 %v3820
        %v3822 = vlaneseq
        %v3823 = vshrl.u32 %v3822, 7
        %v3824 = vsub.s32 %v3821, %v3823
        %v3825 = vrot.slane %v3748, %v3824
        %v3827 = vunpack.c.l.s4 1983009808
        %v3828 = vunpack.c.0.s8 %v3827
        %v3829 = vlaneseq
        %v3830 = vshrl.u32 %v3829, 7
        %v3831 = vsub.s32 %v3828, %v3830
        %v3832 = vrot.slane %v3818, %v3831
        %v3833 = vcombine.high %v3825, %v3825
        %v3834 = vcombine.high %v3832, %v3832
        %v3835 = vcombine.high %v3753, %v3753
        %v3837 = vunpack.c.l.s4 1983009808
        %v3838 = vunpack.c.0.s8 %v3837
        %v3839 = vlaneseq
        %v3840 = vshrl.u32 %v3839, 7
        %v3841 = vsub.s32 %v3838, %v3840
        %v3842 = vrot.slane %v3753, %v3841
        %v3844 = vunpack.c.l.s4 1983009808
        %v3845 = vunpack.c.0.s8 %v3844
        %v3846 = vlaneseq
        %v3847 = vshrl.u32 %v3846, 7
        %v3848 = vsub.s32 %v3845, %v3847
        %v3849 = vrot.slane %v3835, %v3848
        %v3850 = vcombine.high %v3849, %v3849
        %v3851 = vcombine.high %v3758, %v3758
        %v3853 = vunpack.c.l.s4 1983009808
        %v3854 = vunpack.c.0.s8 %v3853
        %v3855 = vlaneseq
        %v3856 = vshrl.u32 %v3855, 7
        %v3857 = vsub.s32 %v3854, %v3856
        %v3858 = vrot.slane %v3758, %v3857
        %v3860 = vunpack.c.l.s4 1983009808
        %v3861 = vunpack.c.0.s8 %v3860
        %v3862 = vlaneseq
        %v3863 = vshrl.u32 %v3862, 7
        %v3864 = vsub.s32 %v3861, %v3863
        %v3865 = vrot.slane %v3851, %v3864
        %v3866 = vcombine.high %v3858, %v3858
        %v3867 = vcombine.high %v3865, %v3865
        %v3868 = vcombine.high %v3763, %v3763
        %v3870 = vunpack.c.l.s4 1983009808
        %v3871 = vunpack.c.0.s8 %v3870
        %v3872 = vlaneseq
        %v3873 = vshrl.u32 %v3872, 7
        %v3874 = vsub.s32 %v3871, %v3873
        %v3875 = vrot.slane %v3763, %v3874
        %v3877 = vunpack.c.l.s4 1983009808
        %v3878 = vunpack.c.0.s8 %v3877
        %v3879 = vlaneseq
        %v3880 = vshrl.u32 %v3879, 7
        %v3881 = vsub.s32 %v3878, %v3880
        %v3882 = vrot.slane %v3868, %v3881
        %v3883 = vcombine.high %v3875, %v3875
        %v3884 = vcombine.high %v3768, %v3768
        %v3886 = vunpack.c.l.s4 1983009808
        %v3887 = vunpack.c.0.s8 %v3886
        %v3888 = vlaneseq
        %v3889 = vshrl.u32 %v3888, 7
        %v3890 = vsub.s32 %v3887, %v3889
        %v3891 = vrot.slane %v3768, %v3890
        %v3893 = vunpack.c.l.s4 1983009808
        %v3894 = vunpack.c.0.s8 %v3893
        %v3895 = vlaneseq
        %v3896 = vshrl.u32 %v3895, 7
        %v3897 = vsub.s32 %v3894, %v3896
        %v3898 = vrot.slane %v3884, %v3897
        %v3899 = vcombine.high %v3891, %v3891
        %v3900 = vcombine.high %v3898, %v3898
        %v3901 = vcombine.high %v3773, %v3773
        %v3903 = vunpack.c.l.s4 1983009808
        %v3904 = vunpack.c.0.s8 %v3903
        %v3905 = vlaneseq
        %v3906 = vshrl.u32 %v3905, 7
        %v3907 = vsub.s32 %v3904, %v3906
        %v3908 = vrot.slane %v3773, %v3907
        %v3910 = vunpack.c.l.s4 1983009808
        %v3911 = vunpack.c.0.s8 %v3910
        %v3912 = vlaneseq
        %v3913 = vshrl.u32 %v3912, 7
        %v3914 = vsub.s32 %v3911, %v3913
        %v3915 = vrot.slane %v3901, %v3914
        %v3916 = vcombine.high %v3908, %v3908
        %v3917 = vcombine.high %v3915, %v3915
        %v3918 = vcombine.high %v3778, %v3778
        %v3920 = vunpack.c.l.s4 1983009808
        %v3921 = vunpack.c.0.s8 %v3920
        %v3922 = vlaneseq
        %v3923 = vshrl.u32 %v3922, 7
        %v3924 = vsub.s32 %v3921, %v3923
        %v3925 = vrot.slane %v3778, %v3924
        %v3927 = vunpack.c.l.s4 1983009808
        %v3928 = vunpack.c.0.s8 %v3927
        %v3929 = vlaneseq
        %v3930 = vshrl.u32 %v3929, 7
        %v3931 = vsub.s32 %v3928, %v3930
        %v3932 = vrot.slane %v3918, %v3931
        %v3933 = vcombine.high %v3932, %v3932
        %v3934 = vcombine.high %v3783, %v3783
        %v3936 = vunpack.c.l.s4 1983009808
        %v3937 = vunpack.c.0.s8 %v3936
        %v3938 = vlaneseq
        %v3939 = vshrl.u32 %v3938, 7
        %v3940 = vsub.s32 %v3937, %v3939
        %v3941 = vrot.slane %v3783, %v3940
        %v3943 = vunpack.c.l.s4 1983009808
        %v3944 = vunpack.c.0.s8 %v3943
        %v3945 = vlaneseq
        %v3946 = vshrl.u32 %v3945, 7
        %v3947 = vsub.s32 %v3944, %v3946
        %v3948 = vrot.slane %v3934, %v3947
        %v3949 = vcombine.high %v3941, %v3941
        %v3950 = vcombine.high %v3948, %v3948
        %v3951 = vcombine.high %v3788, %v3788
        %v3953 = vunpack.c.l.s4 1983009808
        %v3954 = vunpack.c.0.s8 %v3953
        %v3955 = vlaneseq
        %v3956 = vshrl.u32 %v3955, 7
        %v3957 = vsub.s32 %v3954, %v3956
        %v3958 = vrot.slane %v3788, %v3957
        %v3960 = vunpack.c.l.s4 1983009808
        %v3961 = vunpack.c.0.s8 %v3960
        %v3962 = vlaneseq
        %v3963 = vshrl.u32 %v3962, 7
        %v3964 = vsub.s32 %v3961, %v3963
        %v3965 = vrot.slane %v3951, %v3964
        %v3966 = vcombine.high %v3958, %v3958
        %v3967 = vld [vmem:[#allocation3] sm:$0xff]
        %v3968 = vld [vmem:[#allocation3 + $0x8] sm:$0xff]
        %v3969 = vld [vmem:[#allocation3 + $0x10] sm:$0xff]
        %v3970 = vld [vmem:[#allocation3 + $0x18] sm:$0xff]
        %v3971 = vld [vmem:[#allocation3 + $0x20] sm:$0xff]
        %v3972 = vld [vmem:[#allocation3 + $0x28] sm:$0xff]
        %v3973 = vld [vmem:[#allocation3 + $0x30] sm:$0xff]
        %v3974 = vld [vmem:[#allocation3 + $0x38] sm:$0xff]
        %v3975 = vcombine.low %v3808, %v3816
        %v3976 = vcombine.low %v3815, %v3817
        %v3978 = vunpack.c.l.s4 1983009808
        %v3979 = vunpack.c.0.s8 %v3978
        %v3980 = vlaneseq
        %v3981 = vshrl.u32 %v3980, 7
        %v3982 = vsub.s32 %v3979, %v3981
        %v3983 = vrot.slane %v3975, %v3982
        %v3985 = vunpack.c.l.s4 1983009808
        %v3986 = vunpack.c.0.s8 %v3985
        %v3987 = vlaneseq
        %v3988 = vshrl.u32 %v3987, 7
        %v3989 = vsub.s32 %v3986, %v3988
        %v3990 = vrot.slane %v3976, %v3989
        %v3991 = vcombine.low %v3983, %v3990
        %v3992 = vcombine.low %v3833, %v3832
        %v3993 = vcombine.low %v3834, %v3842
        %v3995 = vunpack.c.l.s4 1983009808
        %v3996 = vunpack.c.0.s8 %v3995
        %v3997 = vlaneseq
        %v3998 = vshrl.u32 %v3997, 7
        %v3999 = vsub.s32 %v3996, %v3998
        %v4000 = vrot.slane %v3992, %v3999
        %v4002 = vunpack.c.l.s4 1983009808
        %v4003 = vunpack.c.0.s8 %v4002
        %v4004 = vlaneseq
        %v4005 = vshrl.u32 %v4004, 7
        %v4006 = vsub.s32 %v4003, %v4005
        %v4007 = vrot.slane %v3993, %v4006
        %v4008 = vcombine.low %v4000, %v4007
        %v4009 = vcombine.low %v3849, %v3850
        %v4010 = vcombine.low %v3858, %v3866
        %v4012 = vunpack.c.l.s4 1983009808
        %v4013 = vunpack.c.0.s8 %v4012
        %v4014 = vlaneseq
        %v4015 = vshrl.u32 %v4014, 7
        %v4016 = vsub.s32 %v4013, %v4015
        %v4017 = vrot.slane %v4009, %v4016
        %v4019 = vunpack.c.l.s4 1983009808
        %v4020 = vunpack.c.0.s8 %v4019
        %v4021 = vlaneseq
        %v4022 = vshrl.u32 %v4021, 7
        %v4023 = vsub.s32 %v4020, %v4022
        %v4024 = vrot.slane %v4010, %v4023
        %v4025 = vcombine.low %v4017, %v4024
        %v4026 = vcombine.low %v3867, %v3875
        %v4027 = vcombine.low %v3883, %v3882
        %v4029 = vunpack.c.l.s4 1983009808
        %v4030 = vunpack.c.0.s8 %v4029
        %v4031 = vlaneseq
        %v4032 = vshrl.u32 %v4031, 7
        %v4033 = vsub.s32 %v4030, %v4032
        %v4034 = vrot.slane %v4026, %v4033
        %v4036 = vunpack.c.l.s4 1983009808
        %v4037 = vunpack.c.0.s8 %v4036
        %v4038 = vlaneseq
        %v4039 = vshrl.u32 %v4038, 7
        %v4040 = vsub.s32 %v4037, %v4039
        %v4041 = vrot.slane %v4027, %v4040
        %v4042 = vcombine.low %v4034, %v4041
        %v4043 = vcombine.low %v3891, %v3899
        %v4044 = vcombine.low %v3898, %v3900
        %v4046 = vunpack.c.l.s4 1983009808
        %v4047 = vunpack.c.0.s8 %v4046
        %v4048 = vlaneseq
        %v4049 = vshrl.u32 %v4048, 7
        %v4050 = vsub.s32 %v4047, %v4049
        %v4051 = vrot.slane %v4043, %v4050
        %v4053 = vunpack.c.l.s4 1983009808
        %v4054 = vunpack.c.0.s8 %v4053
        %v4055 = vlaneseq
        %v4056 = vshrl.u32 %v4055, 7
        %v4057 = vsub.s32 %v4054, %v4056
        %v4058 = vrot.slane %v4044, %v4057
        %v4059 = vcombine.low %v4051, %v4058
        %v4060 = vcombine.low %v3916, %v3915
        %v4061 = vcombine.low %v3917, %v3925
        %v4063 = vunpack.c.l.s4 1983009808
        %v4064 = vunpack.c.0.s8 %v4063
        %v4065 = vlaneseq
        %v4066 = vshrl.u32 %v4065, 7
        %v4067 = vsub.s32 %v4064, %v4066
        %v4068 = vrot.slane %v4060, %v4067
        %v4070 = vunpack.c.l.s4 1983009808
        %v4071 = vunpack.c.0.s8 %v4070
        %v4072 = vlaneseq
        %v4073 = vshrl.u32 %v4072, 7
        %v4074 = vsub.s32 %v4071, %v4073
        %v4075 = vrot.slane %v4061, %v4074
        %v4076 = vcombine.low %v4068, %v4075
        %v4077 = vcombine.low %v3932, %v3933
        %v4078 = vcombine.low %v3941, %v3949
        %v4080 = vunpack.c.l.s4 1983009808
        %v4081 = vunpack.c.0.s8 %v4080
        %v4082 = vlaneseq
        %v4083 = vshrl.u32 %v4082, 7
        %v4084 = vsub.s32 %v4081, %v4083
        %v4085 = vrot.slane %v4077, %v4084
        %v4087 = vunpack.c.l.s4 1983009808
        %v4088 = vunpack.c.0.s8 %v4087
        %v4089 = vlaneseq
        %v4090 = vshrl.u32 %v4089, 7
        %v4091 = vsub.s32 %v4088, %v4090
        %v4092 = vrot.slane %v4078, %v4091
        %v4093 = vcombine.low %v4085, %v4092
        %v4094 = vcombine.low %v3950, %v3958
        %v4095 = vcombine.low %v3966, %v3965
        %v4097 = vunpack.c.l.s4 1983009808
        %v4098 = vunpack.c.0.s8 %v4097
        %v4099 = vlaneseq
        %v4100 = vshrl.u32 %v4099, 7
        %v4101 = vsub.s32 %v4098, %v4100
        %v4102 = vrot.slane %v4094, %v4101
        %v4104 = vunpack.c.l.s4 1983009808
        %v4105 = vunpack.c.0.s8 %v4104
        %v4106 = vlaneseq
        %v4107 = vshrl.u32 %v4106, 7
        %v4108 = vsub.s32 %v4105, %v4107
        %v4109 = vrot.slane %v4095, %v4108
        %v4110 = vcombine.low %v4102, %v4109
        %v4119 = vadd.f32 %v3967, %v3991
        %v4120 = vadd.f32 %v3968, %v4008
        %v4121 = vadd.f32 %v3969, %v4025
        %v4122 = vadd.f32 %v3970, %v4042
        %v4123 = vadd.f32 %v3971, %v4059
        %v4124 = vadd.f32 %v3972, %v4076
        %v4125 = vadd.f32 %v3973, %v4093
        %v4126 = vadd.f32 %v3974, %v4110
        %4127 = vst.msk [vmem:[#allocation3] sm:$0xff] %vm1357, %v4119
        %4128 = vst.msk [vmem:[#allocation3 + $0x8] sm:$0xff] %vm1357, %v4120
        %4129 = vst.msk [vmem:[#allocation3 + $0x10] sm:$0xff] %vm1357, %v4121
        %4130 = vst.msk [vmem:[#allocation3 + $0x18] sm:$0xff] %vm1357, %v4122
        %4131 = vst.msk [vmem:[#allocation3 + $0x20] sm:$0xff] %vm1357, %v4123
        %4132 = vst.msk [vmem:[#allocation3 + $0x28] sm:$0xff] %vm1357, %v4124
        %4133 = vst.msk [vmem:[#allocation3 + $0x30] sm:$0xff] %vm1357, %v4125
        %4134 = vst.msk [vmem:[#allocation3 + $0x38] sm:$0xff] %vm1357, %v4126
        %s4135 = scalar_lea.vmem %s1, 16
        %v4136 = vld [vmem:[%s4135] sm:$0xf]
        %v4138 = vsel %vm1781, %v4136, 0
        %4140 = vmatprep.subr.mxu0 0.0
        %4141 = vmatpush1.msra.mxu0 %v4138
        %4142 = vmatprep.subr.mxu0 0.0
        %4143 = vmatpush1.msra.mxu0 0.0
        %4144 = vmatprep.subr.mxu0 0.0
        %4145 = vmatpush1.msra.mxu0 0.0
        %4146 = vmatprep.subr.mxu0 0.0
        %4147 = vmatpush1.msra.mxu0 0.0
        %4148 = vmatprep.subr.mxu0 0.0
        %4149 = vmatpush1.msra.mxu0 0.0
        %4150 = vmatprep.subr.mxu0 0.0
        %4151 = vmatpush1.msra.mxu0 0.0
        %4152 = vmatprep.subr.mxu0 0.0
        %4153 = vmatpush1.msra.mxu0 0.0
        %4154 = vmatprep.subr.mxu0 0.0
        %4155 = vmatpush1.msra.mxu0 0.0
        %4156 = vmatprep.subr.mxu0 0.0
        %4157 = vmatpush1.msra.mxu0 0.0
        %4158 = vmatprep.subr.mxu0 0.0
        %4159 = vmatpush1.msra.mxu0 0.0
        %4160 = vmatprep.subr.mxu0 0.0
        %4161 = vmatpush1.msra.mxu0 0.0
        %4162 = vmatprep.subr.mxu0 0.0
        %4163 = vmatpush1.msra.mxu0 0.0
        %4164 = vmatprep.subr.mxu0 0.0
        %4165 = vmatpush1.msra.mxu0 0.0
        %4166 = vmatprep.subr.mxu0 0.0
        %4167 = vmatpush1.msra.mxu0 0.0
        %4168 = vmatprep.subr.mxu0 0.0
        %4169 = vmatpush1.msra.mxu0 0.0
        %4170 = vmatprep.subr.mxu0 0.0
        %4171 = vmatpush1.msra.mxu0 0.0
        %4172 = vmatprep.subr.mxu0 0.0
        %4173 = vmatpush1.msra.mxu0 0.0
        %4174 = vmatprep.subr.mxu0 0.0
        %4175 = vmatpush1.msra.mxu0 0.0
        %4176 = vmatprep.subr.mxu0 0.0
        %4177 = vmatpush1.msra.mxu0 0.0
        %4178 = vmatprep.subr.mxu0 0.0
        %4179 = vmatpush1.msra.mxu0 0.0
        %4180 = vmatprep.subr.mxu0 0.0
        %4181 = vmatpush1.msra.mxu0 0.0
        %4182 = vmatprep.subr.mxu0 0.0
        %4183 = vmatpush1.msra.mxu0 0.0
        %4184 = vmatprep.subr.mxu0 0.0
        %4185 = vmatpush1.msra.mxu0 0.0
        %4186 = vmatprep.subr.mxu0 0.0
        %4187 = vmatpush1.msra.mxu0 0.0
        %4188 = vmatprep.subr.mxu0 0.0
        %4189 = vmatpush1.msra.mxu0 0.0
        %4190 = vmatprep.subr.mxu0 0.0
        %4191 = vmatpush1.msra.mxu0 0.0
        %4192 = vmatprep.subr.mxu0 0.0
        %4193 = vmatpush1.msra.mxu0 0.0
        %4194 = vmatprep.subr.mxu0 0.0
        %4195 = vmatpush1.msra.mxu0 0.0
        %4196 = vmatprep.subr.mxu0 0.0
        %4197 = vmatpush1.msra.mxu0 0.0
        %4198 = vmatprep.subr.mxu0 0.0
        %4199 = vmatpush1.msra.mxu0 0.0
        %4200 = vmatprep.subr.mxu0 0.0
        %4201 = vmatpush1.msra.mxu0 0.0
        %4202 = vmatprep.subr.mxu0 0.0
        %4203 = vmatpush1.msra.mxu0 0.0
        %4204 = vmatprep.mubr.f32.mxu0 0.0
        %4205 = vmatmul.mubr.f32.gmra.mrb[0].mxu0 %v3653
        %v4206 = vpop.f32.mrb[0].mxu0
        %v4207 = vadd.f32 0.0, %v4206
        %v4208 = vpop.f32.mrb[0].mxu0
        %4209 = vmatprep.mubr.f32.mxu0 0.0
        %4210 = vmatmul.mubr.f32.gmra.mrb[0].mxu0 %v3655
        %v4211 = vpop.f32.mrb[0].mxu0
        %v4212 = vadd.f32 0.0, %v4211
        %v4213 = vpop.f32.mrb[0].mxu0
        %4214 = vmatprep.mubr.f32.mxu0 0.0
        %4215 = vmatmul.mubr.f32.gmra.mrb[0].mxu0 %v3657
        %v4216 = vpop.f32.mrb[0].mxu0
        %v4217 = vadd.f32 0.0, %v4216
        %v4218 = vpop.f32.mrb[0].mxu0
        %4219 = vmatprep.mubr.f32.mxu0 0.0
        %4220 = vmatmul.mubr.f32.gmra.mrb[0].mxu0 %v3659
        %v4221 = vpop.f32.mrb[0].mxu0
        %v4222 = vadd.f32 0.0, %v4221
        %v4223 = vpop.f32.mrb[0].mxu0
        %4224 = vmatprep.mubr.f32.mxu0 0.0
        %4225 = vmatmul.mubr.f32.gmra.mrb[0].mxu0 %v3661
        %v4226 = vpop.f32.mrb[0].mxu0
        %v4227 = vadd.f32 0.0, %v4226
        %v4228 = vpop.f32.mrb[0].mxu0
        %4229 = vmatprep.mubr.f32.mxu0 0.0
        %4230 = vmatmul.mubr.f32.gmra.mrb[0].mxu0 %v3663
        %v4231 = vpop.f32.mrb[0].mxu0
        %v4232 = vadd.f32 0.0, %v4231
        %v4233 = vpop.f32.mrb[0].mxu0
        %4234 = vmatprep.mubr.f32.mxu0 0.0
        %4235 = vmatmul.mubr.f32.gmra.mrb[0].mxu0 %v3665
        %v4236 = vpop.f32.mrb[0].mxu0
        %v4237 = vadd.f32 0.0, %v4236
        %v4238 = vpop.f32.mrb[0].mxu0
        %4239 = vmatprep.mubr.f32.mxu0 0.0
        %4240 = vmatmul.mubr.f32.gmra.mrb[0].mxu0 %v3667
        %v4241 = vpop.f32.mrb[0].mxu0
        %v4242 = vadd.f32 0.0, %v4241
        %v4243 = vpop.f32.mrb[0].mxu0
        %4244 = vmatprep.mubr.f32.mxu0 0.0
        %4245 = vmatmul.mubr.f32.gmra.mrb[0].mxu0 %v3669
        %v4246 = vpop.f32.mrb[0].mxu0
        %v4247 = vadd.f32 0.0, %v4246
        %v4248 = vpop.f32.mrb[0].mxu0
        %4249 = vmatprep.mubr.f32.mxu0 0.0
        %4250 = vmatmul.mubr.f32.gmra.mrb[0].mxu0 %v3671
        %v4251 = vpop.f32.mrb[0].mxu0
        %v4252 = vadd.f32 0.0, %v4251
        %v4253 = vpop.f32.mrb[0].mxu0
        %4254 = vdwg.mxu0
        %v4265 = vcombine.high %v4207, %v4207
        %v4267 = vunpack.c.l.s4 1983009808
        %v4268 = vunpack.c.0.s8 %v4267
        %v4269 = vlaneseq
        %v4270 = vshrl.u32 %v4269, 7
        %v4271 = vsub.s32 %v4268, %v4270
        %v4272 = vrot.slane %v4207, %v4271
        %v4274 = vunpack.c.l.s4 1983009808
        %v4275 = vunpack.c.0.s8 %v4274
        %v4276 = vlaneseq
        %v4277 = vshrl.u32 %v4276, 7
        %v4278 = vsub.s32 %v4275, %v4277
        %v4279 = vrot.slane %v4265, %v4278
        %v4280 = vcombine.high %v4272, %v4272
        %v4281 = vcombine.high %v4279, %v4279
        %v4282 = vcombine.high %v4212, %v4212
        %v4284 = vunpack.c.l.s4 1983009808
        %v4285 = vunpack.c.0.s8 %v4284
        %v4286 = vlaneseq
        %v4287 = vshrl.u32 %v4286, 7
        %v4288 = vsub.s32 %v4285, %v4287
        %v4289 = vrot.slane %v4212, %v4288
        %v4291 = vunpack.c.l.s4 1983009808
        %v4292 = vunpack.c.0.s8 %v4291
        %v4293 = vlaneseq
        %v4294 = vshrl.u32 %v4293, 7
        %v4295 = vsub.s32 %v4292, %v4294
        %v4296 = vrot.slane %v4282, %v4295
        %v4297 = vcombine.high %v4289, %v4289
        %v4298 = vcombine.high %v4296, %v4296
        %v4299 = vcombine.high %v4217, %v4217
        %v4301 = vunpack.c.l.s4 1983009808
        %v4302 = vunpack.c.0.s8 %v4301
        %v4303 = vlaneseq
        %v4304 = vshrl.u32 %v4303, 7
        %v4305 = vsub.s32 %v4302, %v4304
        %v4306 = vrot.slane %v4217, %v4305
        %v4308 = vunpack.c.l.s4 1983009808
        %v4309 = vunpack.c.0.s8 %v4308
        %v4310 = vlaneseq
        %v4311 = vshrl.u32 %v4310, 7
        %v4312 = vsub.s32 %v4309, %v4311
        %v4313 = vrot.slane %v4299, %v4312
        %v4314 = vcombine.high %v4306, %v4306
        %v4315 = vcombine.high %v4313, %v4313
        %v4316 = vcombine.high %v4222, %v4222
        %v4318 = vunpack.c.l.s4 1983009808
        %v4319 = vunpack.c.0.s8 %v4318
        %v4320 = vlaneseq
        %v4321 = vshrl.u32 %v4320, 7
        %v4322 = vsub.s32 %v4319, %v4321
        %v4323 = vrot.slane %v4222, %v4322
        %v4325 = vunpack.c.l.s4 1983009808
        %v4326 = vunpack.c.0.s8 %v4325
        %v4327 = vlaneseq
        %v4328 = vshrl.u32 %v4327, 7
        %v4329 = vsub.s32 %v4326, %v4328
        %v4330 = vrot.slane %v4316, %v4329
        %v4331 = vcombine.high %v4323, %v4323
        %v4332 = vcombine.high %v4330, %v4330
        %v4333 = vcombine.high %v4227, %v4227
        %v4335 = vunpack.c.l.s4 1983009808
        %v4336 = vunpack.c.0.s8 %v4335
        %v4337 = vlaneseq
        %v4338 = vshrl.u32 %v4337, 7
        %v4339 = vsub.s32 %v4336, %v4338
        %v4340 = vrot.slane %v4227, %v4339
        %v4342 = vunpack.c.l.s4 1983009808
        %v4343 = vunpack.c.0.s8 %v4342
        %v4344 = vlaneseq
        %v4345 = vshrl.u32 %v4344, 7
        %v4346 = vsub.s32 %v4343, %v4345
        %v4347 = vrot.slane %v4333, %v4346
        %v4348 = vcombine.high %v4340, %v4340
        %v4349 = vcombine.high %v4347, %v4347
        %v4350 = vcombine.high %v4232, %v4232
        %v4352 = vunpack.c.l.s4 1983009808
        %v4353 = vunpack.c.0.s8 %v4352
        %v4354 = vlaneseq
        %v4355 = vshrl.u32 %v4354, 7
        %v4356 = vsub.s32 %v4353, %v4355
        %v4357 = vrot.slane %v4232, %v4356
        %v4359 = vunpack.c.l.s4 1983009808
        %v4360 = vunpack.c.0.s8 %v4359
        %v4361 = vlaneseq
        %v4362 = vshrl.u32 %v4361, 7
        %v4363 = vsub.s32 %v4360, %v4362
        %v4364 = vrot.slane %v4350, %v4363
        %v4365 = vcombine.high %v4357, %v4357
        %v4366 = vcombine.high %v4364, %v4364
        %v4367 = vcombine.high %v4237, %v4237
        %v4369 = vunpack.c.l.s4 1983009808
        %v4370 = vunpack.c.0.s8 %v4369
        %v4371 = vlaneseq
        %v4372 = vshrl.u32 %v4371, 7
        %v4373 = vsub.s32 %v4370, %v4372
        %v4374 = vrot.slane %v4237, %v4373
        %v4376 = vunpack.c.l.s4 1983009808
        %v4377 = vunpack.c.0.s8 %v4376
        %v4378 = vlaneseq
        %v4379 = vshrl.u32 %v4378, 7
        %v4380 = vsub.s32 %v4377, %v4379
        %v4381 = vrot.slane %v4367, %v4380
        %v4382 = vcombine.high %v4374, %v4374
        %v4383 = vcombine.high %v4381, %v4381
        %v4384 = vcombine.high %v4242, %v4242
        %v4386 = vunpack.c.l.s4 1983009808
        %v4387 = vunpack.c.0.s8 %v4386
        %v4388 = vlaneseq
        %v4389 = vshrl.u32 %v4388, 7
        %v4390 = vsub.s32 %v4387, %v4389
        %v4391 = vrot.slane %v4242, %v4390
        %v4393 = vunpack.c.l.s4 1983009808
        %v4394 = vunpack.c.0.s8 %v4393
        %v4395 = vlaneseq
        %v4396 = vshrl.u32 %v4395, 7
        %v4397 = vsub.s32 %v4394, %v4396
        %v4398 = vrot.slane %v4384, %v4397
        %v4399 = vcombine.high %v4391, %v4391
        %v4400 = vcombine.high %v4398, %v4398
        %v4401 = vcombine.high %v4247, %v4247
        %v4403 = vunpack.c.l.s4 1983009808
        %v4404 = vunpack.c.0.s8 %v4403
        %v4405 = vlaneseq
        %v4406 = vshrl.u32 %v4405, 7
        %v4407 = vsub.s32 %v4404, %v4406
        %v4408 = vrot.slane %v4247, %v4407
        %v4410 = vunpack.c.l.s4 1983009808
        %v4411 = vunpack.c.0.s8 %v4410
        %v4412 = vlaneseq
        %v4413 = vshrl.u32 %v4412, 7
        %v4414 = vsub.s32 %v4411, %v4413
        %v4415 = vrot.slane %v4401, %v4414
        %v4416 = vcombine.high %v4408, %v4408
        %v4417 = vcombine.high %v4415, %v4415
        %v4418 = vcombine.high %v4252, %v4252
        %v4420 = vunpack.c.l.s4 1983009808
        %v4421 = vunpack.c.0.s8 %v4420
        %v4422 = vlaneseq
        %v4423 = vshrl.u32 %v4422, 7
        %v4424 = vsub.s32 %v4421, %v4423
        %v4425 = vrot.slane %v4252, %v4424
        %v4427 = vunpack.c.l.s4 1983009808
        %v4428 = vunpack.c.0.s8 %v4427
        %v4429 = vlaneseq
        %v4430 = vshrl.u32 %v4429, 7
        %v4431 = vsub.s32 %v4428, %v4430
        %v4432 = vrot.slane %v4418, %v4431
        %v4433 = vcombine.high %v4425, %v4425
        %v4434 = vcombine.high %v4432, %v4432
        %v4435 = vld [vmem:[#allocation3] sm:$0xff]
        %v4436 = vld [vmem:[#allocation3 + $0x8] sm:$0xff]
        %v4437 = vld [vmem:[#allocation3 + $0x10] sm:$0xff]
        %v4438 = vld [vmem:[#allocation3 + $0x18] sm:$0xff]
        %v4439 = vld [vmem:[#allocation3 + $0x20] sm:$0xff]
        %v4440 = vld [vmem:[#allocation3 + $0x28] sm:$0xff]
        %v4441 = vld [vmem:[#allocation3 + $0x30] sm:$0xff]
        %v4442 = vld [vmem:[#allocation3 + $0x38] sm:$0xff]
        %v4443 = vcombine.low %v4272, %v4280
        %v4444 = vcombine.low %v4279, %v4281
        %v4446 = vunpack.c.l.s4 1983009808
        %v4447 = vunpack.c.0.s8 %v4446
        %v4448 = vlaneseq
        %v4449 = vshrl.u32 %v4448, 7
        %v4450 = vsub.s32 %v4447, %v4449
        %v4451 = vrot.slane %v4443, %v4450
        %v4453 = vunpack.c.l.s4 1983009808
        %v4454 = vunpack.c.0.s8 %v4453
        %v4455 = vlaneseq
        %v4456 = vshrl.u32 %v4455, 7
        %v4457 = vsub.s32 %v4454, %v4456
        %v4458 = vrot.slane %v4444, %v4457
        %v4459 = vcombine.low %v4451, %v4458
        %v4461 = vunpack.c.l.s4 1983009808
        %v4462 = vunpack.c.0.s8 %v4461
        %v4463 = vlaneseq
        %v4464 = vshrl.u32 %v4463, 7
        %v4465 = vsub.s32 %v4462, %v4464
        %v4466 = vrot.slane %v4289, %v4465
        %v4467 = vcombine.low %v4297, %v4296
        %v4468 = vcombine.low %v4298, %v4306
        %v4470 = vunpack.c.l.s4 1983009808
        %v4471 = vunpack.c.0.s8 %v4470
        %v4472 = vlaneseq
        %v4473 = vshrl.u32 %v4472, 7
        %v4474 = vsub.s32 %v4471, %v4473
        %v4475 = vrot.slane %v4467, %v4474
        %v4477 = vunpack.c.l.s4 1983009808
        %v4478 = vunpack.c.0.s8 %v4477
        %v4479 = vlaneseq
        %v4480 = vshrl.u32 %v4479, 7
        %v4481 = vsub.s32 %v4478, %v4480
        %v4482 = vrot.slane %v4468, %v4481
        %v4483 = vcombine.low %v4475, %v4482
        %v4485 = vunpack.c.l.s4 1983009808
        %v4486 = vunpack.c.0.s8 %v4485
        %v4487 = vlaneseq
        %v4488 = vshrl.u32 %v4487, 7
        %v4489 = vsub.s32 %v4486, %v4488
        %v4490 = vrot.slane %v4314, %v4489
        %v4491 = vcombine.low %v4313, %v4315
        %v4492 = vcombine.low %v4323, %v4331
        %v4494 = vunpack.c.l.s4 1983009808
        %v4495 = vunpack.c.0.s8 %v4494
        %v4496 = vlaneseq
        %v4497 = vshrl.u32 %v4496, 7
        %v4498 = vsub.s32 %v4495, %v4497
        %v4499 = vrot.slane %v4491, %v4498
        %v4501 = vunpack.c.l.s4 1983009808
        %v4502 = vunpack.c.0.s8 %v4501
        %v4503 = vlaneseq
        %v4504 = vshrl.u32 %v4503, 7
        %v4505 = vsub.s32 %v4502, %v4504
        %v4506 = vrot.slane %v4492, %v4505
        %v4507 = vcombine.low %v4499, %v4506
        %v4509 = vunpack.c.l.s4 1983009808
        %v4510 = vunpack.c.0.s8 %v4509
        %v4511 = vlaneseq
        %v4512 = vshrl.u32 %v4511, 7
        %v4513 = vsub.s32 %v4510, %v4512
        %v4514 = vrot.slane %v4330, %v4513
        %v4515 = vcombine.low %v4332, %v4340
        %v4516 = vcombine.low %v4348, %v4347
        %v4518 = vunpack.c.l.s4 1983009808
        %v4519 = vunpack.c.0.s8 %v4518
        %v4520 = vlaneseq
        %v4521 = vshrl.u32 %v4520, 7
        %v4522 = vsub.s32 %v4519, %v4521
        %v4523 = vrot.slane %v4515, %v4522
        %v4525 = vunpack.c.l.s4 1983009808
        %v4526 = vunpack.c.0.s8 %v4525
        %v4527 = vlaneseq
        %v4528 = vshrl.u32 %v4527, 7
        %v4529 = vsub.s32 %v4526, %v4528
        %v4530 = vrot.slane %v4516, %v4529
        %v4531 = vcombine.low %v4523, %v4530
        %v4533 = vunpack.c.l.s4 1983009808
        %v4534 = vunpack.c.0.s8 %v4533
        %v4535 = vlaneseq
        %v4536 = vshrl.u32 %v4535, 7
        %v4537 = vsub.s32 %v4534, %v4536
        %v4538 = vrot.slane %v4349, %v4537
        %v4539 = vcombine.low %v4357, %v4365
        %v4540 = vcombine.low %v4364, %v4366
        %v4542 = vunpack.c.l.s4 1983009808
        %v4543 = vunpack.c.0.s8 %v4542
        %v4544 = vlaneseq
        %v4545 = vshrl.u32 %v4544, 7
        %v4546 = vsub.s32 %v4543, %v4545
        %v4547 = vrot.slane %v4539, %v4546
        %v4549 = vunpack.c.l.s4 1983009808
        %v4550 = vunpack.c.0.s8 %v4549
        %v4551 = vlaneseq
        %v4552 = vshrl.u32 %v4551, 7
        %v4553 = vsub.s32 %v4550, %v4552
        %v4554 = vrot.slane %v4540, %v4553
        %v4555 = vcombine.low %v4547, %v4554
        %v4557 = vunpack.c.l.s4 1983009808
        %v4558 = vunpack.c.0.s8 %v4557
        %v4559 = vlaneseq
        %v4560 = vshrl.u32 %v4559, 7
        %v4561 = vsub.s32 %v4558, %v4560
        %v4562 = vrot.slane %v4374, %v4561
        %v4563 = vcombine.low %v4382, %v4381
        %v4564 = vcombine.low %v4383, %v4391
        %v4566 = vunpack.c.l.s4 1983009808
        %v4567 = vunpack.c.0.s8 %v4566
        %v4568 = vlaneseq
        %v4569 = vshrl.u32 %v4568, 7
        %v4570 = vsub.s32 %v4567, %v4569
        %v4571 = vrot.slane %v4563, %v4570
        %v4573 = vunpack.c.l.s4 1983009808
        %v4574 = vunpack.c.0.s8 %v4573
        %v4575 = vlaneseq
        %v4576 = vshrl.u32 %v4575, 7
        %v4577 = vsub.s32 %v4574, %v4576
        %v4578 = vrot.slane %v4564, %v4577
        %v4579 = vcombine.low %v4571, %v4578
        %v4581 = vunpack.c.l.s4 1983009808
        %v4582 = vunpack.c.0.s8 %v4581
        %v4583 = vlaneseq
        %v4584 = vshrl.u32 %v4583, 7
        %v4585 = vsub.s32 %v4582, %v4584
        %v4586 = vrot.slane %v4399, %v4585
        %v4587 = vcombine.low %v4398, %v4400
        %v4588 = vcombine.low %v4408, %v4416
        %v4590 = vunpack.c.l.s4 1983009808
        %v4591 = vunpack.c.0.s8 %v4590
        %v4592 = vlaneseq
        %v4593 = vshrl.u32 %v4592, 7
        %v4594 = vsub.s32 %v4591, %v4593
        %v4595 = vrot.slane %v4587, %v4594
        %v4597 = vunpack.c.l.s4 1983009808
        %v4598 = vunpack.c.0.s8 %v4597
        %v4599 = vlaneseq
        %v4600 = vshrl.u32 %v4599, 7
        %v4601 = vsub.s32 %v4598, %v4600
        %v4602 = vrot.slane %v4588, %v4601
        %v4603 = vcombine.low %v4595, %v4602
        %v4605 = vunpack.c.l.s4 1983009808
        %v4606 = vunpack.c.0.s8 %v4605
        %v4607 = vlaneseq
        %v4608 = vshrl.u32 %v4607, 7
        %v4609 = vsub.s32 %v4606, %v4608
        %v4610 = vrot.slane %v4415, %v4609
        %v4611 = vcombine.low %v4417, %v4425
        %v4612 = vcombine.low %v4433, %v4432
        %v4614 = vunpack.c.l.s4 1983009808
        %v4615 = vunpack.c.0.s8 %v4614
        %v4616 = vlaneseq
        %v4617 = vshrl.u32 %v4616, 7
        %v4618 = vsub.s32 %v4615, %v4617
        %v4619 = vrot.slane %v4611, %v4618
        %v4621 = vunpack.c.l.s4 1983009808
        %v4622 = vunpack.c.0.s8 %v4621
        %v4623 = vlaneseq
        %v4624 = vshrl.u32 %v4623, 7
        %v4625 = vsub.s32 %v4622, %v4624
        %v4626 = vrot.slane %v4612, %v4625
        %v4627 = vcombine.low %v4619, %v4626
        %v4629 = vunpack.c.l.s4 1983009808
        %v4630 = vunpack.c.0.s8 %v4629
        %v4631 = vlaneseq
        %v4632 = vshrl.u32 %v4631, 7
        %v4633 = vsub.s32 %v4630, %v4632
        %v4634 = vrot.slane %v4434, %v4633
        %v4635 = vrot.slane %v4459, 1
        %v4636 = vrot.slane %v4466, 1
        %v4637 = vsel %vm2744, %v4635, %v4636
        %v4638 = vrot.slane %v4483, 1
        %v4639 = vrot.slane %v4490, 1
        %v4640 = vsel %vm2744, %v4638, %v4639
        %v4641 = vrot.slane %v4507, 1
        %v4642 = vrot.slane %v4514, 1
        %v4643 = vsel %vm2744, %v4641, %v4642
        %v4644 = vrot.slane %v4531, 1
        %v4645 = vrot.slane %v4538, 1
        %v4646 = vsel %vm2744, %v4644, %v4645
        %v4647 = vrot.slane %v4555, 1
        %v4648 = vrot.slane %v4562, 1
        %v4649 = vsel %vm2744, %v4647, %v4648
        %v4650 = vrot.slane %v4579, 1
        %v4651 = vrot.slane %v4586, 1
        %v4652 = vsel %vm2744, %v4650, %v4651
        %v4653 = vrot.slane %v4603, 1
        %v4654 = vrot.slane %v4610, 1
        %v4655 = vsel %vm2744, %v4653, %v4654
        %v4656 = vrot.slane %v4627, 1
        %v4657 = vrot.slane %v4634, 1
        %v4658 = vsel %vm2744, %v4656, %v4657
        %v4667 = vadd.f32 %v4435, %v4637
        %v4668 = vadd.f32 %v4436, %v4640
        %v4669 = vadd.f32 %v4437, %v4643
        %v4670 = vadd.f32 %v4438, %v4646
        %v4671 = vadd.f32 %v4439, %v4649
        %v4672 = vadd.f32 %v4440, %v4652
        %v4673 = vadd.f32 %v4441, %v4655
        %v4674 = vadd.f32 %v4442, %v4658
        %4675 = vst.msk [vmem:[#allocation3] sm:$0xff] %vm1357, %v4667
        %4676 = vst.msk [vmem:[#allocation3 + $0x8] sm:$0xff] %vm1357, %v4668
        %4677 = vst.msk [vmem:[#allocation3 + $0x10] sm:$0xff] %vm1357, %v4669
        %4678 = vst.msk [vmem:[#allocation3 + $0x18] sm:$0xff] %vm1357, %v4670
        %4679 = vst.msk [vmem:[#allocation3 + $0x20] sm:$0xff] %vm1357, %v4671
        %4680 = vst.msk [vmem:[#allocation3 + $0x28] sm:$0xff] %vm1357, %v4672
        %4681 = vst.msk [vmem:[#allocation3 + $0x30] sm:$0xff] %vm1357, %v4673
        %4682 = vst.msk [vmem:[#allocation3 + $0x38] sm:$0xff] %vm1357, %v4674
        %s4683 = scalar_lea.vmem %s1, 20
        %v4684 = vld [vmem:[%s4683] sm:$0xf]
        %v4686 = vsel %vm1781, %v4684, 0
        %4688 = vmatprep.subr.mxu0 0.0
        %4689 = vmatpush1.msra.mxu0 %v4686
        %4690 = vmatprep.subr.mxu0 0.0
        %4691 = vmatpush1.msra.mxu0 0.0
        %4692 = vmatprep.subr.mxu0 0.0
        %4693 = vmatpush1.msra.mxu0 0.0
        %4694 = vmatprep.subr.mxu0 0.0
        %4695 = vmatpush1.msra.mxu0 0.0
        %4696 = vmatprep.subr.mxu0 0.0
        %4697 = vmatpush1.msra.mxu0 0.0
        %4698 = vmatprep.subr.mxu0 0.0
        %4699 = vmatpush1.msra.mxu0 0.0
        %4700 = vmatprep.subr.mxu0 0.0
        %4701 = vmatpush1.msra.mxu0 0.0
        %4702 = vmatprep.subr.mxu0 0.0
        %4703 = vmatpush1.msra.mxu0 0.0
        %4704 = vmatprep.subr.mxu0 0.0
        %4705 = vmatpush1.msra.mxu0 0.0
        %4706 = vmatprep.subr.mxu0 0.0
        %4707 = vmatpush1.msra.mxu0 0.0
        %4708 = vmatprep.subr.mxu0 0.0
        %4709 = vmatpush1.msra.mxu0 0.0
        %4710 = vmatprep.subr.mxu0 0.0
        %4711 = vmatpush1.msra.mxu0 0.0
        %4712 = vmatprep.subr.mxu0 0.0
        %4713 = vmatpush1.msra.mxu0 0.0
        %4714 = vmatprep.subr.mxu0 0.0
        %4715 = vmatpush1.msra.mxu0 0.0
        %4716 = vmatprep.subr.mxu0 0.0
        %4717 = vmatpush1.msra.mxu0 0.0
        %4718 = vmatprep.subr.mxu0 0.0
        %4719 = vmatpush1.msra.mxu0 0.0
        %4720 = vmatprep.subr.mxu0 0.0
        %4721 = vmatpush1.msra.mxu0 0.0
        %4722 = vmatprep.subr.mxu0 0.0
        %4723 = vmatpush1.msra.mxu0 0.0
        %4724 = vmatprep.subr.mxu0 0.0
        %4725 = vmatpush1.msra.mxu0 0.0
        %4726 = vmatprep.subr.mxu0 0.0
        %4727 = vmatpush1.msra.mxu0 0.0
        %4728 = vmatprep.subr.mxu0 0.0
        %4729 = vmatpush1.msra.mxu0 0.0
        %4730 = vmatprep.subr.mxu0 0.0
        %4731 = vmatpush1.msra.mxu0 0.0
        %4732 = vmatprep.subr.mxu0 0.0
        %4733 = vmatpush1.msra.mxu0 0.0
        %4734 = vmatprep.subr.mxu0 0.0
        %4735 = vmatpush1.msra.mxu0 0.0
        %4736 = vmatprep.subr.mxu0 0.0
        %4737 = vmatpush1.msra.mxu0 0.0
        %4738 = vmatprep.subr.mxu0 0.0
        %4739 = vmatpush1.msra.mxu0 0.0
        %4740 = vmatprep.subr.mxu0 0.0
        %4741 = vmatpush1.msra.mxu0 0.0
        %4742 = vmatprep.subr.mxu0 0.0
        %4743 = vmatpush1.msra.mxu0 0.0
        %4744 = vmatprep.subr.mxu0 0.0
        %4745 = vmatpush1.msra.mxu0 0.0
        %4746 = vmatprep.subr.mxu0 0.0
        %4747 = vmatpush1.msra.mxu0 0.0
        %4748 = vmatprep.subr.mxu0 0.0
        %4749 = vmatpush1.msra.mxu0 0.0
        %4750 = vmatprep.subr.mxu0 0.0
        %4751 = vmatpush1.msra.mxu0 0.0
        %4752 = vmatprep.mubr.f32.mxu0 0.0
        %4753 = vmatmul.mubr.f32.gmra.mrb[0].mxu0 %v3653
        %v4754 = vpop.f32.mrb[0].mxu0
        %v4755 = vadd.f32 0.0, %v4754
        %v4756 = vpop.f32.mrb[0].mxu0
        %4757 = vmatprep.mubr.f32.mxu0 0.0
        %4758 = vmatmul.mubr.f32.gmra.mrb[0].mxu0 %v3655
        %v4759 = vpop.f32.mrb[0].mxu0
        %v4760 = vadd.f32 0.0, %v4759
        %v4761 = vpop.f32.mrb[0].mxu0
        %4762 = vmatprep.mubr.f32.mxu0 0.0
        %4763 = vmatmul.mubr.f32.gmra.mrb[0].mxu0 %v3657
        %v4764 = vpop.f32.mrb[0].mxu0
        %v4765 = vadd.f32 0.0, %v4764
        %v4766 = vpop.f32.mrb[0].mxu0
        %4767 = vmatprep.mubr.f32.mxu0 0.0
        %4768 = vmatmul.mubr.f32.gmra.mrb[0].mxu0 %v3659
        %v4769 = vpop.f32.mrb[0].mxu0
        %v4770 = vadd.f32 0.0, %v4769
        %v4771 = vpop.f32.mrb[0].mxu0
        %4772 = vmatprep.mubr.f32.mxu0 0.0
        %4773 = vmatmul.mubr.f32.gmra.mrb[0].mxu0 %v3661
        %v4774 = vpop.f32.mrb[0].mxu0
        %v4775 = vadd.f32 0.0, %v4774
        %v4776 = vpop.f32.mrb[0].mxu0
        %4777 = vmatprep.mubr.f32.mxu0 0.0
        %4778 = vmatmul.mubr.f32.gmra.mrb[0].mxu0 %v3663
        %v4779 = vpop.f32.mrb[0].mxu0
        %v4780 = vadd.f32 0.0, %v4779
        %v4781 = vpop.f32.mrb[0].mxu0
        %4782 = vmatprep.mubr.f32.mxu0 0.0
        %4783 = vmatmul.mubr.f32.gmra.mrb[0].mxu0 %v3665
        %v4784 = vpop.f32.mrb[0].mxu0
        %v4785 = vadd.f32 0.0, %v4784
        %v4786 = vpop.f32.mrb[0].mxu0
        %4787 = vmatprep.mubr.f32.mxu0 0.0
        %4788 = vmatmul.mubr.f32.gmra.mrb[0].mxu0 %v3667
        %v4789 = vpop.f32.mrb[0].mxu0
        %v4790 = vadd.f32 0.0, %v4789
        %v4791 = vpop.f32.mrb[0].mxu0
        %4792 = vmatprep.mubr.f32.mxu0 0.0
        %4793 = vmatmul.mubr.f32.gmra.mrb[0].mxu0 %v3669
        %v4794 = vpop.f32.mrb[0].mxu0
        %v4795 = vadd.f32 0.0, %v4794
        %v4796 = vpop.f32.mrb[0].mxu0
        %4797 = vmatprep.mubr.f32.mxu0 0.0
        %4798 = vmatmul.mubr.f32.gmra.mrb[0].mxu0 %v3671
        %v4799 = vpop.f32.mrb[0].mxu0
        %v4800 = vadd.f32 0.0, %v4799
        %v4801 = vpop.f32.mrb[0].mxu0
        %4802 = vdwg.mxu0
        %v4813 = vcombine.high %v4755, %v4755
        %v4815 = vunpack.c.l.s4 1983009808
        %v4816 = vunpack.c.0.s8 %v4815
        %v4817 = vlaneseq
        %v4818 = vshrl.u32 %v4817, 7
        %v4819 = vsub.s32 %v4816, %v4818
        %v4820 = vrot.slane %v4755, %v4819
        %v4822 = vunpack.c.l.s4 1983009808
        %v4823 = vunpack.c.0.s8 %v4822
        %v4824 = vlaneseq
        %v4825 = vshrl.u32 %v4824, 7
        %v4826 = vsub.s32 %v4823, %v4825
        %v4827 = vrot.slane %v4813, %v4826
        %v4828 = vcombine.high %v4820, %v4820
        %v4829 = vcombine.high %v4827, %v4827
        %v4830 = vcombine.high %v4760, %v4760
        %v4832 = vunpack.c.l.s4 1983009808
        %v4833 = vunpack.c.0.s8 %v4832
        %v4834 = vlaneseq
        %v4835 = vshrl.u32 %v4834, 7
        %v4836 = vsub.s32 %v4833, %v4835
        %v4837 = vrot.slane %v4760, %v4836
        %v4839 = vunpack.c.l.s4 1983009808
        %v4840 = vunpack.c.0.s8 %v4839
        %v4841 = vlaneseq
        %v4842 = vshrl.u32 %v4841, 7
        %v4843 = vsub.s32 %v4840, %v4842
        %v4844 = vrot.slane %v4830, %v4843
        %v4845 = vcombine.high %v4844, %v4844
        %v4846 = vcombine.high %v4765, %v4765
        %v4848 = vunpack.c.l.s4 1983009808
        %v4849 = vunpack.c.0.s8 %v4848
        %v4850 = vlaneseq
        %v4851 = vshrl.u32 %v4850, 7
        %v4852 = vsub.s32 %v4849, %v4851
        %v4853 = vrot.slane %v4765, %v4852
        %v4855 = vunpack.c.l.s4 1983009808
        %v4856 = vunpack.c.0.s8 %v4855
        %v4857 = vlaneseq
        %v4858 = vshrl.u32 %v4857, 7
        %v4859 = vsub.s32 %v4856, %v4858
        %v4860 = vrot.slane %v4846, %v4859
        %v4861 = vcombine.high %v4853, %v4853
        %v4862 = vcombine.high %v4860, %v4860
        %v4863 = vcombine.high %v4770, %v4770
        %v4865 = vunpack.c.l.s4 1983009808
        %v4866 = vunpack.c.0.s8 %v4865
        %v4867 = vlaneseq
        %v4868 = vshrl.u32 %v4867, 7
        %v4869 = vsub.s32 %v4866, %v4868
        %v4870 = vrot.slane %v4770, %v4869
        %v4872 = vunpack.c.l.s4 1983009808
        %v4873 = vunpack.c.0.s8 %v4872
        %v4874 = vlaneseq
        %v4875 = vshrl.u32 %v4874, 7
        %v4876 = vsub.s32 %v4873, %v4875
        %v4877 = vrot.slane %v4863, %v4876
        %v4878 = vcombine.high %v4870, %v4870
        %v4879 = vcombine.high %v4775, %v4775
        %v4881 = vunpack.c.l.s4 1983009808
        %v4882 = vunpack.c.0.s8 %v4881
        %v4883 = vlaneseq
        %v4884 = vshrl.u32 %v4883, 7
        %v4885 = vsub.s32 %v4882, %v4884
        %v4886 = vrot.slane %v4775, %v4885
        %v4888 = vunpack.c.l.s4 1983009808
        %v4889 = vunpack.c.0.s8 %v4888
        %v4890 = vlaneseq
        %v4891 = vshrl.u32 %v4890, 7
        %v4892 = vsub.s32 %v4889, %v4891
        %v4893 = vrot.slane %v4879, %v4892
        %v4894 = vcombine.high %v4886, %v4886
        %v4895 = vcombine.high %v4893, %v4893
        %v4896 = vcombine.high %v4780, %v4780
        %v4898 = vunpack.c.l.s4 1983009808
        %v4899 = vunpack.c.0.s8 %v4898
        %v4900 = vlaneseq
        %v4901 = vshrl.u32 %v4900, 7
        %v4902 = vsub.s32 %v4899, %v4901
        %v4903 = vrot.slane %v4780, %v4902
        %v4905 = vunpack.c.l.s4 1983009808
        %v4906 = vunpack.c.0.s8 %v4905
        %v4907 = vlaneseq
        %v4908 = vshrl.u32 %v4907, 7
        %v4909 = vsub.s32 %v4906, %v4908
        %v4910 = vrot.slane %v4896, %v4909
        %v4911 = vcombine.high %v4903, %v4903
        %v4912 = vcombine.high %v4910, %v4910
        %v4913 = vcombine.high %v4785, %v4785
        %v4915 = vunpack.c.l.s4 1983009808
        %v4916 = vunpack.c.0.s8 %v4915
        %v4917 = vlaneseq
        %v4918 = vshrl.u32 %v4917, 7
        %v4919 = vsub.s32 %v4916, %v4918
        %v4920 = vrot.slane %v4785, %v4919
        %v4922 = vunpack.c.l.s4 1983009808
        %v4923 = vunpack.c.0.s8 %v4922
        %v4924 = vlaneseq
        %v4925 = vshrl.u32 %v4924, 7
        %v4926 = vsub.s32 %v4923, %v4925
        %v4927 = vrot.slane %v4913, %v4926
        %v4928 = vcombine.high %v4927, %v4927
        %v4929 = vcombine.high %v4790, %v4790
        %v4931 = vunpack.c.l.s4 1983009808
        %v4932 = vunpack.c.0.s8 %v4931
        %v4933 = vlaneseq
        %v4934 = vshrl.u32 %v4933, 7
        %v4935 = vsub.s32 %v4932, %v4934
        %v4936 = vrot.slane %v4790, %v4935
        %v4938 = vunpack.c.l.s4 1983009808
        %v4939 = vunpack.c.0.s8 %v4938
        %v4940 = vlaneseq
        %v4941 = vshrl.u32 %v4940, 7
        %v4942 = vsub.s32 %v4939, %v4941
        %v4943 = vrot.slane %v4929, %v4942
        %v4944 = vcombine.high %v4936, %v4936
        %v4945 = vcombine.high %v4943, %v4943
        %v4946 = vcombine.high %v4795, %v4795
        %v4948 = vunpack.c.l.s4 1983009808
        %v4949 = vunpack.c.0.s8 %v4948
        %v4950 = vlaneseq
        %v4951 = vshrl.u32 %v4950, 7
        %v4952 = vsub.s32 %v4949, %v4951
        %v4953 = vrot.slane %v4795, %v4952
        %v4955 = vunpack.c.l.s4 1983009808
        %v4956 = vunpack.c.0.s8 %v4955
        %v4957 = vlaneseq
        %v4958 = vshrl.u32 %v4957, 7
        %v4959 = vsub.s32 %v4956, %v4958
        %v4960 = vrot.slane %v4946, %v4959
        %v4961 = vcombine.high %v4953, %v4953
        %v4962 = vcombine.high %v4800, %v4800
        %v4964 = vunpack.c.l.s4 1983009808
        %v4965 = vunpack.c.0.s8 %v4964
        %v4966 = vlaneseq
        %v4967 = vshrl.u32 %v4966, 7
        %v4968 = vsub.s32 %v4965, %v4967
        %v4969 = vrot.slane %v4800, %v4968
        %v4971 = vunpack.c.l.s4 1983009808
        %v4972 = vunpack.c.0.s8 %v4971
        %v4973 = vlaneseq
        %v4974 = vshrl.u32 %v4973, 7
        %v4975 = vsub.s32 %v4972, %v4974
        %v4976 = vrot.slane %v4962, %v4975
        %v4977 = vcombine.high %v4969, %v4969
        %v4978 = vcombine.high %v4976, %v4976
        %v4979 = vld [vmem:[#allocation3] sm:$0xff]
        %v4980 = vld [vmem:[#allocation3 + $0x8] sm:$0xff]
        %v4981 = vld [vmem:[#allocation3 + $0x10] sm:$0xff]
        %v4982 = vld [vmem:[#allocation3 + $0x18] sm:$0xff]
        %v4983 = vld [vmem:[#allocation3 + $0x20] sm:$0xff]
        %v4984 = vld [vmem:[#allocation3 + $0x28] sm:$0xff]
        %v4985 = vld [vmem:[#allocation3 + $0x30] sm:$0xff]
        %v4986 = vld [vmem:[#allocation3 + $0x38] sm:$0xff]
        %v4987 = vcombine.low %v4828, %v4827
        %v4988 = vcombine.low %v4829, %v4837
        %v4990 = vunpack.c.l.s4 1983009808
        %v4991 = vunpack.c.0.s8 %v4990
        %v4992 = vlaneseq
        %v4993 = vshrl.u32 %v4992, 7
        %v4994 = vsub.s32 %v4991, %v4993
        %v4995 = vrot.slane %v4987, %v4994
        %v4997 = vunpack.c.l.s4 1983009808
        %v4998 = vunpack.c.0.s8 %v4997
        %v4999 = vlaneseq
        %v5000 = vshrl.u32 %v4999, 7
        %v5001 = vsub.s32 %v4998, %v5000
        %v5002 = vrot.slane %v4988, %v5001
        %v5003 = vcombine.low %v4995, %v5002
        %v5004 = vcombine.low %v4844, %v4845
        %v5005 = vcombine.low %v4853, %v4861
        %v5007 = vunpack.c.l.s4 1983009808
        %v5008 = vunpack.c.0.s8 %v5007
        %v5009 = vlaneseq
        %v5010 = vshrl.u32 %v5009, 7
        %v5011 = vsub.s32 %v5008, %v5010
        %v5012 = vrot.slane %v5004, %v5011
        %v5014 = vunpack.c.l.s4 1983009808
        %v5015 = vunpack.c.0.s8 %v5014
        %v5016 = vlaneseq
        %v5017 = vshrl.u32 %v5016, 7
        %v5018 = vsub.s32 %v5015, %v5017
        %v5019 = vrot.slane %v5005, %v5018
        %v5020 = vcombine.low %v5012, %v5019
        %v5021 = vcombine.low %v4862, %v4870
        %v5022 = vcombine.low %v4878, %v4877
        %v5024 = vunpack.c.l.s4 1983009808
        %v5025 = vunpack.c.0.s8 %v5024
        %v5026 = vlaneseq
        %v5027 = vshrl.u32 %v5026, 7
        %v5028 = vsub.s32 %v5025, %v5027
        %v5029 = vrot.slane %v5021, %v5028
        %v5031 = vunpack.c.l.s4 1983009808
        %v5032 = vunpack.c.0.s8 %v5031
        %v5033 = vlaneseq
        %v5034 = vshrl.u32 %v5033, 7
        %v5035 = vsub.s32 %v5032, %v5034
        %v5036 = vrot.slane %v5022, %v5035
        %v5037 = vcombine.low %v5029, %v5036
        %v5038 = vcombine.low %v4886, %v4894
        %v5039 = vcombine.low %v4893, %v4895
        %v5041 = vunpack.c.l.s4 1983009808
        %v5042 = vunpack.c.0.s8 %v5041
        %v5043 = vlaneseq
        %v5044 = vshrl.u32 %v5043, 7
        %v5045 = vsub.s32 %v5042, %v5044
        %v5046 = vrot.slane %v5038, %v5045
        %v5048 = vunpack.c.l.s4 1983009808
        %v5049 = vunpack.c.0.s8 %v5048
        %v5050 = vlaneseq
        %v5051 = vshrl.u32 %v5050, 7
        %v5052 = vsub.s32 %v5049, %v5051
        %v5053 = vrot.slane %v5039, %v5052
        %v5054 = vcombine.low %v5046, %v5053
        %v5055 = vcombine.low %v4911, %v4910
        %v5056 = vcombine.low %v4912, %v4920
        %v5058 = vunpack.c.l.s4 1983009808
        %v5059 = vunpack.c.0.s8 %v5058
        %v5060 = vlaneseq
        %v5061 = vshrl.u32 %v5060, 7
        %v5062 = vsub.s32 %v5059, %v5061
        %v5063 = vrot.slane %v5055, %v5062
        %v5065 = vunpack.c.l.s4 1983009808
        %v5066 = vunpack.c.0.s8 %v5065
        %v5067 = vlaneseq
        %v5068 = vshrl.u32 %v5067, 7
        %v5069 = vsub.s32 %v5066, %v5068
        %v5070 = vrot.slane %v5056, %v5069
        %v5071 = vcombine.low %v5063, %v5070
        %v5072 = vcombine.low %v4927, %v4928
        %v5073 = vcombine.low %v4936, %v4944
        %v5075 = vunpack.c.l.s4 1983009808
        %v5076 = vunpack.c.0.s8 %v5075
        %v5077 = vlaneseq
        %v5078 = vshrl.u32 %v5077, 7
        %v5079 = vsub.s32 %v5076, %v5078
        %v5080 = vrot.slane %v5072, %v5079
        %v5082 = vunpack.c.l.s4 1983009808
        %v5083 = vunpack.c.0.s8 %v5082
        %v5084 = vlaneseq
        %v5085 = vshrl.u32 %v5084, 7
        %v5086 = vsub.s32 %v5083, %v5085
        %v5087 = vrot.slane %v5073, %v5086
        %v5088 = vcombine.low %v5080, %v5087
        %v5089 = vcombine.low %v4945, %v4953
        %v5090 = vcombine.low %v4961, %v4960
        %v5092 = vunpack.c.l.s4 1983009808
        %v5093 = vunpack.c.0.s8 %v5092
        %v5094 = vlaneseq
        %v5095 = vshrl.u32 %v5094, 7
        %v5096 = vsub.s32 %v5093, %v5095
        %v5097 = vrot.slane %v5089, %v5096
        %v5099 = vunpack.c.l.s4 1983009808
        %v5100 = vunpack.c.0.s8 %v5099
        %v5101 = vlaneseq
        %v5102 = vshrl.u32 %v5101, 7
        %v5103 = vsub.s32 %v5100, %v5102
        %v5104 = vrot.slane %v5090, %v5103
        %v5105 = vcombine.low %v5097, %v5104
        %v5106 = vcombine.low %v4969, %v4977
        %v5107 = vcombine.low %v4976, %v4978
        %v5109 = vunpack.c.l.s4 1983009808
        %v5110 = vunpack.c.0.s8 %v5109
        %v5111 = vlaneseq
        %v5112 = vshrl.u32 %v5111, 7
        %v5113 = vsub.s32 %v5110, %v5112
        %v5114 = vrot.slane %v5106, %v5113
        %v5116 = vunpack.c.l.s4 1983009808
        %v5117 = vunpack.c.0.s8 %v5116
        %v5118 = vlaneseq
        %v5119 = vshrl.u32 %v5118, 7
        %v5120 = vsub.s32 %v5117, %v5119
        %v5121 = vrot.slane %v5107, %v5120
        %v5122 = vcombine.low %v5114, %v5121
        %v5131 = vadd.f32 %v4979, %v5003
        %v5132 = vadd.f32 %v4980, %v5020
        %v5133 = vadd.f32 %v4981, %v5037
        %v5134 = vadd.f32 %v4982, %v5054
        %v5135 = vadd.f32 %v4983, %v5071
        %v5136 = vadd.f32 %v4984, %v5088
        %v5137 = vadd.f32 %v4985, %v5105
        %v5138 = vadd.f32 %v4986, %v5122
        %5139 = vst.msk [vmem:[#allocation3] sm:$0xff] %vm1357, %v5131
        %5140 = vst.msk [vmem:[#allocation3 + $0x8] sm:$0xff] %vm1357, %v5132
        %5141 = vst.msk [vmem:[#allocation3 + $0x10] sm:$0xff] %vm1357, %v5133
        %5142 = vst.msk [vmem:[#allocation3 + $0x18] sm:$0xff] %vm1357, %v5134
        %5143 = vst.msk [vmem:[#allocation3 + $0x20] sm:$0xff] %vm1357, %v5135
        %5144 = vst.msk [vmem:[#allocation3 + $0x28] sm:$0xff] %vm1357, %v5136
        %5145 = vst.msk [vmem:[#allocation3 + $0x30] sm:$0xff] %vm1357, %v5137
        %5146 = vst.msk [vmem:[#allocation3 + $0x38] sm:$0xff] %vm1357, %v5138
        %s5147 = scalar_lea.vmem [#allocation2], 32
        %v5148 = vld [vmem:[%s5147] sm:$0xff]
        %v5149 = vld [vmem:[%s5147 + $0x8] sm:$0x3]
        %v5150 = vld [vmem:[%s5147 + $0x10] sm:$0xff]
        %v5151 = vld [vmem:[%s5147 + $0x18] sm:$0x3]
        %v5152 = vld [vmem:[%s5147 + $0x20] sm:$0xff]
        %v5153 = vld [vmem:[%s5147 + $0x28] sm:$0x3]
        %v5154 = vld [vmem:[%s5147 + $0x30] sm:$0xff]
        %v5155 = vld [vmem:[%s5147 + $0x38] sm:$0x3]
        %v5156 = vld [vmem:[%s5147 + $0x40] sm:$0xff]
        %v5157 = vld [vmem:[%s5147 + $0x48] sm:$0x3]
        %v5158 = vld [vmem:[%s5147 + $0x50] sm:$0xff]
        %v5159 = vld [vmem:[%s5147 + $0x58] sm:$0x3]
        %v5160 = vld [vmem:[%s5147 + $0x60] sm:$0xff]
        %v5161 = vld [vmem:[%s5147 + $0x68] sm:$0x3]
        %v5162 = vld [vmem:[%s5147 + $0x70] sm:$0xff]
        %v5163 = vld [vmem:[%s5147 + $0x78] sm:$0x3]
        %v5180 = vcombine.high %v5148, %v5148
        %v5182 = vunpack.c.l.s4 1983009808
        %v5183 = vunpack.c.0.s8 %v5182
        %v5184 = vlaneseq
        %v5185 = vshrl.u32 %v5184, 7
        %v5186 = vsub.s32 %v5183, %v5185
        %v5187 = vrot.slane %v5148, %v5186
        %v5189 = vunpack.c.l.s4 1983009808
        %v5190 = vunpack.c.0.s8 %v5189
        %v5191 = vlaneseq
        %v5192 = vshrl.u32 %v5191, 7
        %v5193 = vsub.s32 %v5190, %v5192
        %v5194 = vrot.slane %v5180, %v5193
        %v5195 = vcombine.high %v5187, %v5187
        %v5196 = vcombine.high %v5194, %v5194
        %v5198 = vunpack.c.l.s4 1983009808
        %v5199 = vunpack.c.0.s8 %v5198
        %v5200 = vlaneseq
        %v5201 = vshrl.u32 %v5200, 7
        %v5202 = vsub.s32 %v5199, %v5201
        %v5203 = vrot.slane %v5149, %v5202
        %v5204 = vcombine.high %v5150, %v5150
        %v5206 = vunpack.c.l.s4 1983009808
        %v5207 = vunpack.c.0.s8 %v5206
        %v5208 = vlaneseq
        %v5209 = vshrl.u32 %v5208, 7
        %v5210 = vsub.s32 %v5207, %v5209
        %v5211 = vrot.slane %v5150, %v5210
        %v5213 = vunpack.c.l.s4 1983009808
        %v5214 = vunpack.c.0.s8 %v5213
        %v5215 = vlaneseq
        %v5216 = vshrl.u32 %v5215, 7
        %v5217 = vsub.s32 %v5214, %v5216
        %v5218 = vrot.slane %v5204, %v5217
        %v5219 = vcombine.high %v5211, %v5211
        %v5220 = vcombine.high %v5218, %v5218
        %v5222 = vunpack.c.l.s4 1983009808
        %v5223 = vunpack.c.0.s8 %v5222
        %v5224 = vlaneseq
        %v5225 = vshrl.u32 %v5224, 7
        %v5226 = vsub.s32 %v5223, %v5225
        %v5227 = vrot.slane %v5151, %v5226
        %v5228 = vcombine.high %v5152, %v5152
        %v5230 = vunpack.c.l.s4 1983009808
        %v5231 = vunpack.c.0.s8 %v5230
        %v5232 = vlaneseq
        %v5233 = vshrl.u32 %v5232, 7
        %v5234 = vsub.s32 %v5231, %v5233
        %v5235 = vrot.slane %v5152, %v5234
        %v5237 = vunpack.c.l.s4 1983009808
        %v5238 = vunpack.c.0.s8 %v5237
        %v5239 = vlaneseq
        %v5240 = vshrl.u32 %v5239, 7
        %v5241 = vsub.s32 %v5238, %v5240
        %v5242 = vrot.slane %v5228, %v5241
        %v5243 = vcombine.high %v5235, %v5235
        %v5244 = vcombine.high %v5242, %v5242
        %v5246 = vunpack.c.l.s4 1983009808
        %v5247 = vunpack.c.0.s8 %v5246
        %v5248 = vlaneseq
        %v5249 = vshrl.u32 %v5248, 7
        %v5250 = vsub.s32 %v5247, %v5249
        %v5251 = vrot.slane %v5153, %v5250
        %v5252 = vcombine.high %v5154, %v5154
        %v5254 = vunpack.c.l.s4 1983009808
        %v5255 = vunpack.c.0.s8 %v5254
        %v5256 = vlaneseq
        %v5257 = vshrl.u32 %v5256, 7
        %v5258 = vsub.s32 %v5255, %v5257
        %v5259 = vrot.slane %v5154, %v5258
        %v5261 = vunpack.c.l.s4 1983009808
        %v5262 = vunpack.c.0.s8 %v5261
        %v5263 = vlaneseq
        %v5264 = vshrl.u32 %v5263, 7
        %v5265 = vsub.s32 %v5262, %v5264
        %v5266 = vrot.slane %v5252, %v5265
        %v5267 = vcombine.high %v5259, %v5259
        %v5268 = vcombine.high %v5266, %v5266
        %v5270 = vunpack.c.l.s4 1983009808
        %v5271 = vunpack.c.0.s8 %v5270
        %v5272 = vlaneseq
        %v5273 = vshrl.u32 %v5272, 7
        %v5274 = vsub.s32 %v5271, %v5273
        %v5275 = vrot.slane %v5155, %v5274
        %v5276 = vcombine.high %v5156, %v5156
        %v5278 = vunpack.c.l.s4 1983009808
        %v5279 = vunpack.c.0.s8 %v5278
        %v5280 = vlaneseq
        %v5281 = vshrl.u32 %v5280, 7
        %v5282 = vsub.s32 %v5279, %v5281
        %v5283 = vrot.slane %v5156, %v5282
        %v5285 = vunpack.c.l.s4 1983009808
        %v5286 = vunpack.c.0.s8 %v5285
        %v5287 = vlaneseq
        %v5288 = vshrl.u32 %v5287, 7
        %v5289 = vsub.s32 %v5286, %v5288
        %v5290 = vrot.slane %v5276, %v5289
        %v5291 = vcombine.high %v5283, %v5283
        %v5292 = vcombine.high %v5290, %v5290
        %v5294 = vunpack.c.l.s4 1983009808
        %v5295 = vunpack.c.0.s8 %v5294
        %v5296 = vlaneseq
        %v5297 = vshrl.u32 %v5296, 7
        %v5298 = vsub.s32 %v5295, %v5297
        %v5299 = vrot.slane %v5157, %v5298
        %v5300 = vcombine.high %v5158, %v5158
        %v5302 = vunpack.c.l.s4 1983009808
        %v5303 = vunpack.c.0.s8 %v5302
        %v5304 = vlaneseq
        %v5305 = vshrl.u32 %v5304, 7
        %v5306 = vsub.s32 %v5303, %v5305
        %v5307 = vrot.slane %v5158, %v5306
        %v5309 = vunpack.c.l.s4 1983009808
        %v5310 = vunpack.c.0.s8 %v5309
        %v5311 = vlaneseq
        %v5312 = vshrl.u32 %v5311, 7
        %v5313 = vsub.s32 %v5310, %v5312
        %v5314 = vrot.slane %v5300, %v5313
        %v5315 = vcombine.high %v5307, %v5307
        %v5316 = vcombine.high %v5314, %v5314
        %v5318 = vunpack.c.l.s4 1983009808
        %v5319 = vunpack.c.0.s8 %v5318
        %v5320 = vlaneseq
        %v5321 = vshrl.u32 %v5320, 7
        %v5322 = vsub.s32 %v5319, %v5321
        %v5323 = vrot.slane %v5159, %v5322
        %v5324 = vcombine.high %v5160, %v5160
        %v5326 = vunpack.c.l.s4 1983009808
        %v5327 = vunpack.c.0.s8 %v5326
        %v5328 = vlaneseq
        %v5329 = vshrl.u32 %v5328, 7
        %v5330 = vsub.s32 %v5327, %v5329
        %v5331 = vrot.slane %v5160, %v5330
        %v5333 = vunpack.c.l.s4 1983009808
        %v5334 = vunpack.c.0.s8 %v5333
        %v5335 = vlaneseq
        %v5336 = vshrl.u32 %v5335, 7
        %v5337 = vsub.s32 %v5334, %v5336
        %v5338 = vrot.slane %v5324, %v5337
        %v5339 = vcombine.high %v5331, %v5331
        %v5340 = vcombine.high %v5338, %v5338
        %v5342 = vunpack.c.l.s4 1983009808
        %v5343 = vunpack.c.0.s8 %v5342
        %v5344 = vlaneseq
        %v5345 = vshrl.u32 %v5344, 7
        %v5346 = vsub.s32 %v5343, %v5345
        %v5347 = vrot.slane %v5161, %v5346
        %v5348 = vcombine.high %v5162, %v5162
        %v5350 = vunpack.c.l.s4 1983009808
        %v5351 = vunpack.c.0.s8 %v5350
        %v5352 = vlaneseq
        %v5353 = vshrl.u32 %v5352, 7
        %v5354 = vsub.s32 %v5351, %v5353
        %v5355 = vrot.slane %v5162, %v5354
        %v5357 = vunpack.c.l.s4 1983009808
        %v5358 = vunpack.c.0.s8 %v5357
        %v5359 = vlaneseq
        %v5360 = vshrl.u32 %v5359, 7
        %v5361 = vsub.s32 %v5358, %v5360
        %v5362 = vrot.slane %v5348, %v5361
        %v5363 = vcombine.high %v5355, %v5355
        %v5364 = vcombine.high %v5362, %v5362
        %v5366 = vunpack.c.l.s4 1983009808
        %v5367 = vunpack.c.0.s8 %v5366
        %v5368 = vlaneseq
        %v5369 = vshrl.u32 %v5368, 7
        %v5370 = vsub.s32 %v5367, %v5369
        %v5371 = vrot.slane %v5163, %v5370
        %s5372 = scalar_lea.vmem %s1, 24
        %v5373 = vld [vmem:[%s5372] sm:$0xf]
        %v5374 = vcombine.low %v5187, %v5195
        %v5375 = vcombine.low %v5194, %v5196
        %v5377 = vunpack.c.l.s4 1983009808
        %v5378 = vunpack.c.0.s8 %v5377
        %v5379 = vlaneseq
        %v5380 = vshrl.u32 %v5379, 7
        %v5381 = vsub.s32 %v5378, %v5380
        %v5382 = vrot.slane %v5374, %v5381
        %v5384 = vunpack.c.l.s4 1983009808
        %v5385 = vunpack.c.0.s8 %v5384
        %v5386 = vlaneseq
        %v5387 = vshrl.u32 %v5386, 7
        %v5388 = vsub.s32 %v5385, %v5387
        %v5389 = vrot.slane %v5375, %v5388
        %v5390 = vcombine.low %v5382, %v5389
        %v5391 = vcombine.low %v5203, %v5211
        %v5392 = vcombine.low %v5219, %v5218
        %v5394 = vunpack.c.l.s4 1983009808
        %v5395 = vunpack.c.0.s8 %v5394
        %v5396 = vlaneseq
        %v5397 = vshrl.u32 %v5396, 7
        %v5398 = vsub.s32 %v5395, %v5397
        %v5399 = vrot.slane %v5391, %v5398
        %v5401 = vunpack.c.l.s4 1983009808
        %v5402 = vunpack.c.0.s8 %v5401
        %v5403 = vlaneseq
        %v5404 = vshrl.u32 %v5403, 7
        %v5405 = vsub.s32 %v5402, %v5404
        %v5406 = vrot.slane %v5392, %v5405
        %v5407 = vcombine.low %v5399, %v5406
        %v5408 = vcombine.low %v5220, %v5227
        %v5409 = vcombine.low %v5235, %v5243
        %v5411 = vunpack.c.l.s4 1983009808
        %v5412 = vunpack.c.0.s8 %v5411
        %v5413 = vlaneseq
        %v5414 = vshrl.u32 %v5413, 7
        %v5415 = vsub.s32 %v5412, %v5414
        %v5416 = vrot.slane %v5408, %v5415
        %v5418 = vunpack.c.l.s4 1983009808
        %v5419 = vunpack.c.0.s8 %v5418
        %v5420 = vlaneseq
        %v5421 = vshrl.u32 %v5420, 7
        %v5422 = vsub.s32 %v5419, %v5421
        %v5423 = vrot.slane %v5409, %v5422
        %v5424 = vcombine.low %v5416, %v5423
        %v5425 = vcombine.low %v5242, %v5244
        %v5426 = vcombine.low %v5251, %v5259
        %v5428 = vunpack.c.l.s4 1983009808
        %v5429 = vunpack.c.0.s8 %v5428
        %v5430 = vlaneseq
        %v5431 = vshrl.u32 %v5430, 7
        %v5432 = vsub.s32 %v5429, %v5431
        %v5433 = vrot.slane %v5425, %v5432
        %v5435 = vunpack.c.l.s4 1983009808
        %v5436 = vunpack.c.0.s8 %v5435
        %v5437 = vlaneseq
        %v5438 = vshrl.u32 %v5437, 7
        %v5439 = vsub.s32 %v5436, %v5438
        %v5440 = vrot.slane %v5426, %v5439
        %v5441 = vcombine.low %v5433, %v5440
        %v5442 = vcombine.low %v5267, %v5266
        %v5443 = vcombine.low %v5268, %v5275
        %v5445 = vunpack.c.l.s4 1983009808
        %v5446 = vunpack.c.0.s8 %v5445
        %v5447 = vlaneseq
        %v5448 = vshrl.u32 %v5447, 7
        %v5449 = vsub.s32 %v5446, %v5448
        %v5450 = vrot.slane %v5442, %v5449
        %v5452 = vunpack.c.l.s4 1983009808
        %v5453 = vunpack.c.0.s8 %v5452
        %v5454 = vlaneseq
        %v5455 = vshrl.u32 %v5454, 7
        %v5456 = vsub.s32 %v5453, %v5455
        %v5457 = vrot.slane %v5443, %v5456
        %v5458 = vcombine.low %v5450, %v5457
        %v5459 = vcombine.low %v5283, %v5291
        %v5460 = vcombine.low %v5290, %v5292
        %v5462 = vunpack.c.l.s4 1983009808
        %v5463 = vunpack.c.0.s8 %v5462
        %v5464 = vlaneseq
        %v5465 = vshrl.u32 %v5464, 7
        %v5466 = vsub.s32 %v5463, %v5465
        %v5467 = vrot.slane %v5459, %v5466
        %v5469 = vunpack.c.l.s4 1983009808
        %v5470 = vunpack.c.0.s8 %v5469
        %v5471 = vlaneseq
        %v5472 = vshrl.u32 %v5471, 7
        %v5473 = vsub.s32 %v5470, %v5472
        %v5474 = vrot.slane %v5460, %v5473
        %v5475 = vcombine.low %v5467, %v5474
        %v5476 = vcombine.low %v5299, %v5307
        %v5477 = vcombine.low %v5315, %v5314
        %v5479 = vunpack.c.l.s4 1983009808
        %v5480 = vunpack.c.0.s8 %v5479
        %v5481 = vlaneseq
        %v5482 = vshrl.u32 %v5481, 7
        %v5483 = vsub.s32 %v5480, %v5482
        %v5484 = vrot.slane %v5476, %v5483
        %v5486 = vunpack.c.l.s4 1983009808
        %v5487 = vunpack.c.0.s8 %v5486
        %v5488 = vlaneseq
        %v5489 = vshrl.u32 %v5488, 7
        %v5490 = vsub.s32 %v5487, %v5489
        %v5491 = vrot.slane %v5477, %v5490
        %v5492 = vcombine.low %v5484, %v5491
        %v5493 = vcombine.low %v5316, %v5323
        %v5494 = vcombine.low %v5331, %v5339
        %v5496 = vunpack.c.l.s4 1983009808
        %v5497 = vunpack.c.0.s8 %v5496
        %v5498 = vlaneseq
        %v5499 = vshrl.u32 %v5498, 7
        %v5500 = vsub.s32 %v5497, %v5499
        %v5501 = vrot.slane %v5493, %v5500
        %v5503 = vunpack.c.l.s4 1983009808
        %v5504 = vunpack.c.0.s8 %v5503
        %v5505 = vlaneseq
        %v5506 = vshrl.u32 %v5505, 7
        %v5507 = vsub.s32 %v5504, %v5506
        %v5508 = vrot.slane %v5494, %v5507
        %v5509 = vcombine.low %v5501, %v5508
        %v5510 = vcombine.low %v5338, %v5340
        %v5511 = vcombine.low %v5347, %v5355
        %v5513 = vunpack.c.l.s4 1983009808
        %v5514 = vunpack.c.0.s8 %v5513
        %v5515 = vlaneseq
        %v5516 = vshrl.u32 %v5515, 7
        %v5517 = vsub.s32 %v5514, %v5516
        %v5518 = vrot.slane %v5510, %v5517
        %v5520 = vunpack.c.l.s4 1983009808
        %v5521 = vunpack.c.0.s8 %v5520
        %v5522 = vlaneseq
        %v5523 = vshrl.u32 %v5522, 7
        %v5524 = vsub.s32 %v5521, %v5523
        %v5525 = vrot.slane %v5511, %v5524
        %v5526 = vcombine.low %v5518, %v5525
        %v5527 = vcombine.low %v5363, %v5362
        %v5528 = vcombine.low %v5364, %v5371
        %v5530 = vunpack.c.l.s4 1983009808
        %v5531 = vunpack.c.0.s8 %v5530
        %v5532 = vlaneseq
        %v5533 = vshrl.u32 %v5532, 7
        %v5534 = vsub.s32 %v5531, %v5533
        %v5535 = vrot.slane %v5527, %v5534
        %v5537 = vunpack.c.l.s4 1983009808
        %v5538 = vunpack.c.0.s8 %v5537
        %v5539 = vlaneseq
        %v5540 = vshrl.u32 %v5539, 7
        %v5541 = vsub.s32 %v5538, %v5540
        %v5542 = vrot.slane %v5528, %v5541
        %v5543 = vcombine.low %v5535, %v5542
        %v5544 = vsel %vm174, %v5390, 0
        %v5546 = vsel %vm174, %v5407, 0
        %v5548 = vsel %vm174, %v5424, 0
        %v5550 = vsel %vm174, %v5441, 0
        %v5552 = vsel %vm174, %v5458, 0
        %v5554 = vsel %vm174, %v5475, 0
        %v5556 = vsel %vm174, %v5492, 0
        %v5558 = vsel %vm174, %v5509, 0
        %v5560 = vsel %vm174, %v5526, 0
        %v5562 = vsel %vm174, %v5543, 0
        %v5565 = vsel %vm1781, %v5373, 0
        %5567 = vmatprep.subr.mxu0 0.0
        %5568 = vmatpush1.msra.mxu0 %v5565
        %5569 = vmatprep.subr.mxu0 0.0
        %5570 = vmatpush1.msra.mxu0 0.0
        %5571 = vmatprep.subr.mxu0 0.0
        %5572 = vmatpush1.msra.mxu0 0.0
        %5573 = vmatprep.subr.mxu0 0.0
        %5574 = vmatpush1.msra.mxu0 0.0
        %5575 = vmatprep.subr.mxu0 0.0
        %5576 = vmatpush1.msra.mxu0 0.0
        %5577 = vmatprep.subr.mxu0 0.0
        %5578 = vmatpush1.msra.mxu0 0.0
        %5579 = vmatprep.subr.mxu0 0.0
        %5580 = vmatpush1.msra.mxu0 0.0
        %5581 = vmatprep.subr.mxu0 0.0
        %5582 = vmatpush1.msra.mxu0 0.0
        %5583 = vmatprep.subr.mxu0 0.0
        %5584 = vmatpush1.msra.mxu0 0.0
        %5585 = vmatprep.subr.mxu0 0.0
        %5586 = vmatpush1.msra.mxu0 0.0
        %5587 = vmatprep.subr.mxu0 0.0
        %5588 = vmatpush1.msra.mxu0 0.0
        %5589 = vmatprep.subr.mxu0 0.0
        %5590 = vmatpush1.msra.mxu0 0.0
        %5591 = vmatprep.subr.mxu0 0.0
        %5592 = vmatpush1.msra.mxu0 0.0
        %5593 = vmatprep.subr.mxu0 0.0
        %5594 = vmatpush1.msra.mxu0 0.0
        %5595 = vmatprep.subr.mxu0 0.0
        %5596 = vmatpush1.msra.mxu0 0.0
        %5597 = vmatprep.subr.mxu0 0.0
        %5598 = vmatpush1.msra.mxu0 0.0
        %5599 = vmatprep.subr.mxu0 0.0
        %5600 = vmatpush1.msra.mxu0 0.0
        %5601 = vmatprep.subr.mxu0 0.0
        %5602 = vmatpush1.msra.mxu0 0.0
        %5603 = vmatprep.subr.mxu0 0.0
        %5604 = vmatpush1.msra.mxu0 0.0
        %5605 = vmatprep.subr.mxu0 0.0
        %5606 = vmatpush1.msra.mxu0 0.0
        %5607 = vmatprep.subr.mxu0 0.0
        %5608 = vmatpush1.msra.mxu0 0.0
        %5609 = vmatprep.subr.mxu0 0.0
        %5610 = vmatpush1.msra.mxu0 0.0
        %5611 = vmatprep.subr.mxu0 0.0
        %5612 = vmatpush1.msra.mxu0 0.0
        %5613 = vmatprep.subr.mxu0 0.0
        %5614 = vmatpush1.msra.mxu0 0.0
        %5615 = vmatprep.subr.mxu0 0.0
        %5616 = vmatpush1.msra.mxu0 0.0
        %5617 = vmatprep.subr.mxu0 0.0
        %5618 = vmatpush1.msra.mxu0 0.0
        %5619 = vmatprep.subr.mxu0 0.0
        %5620 = vmatpush1.msra.mxu0 0.0
        %5621 = vmatprep.subr.mxu0 0.0
        %5622 = vmatpush1.msra.mxu0 0.0
        %5623 = vmatprep.subr.mxu0 0.0
        %5624 = vmatpush1.msra.mxu0 0.0
        %5625 = vmatprep.subr.mxu0 0.0
        %5626 = vmatpush1.msra.mxu0 0.0
        %5627 = vmatprep.subr.mxu0 0.0
        %5628 = vmatpush1.msra.mxu0 0.0
        %5629 = vmatprep.subr.mxu0 0.0
        %5630 = vmatpush1.msra.mxu0 0.0
        %5631 = vmatprep.mubr.f32.mxu0 0.0
        %5632 = vmatmul.mubr.f32.gmra.mrb[0].mxu0 %v5544
        %v5633 = vpop.f32.mrb[0].mxu0
        %v5634 = vadd.f32 0.0, %v5633
        %v5635 = vpop.f32.mrb[0].mxu0
        %5636 = vmatprep.mubr.f32.mxu0 0.0
        %5637 = vmatmul.mubr.f32.gmra.mrb[0].mxu0 %v5546
        %v5638 = vpop.f32.mrb[0].mxu0
        %v5639 = vadd.f32 0.0, %v5638
        %v5640 = vpop.f32.mrb[0].mxu0
        %5641 = vmatprep.mubr.f32.mxu0 0.0
        %5642 = vmatmul.mubr.f32.gmra.mrb[0].mxu0 %v5548
        %v5643 = vpop.f32.mrb[0].mxu0
        %v5644 = vadd.f32 0.0, %v5643
        %v5645 = vpop.f32.mrb[0].mxu0
        %5646 = vmatprep.mubr.f32.mxu0 0.0
        %5647 = vmatmul.mubr.f32.gmra.mrb[0].mxu0 %v5550
        %v5648 = vpop.f32.mrb[0].mxu0
        %v5649 = vadd.f32 0.0, %v5648
        %v5650 = vpop.f32.mrb[0].mxu0
        %5651 = vmatprep.mubr.f32.mxu0 0.0
        %5652 = vmatmul.mubr.f32.gmra.mrb[0].mxu0 %v5552
        %v5653 = vpop.f32.mrb[0].mxu0
        %v5654 = vadd.f32 0.0, %v5653
        %v5655 = vpop.f32.mrb[0].mxu0
        %5656 = vmatprep.mubr.f32.mxu0 0.0
        %5657 = vmatmul.mubr.f32.gmra.mrb[0].mxu0 %v5554
        %v5658 = vpop.f32.mrb[0].mxu0
        %v5659 = vadd.f32 0.0, %v5658
        %v5660 = vpop.f32.mrb[0].mxu0
        %5661 = vmatprep.mubr.f32.mxu0 0.0
        %5662 = vmatmul.mubr.f32.gmra.mrb[0].mxu0 %v5556
        %v5663 = vpop.f32.mrb[0].mxu0
        %v5664 = vadd.f32 0.0, %v5663
        %v5665 = vpop.f32.mrb[0].mxu0
        %5666 = vmatprep.mubr.f32.mxu0 0.0
        %5667 = vmatmul.mubr.f32.gmra.mrb[0].mxu0 %v5558
        %v5668 = vpop.f32.mrb[0].mxu0
        %v5669 = vadd.f32 0.0, %v5668
        %v5670 = vpop.f32.mrb[0].mxu0
        %5671 = vmatprep.mubr.f32.mxu0 0.0
        %5672 = vmatmul.mubr.f32.gmra.mrb[0].mxu0 %v5560
        %v5673 = vpop.f32.mrb[0].mxu0
        %v5674 = vadd.f32 0.0, %v5673
        %v5675 = vpop.f32.mrb[0].mxu0
        %5676 = vmatprep.mubr.f32.mxu0 0.0
        %5677 = vmatmul.mubr.f32.gmra.mrb[0].mxu0 %v5562
        %v5678 = vpop.f32.mrb[0].mxu0
        %v5679 = vadd.f32 0.0, %v5678
        %v5680 = vpop.f32.mrb[0].mxu0
        %5681 = vdwg.mxu0
        %v5692 = vcombine.high %v5634, %v5634
        %v5694 = vunpack.c.l.s4 1983009808
        %v5695 = vunpack.c.0.s8 %v5694
        %v5696 = vlaneseq
        %v5697 = vshrl.u32 %v5696, 7
        %v5698 = vsub.s32 %v5695, %v5697
        %v5699 = vrot.slane %v5634, %v5698
        %v5701 = vunpack.c.l.s4 1983009808
        %v5702 = vunpack.c.0.s8 %v5701
        %v5703 = vlaneseq
        %v5704 = vshrl.u32 %v5703, 7
        %v5705 = vsub.s32 %v5702, %v5704
        %v5706 = vrot.slane %v5692, %v5705
        %v5707 = vcombine.high %v5699, %v5699
        %v5708 = vcombine.high %v5706, %v5706
        %v5709 = vcombine.high %v5639, %v5639
        %v5711 = vunpack.c.l.s4 1983009808
        %v5712 = vunpack.c.0.s8 %v5711
        %v5713 = vlaneseq
        %v5714 = vshrl.u32 %v5713, 7
        %v5715 = vsub.s32 %v5712, %v5714
        %v5716 = vrot.slane %v5639, %v5715
        %v5718 = vunpack.c.l.s4 1983009808
        %v5719 = vunpack.c.0.s8 %v5718
        %v5720 = vlaneseq
        %v5721 = vshrl.u32 %v5720, 7
        %v5722 = vsub.s32 %v5719, %v5721
        %v5723 = vrot.slane %v5709, %v5722
        %v5724 = vcombine.high %v5716, %v5716
        %v5725 = vcombine.high %v5723, %v5723
        %v5726 = vcombine.high %v5644, %v5644
        %v5728 = vunpack.c.l.s4 1983009808
        %v5729 = vunpack.c.0.s8 %v5728
        %v5730 = vlaneseq
        %v5731 = vshrl.u32 %v5730, 7
        %v5732 = vsub.s32 %v5729, %v5731
        %v5733 = vrot.slane %v5644, %v5732
        %v5735 = vunpack.c.l.s4 1983009808
        %v5736 = vunpack.c.0.s8 %v5735
        %v5737 = vlaneseq
        %v5738 = vshrl.u32 %v5737, 7
        %v5739 = vsub.s32 %v5736, %v5738
        %v5740 = vrot.slane %v5726, %v5739
        %v5741 = vcombine.high %v5740, %v5740
        %v5742 = vcombine.high %v5649, %v5649
        %v5744 = vunpack.c.l.s4 1983009808
        %v5745 = vunpack.c.0.s8 %v5744
        %v5746 = vlaneseq
        %v5747 = vshrl.u32 %v5746, 7
        %v5748 = vsub.s32 %v5745, %v5747
        %v5749 = vrot.slane %v5649, %v5748
        %v5751 = vunpack.c.l.s4 1983009808
        %v5752 = vunpack.c.0.s8 %v5751
        %v5753 = vlaneseq
        %v5754 = vshrl.u32 %v5753, 7
        %v5755 = vsub.s32 %v5752, %v5754
        %v5756 = vrot.slane %v5742, %v5755
        %v5757 = vcombine.high %v5749, %v5749
        %v5758 = vcombine.high %v5756, %v5756
        %v5759 = vcombine.high %v5654, %v5654
        %v5761 = vunpack.c.l.s4 1983009808
        %v5762 = vunpack.c.0.s8 %v5761
        %v5763 = vlaneseq
        %v5764 = vshrl.u32 %v5763, 7
        %v5765 = vsub.s32 %v5762, %v5764
        %v5766 = vrot.slane %v5654, %v5765
        %v5768 = vunpack.c.l.s4 1983009808
        %v5769 = vunpack.c.0.s8 %v5768
        %v5770 = vlaneseq
        %v5771 = vshrl.u32 %v5770, 7
        %v5772 = vsub.s32 %v5769, %v5771
        %v5773 = vrot.slane %v5759, %v5772
        %v5774 = vcombine.high %v5766, %v5766
        %v5775 = vcombine.high %v5659, %v5659
        %v5777 = vunpack.c.l.s4 1983009808
        %v5778 = vunpack.c.0.s8 %v5777
        %v5779 = vlaneseq
        %v5780 = vshrl.u32 %v5779, 7
        %v5781 = vsub.s32 %v5778, %v5780
        %v5782 = vrot.slane %v5659, %v5781
        %v5784 = vunpack.c.l.s4 1983009808
        %v5785 = vunpack.c.0.s8 %v5784
        %v5786 = vlaneseq
        %v5787 = vshrl.u32 %v5786, 7
        %v5788 = vsub.s32 %v5785, %v5787
        %v5789 = vrot.slane %v5775, %v5788
        %v5790 = vcombine.high %v5782, %v5782
        %v5791 = vcombine.high %v5789, %v5789
        %v5792 = vcombine.high %v5664, %v5664
        %v5794 = vunpack.c.l.s4 1983009808
        %v5795 = vunpack.c.0.s8 %v5794
        %v5796 = vlaneseq
        %v5797 = vshrl.u32 %v5796, 7
        %v5798 = vsub.s32 %v5795, %v5797
        %v5799 = vrot.slane %v5664, %v5798
        %v5801 = vunpack.c.l.s4 1983009808
        %v5802 = vunpack.c.0.s8 %v5801
        %v5803 = vlaneseq
        %v5804 = vshrl.u32 %v5803, 7
        %v5805 = vsub.s32 %v5802, %v5804
        %v5806 = vrot.slane %v5792, %v5805
        %v5807 = vcombine.high %v5799, %v5799
        %v5808 = vcombine.high %v5806, %v5806
        %v5809 = vcombine.high %v5669, %v5669
        %v5811 = vunpack.c.l.s4 1983009808
        %v5812 = vunpack.c.0.s8 %v5811
        %v5813 = vlaneseq
        %v5814 = vshrl.u32 %v5813, 7
        %v5815 = vsub.s32 %v5812, %v5814
        %v5816 = vrot.slane %v5669, %v5815
        %v5818 = vunpack.c.l.s4 1983009808
        %v5819 = vunpack.c.0.s8 %v5818
        %v5820 = vlaneseq
        %v5821 = vshrl.u32 %v5820, 7
        %v5822 = vsub.s32 %v5819, %v5821
        %v5823 = vrot.slane %v5809, %v5822
        %v5824 = vcombine.high %v5823, %v5823
        %v5825 = vcombine.high %v5674, %v5674
        %v5827 = vunpack.c.l.s4 1983009808
        %v5828 = vunpack.c.0.s8 %v5827
        %v5829 = vlaneseq
        %v5830 = vshrl.u32 %v5829, 7
        %v5831 = vsub.s32 %v5828, %v5830
        %v5832 = vrot.slane %v5674, %v5831
        %v5834 = vunpack.c.l.s4 1983009808
        %v5835 = vunpack.c.0.s8 %v5834
        %v5836 = vlaneseq
        %v5837 = vshrl.u32 %v5836, 7
        %v5838 = vsub.s32 %v5835, %v5837
        %v5839 = vrot.slane %v5825, %v5838
        %v5840 = vcombine.high %v5832, %v5832
        %v5841 = vcombine.high %v5839, %v5839
        %v5842 = vcombine.high %v5679, %v5679
        %v5844 = vunpack.c.l.s4 1983009808
        %v5845 = vunpack.c.0.s8 %v5844
        %v5846 = vlaneseq
        %v5847 = vshrl.u32 %v5846, 7
        %v5848 = vsub.s32 %v5845, %v5847
        %v5849 = vrot.slane %v5679, %v5848
        %v5851 = vunpack.c.l.s4 1983009808
        %v5852 = vunpack.c.0.s8 %v5851
        %v5853 = vlaneseq
        %v5854 = vshrl.u32 %v5853, 7
        %v5855 = vsub.s32 %v5852, %v5854
        %v5856 = vrot.slane %v5842, %v5855
        %v5857 = vcombine.high %v5849, %v5849
        %v5858 = vld [vmem:[#allocation3] sm:$0xff]
        %v5859 = vld [vmem:[#allocation3 + $0x8] sm:$0xff]
        %v5860 = vld [vmem:[#allocation3 + $0x10] sm:$0xff]
        %v5861 = vld [vmem:[#allocation3 + $0x18] sm:$0xff]
        %v5862 = vld [vmem:[#allocation3 + $0x20] sm:$0xff]
        %v5863 = vld [vmem:[#allocation3 + $0x28] sm:$0xff]
        %v5864 = vld [vmem:[#allocation3 + $0x30] sm:$0xff]
        %v5865 = vld [vmem:[#allocation3 + $0x38] sm:$0xff]
        %v5866 = vcombine.low %v5699, %v5707
        %v5867 = vcombine.low %v5706, %v5708
        %v5869 = vunpack.c.l.s4 1983009808
        %v5870 = vunpack.c.0.s8 %v5869
        %v5871 = vlaneseq
        %v5872 = vshrl.u32 %v5871, 7
        %v5873 = vsub.s32 %v5870, %v5872
        %v5874 = vrot.slane %v5866, %v5873
        %v5876 = vunpack.c.l.s4 1983009808
        %v5877 = vunpack.c.0.s8 %v5876
        %v5878 = vlaneseq
        %v5879 = vshrl.u32 %v5878, 7
        %v5880 = vsub.s32 %v5877, %v5879
        %v5881 = vrot.slane %v5867, %v5880
        %v5882 = vcombine.low %v5874, %v5881
        %v5883 = vcombine.low %v5724, %v5723
        %v5884 = vcombine.low %v5725, %v5733
        %v5886 = vunpack.c.l.s4 1983009808
        %v5887 = vunpack.c.0.s8 %v5886
        %v5888 = vlaneseq
        %v5889 = vshrl.u32 %v5888, 7
        %v5890 = vsub.s32 %v5887, %v5889
        %v5891 = vrot.slane %v5883, %v5890
        %v5893 = vunpack.c.l.s4 1983009808
        %v5894 = vunpack.c.0.s8 %v5893
        %v5895 = vlaneseq
        %v5896 = vshrl.u32 %v5895, 7
        %v5897 = vsub.s32 %v5894, %v5896
        %v5898 = vrot.slane %v5884, %v5897
        %v5899 = vcombine.low %v5891, %v5898
        %v5900 = vcombine.low %v5740, %v5741
        %v5901 = vcombine.low %v5749, %v5757
        %v5903 = vunpack.c.l.s4 1983009808
        %v5904 = vunpack.c.0.s8 %v5903
        %v5905 = vlaneseq
        %v5906 = vshrl.u32 %v5905, 7
        %v5907 = vsub.s32 %v5904, %v5906
        %v5908 = vrot.slane %v5900, %v5907
        %v5910 = vunpack.c.l.s4 1983009808
        %v5911 = vunpack.c.0.s8 %v5910
        %v5912 = vlaneseq
        %v5913 = vshrl.u32 %v5912, 7
        %v5914 = vsub.s32 %v5911, %v5913
        %v5915 = vrot.slane %v5901, %v5914
        %v5916 = vcombine.low %v5908, %v5915
        %v5917 = vcombine.low %v5758, %v5766
        %v5918 = vcombine.low %v5774, %v5773
        %v5920 = vunpack.c.l.s4 1983009808
        %v5921 = vunpack.c.0.s8 %v5920
        %v5922 = vlaneseq
        %v5923 = vshrl.u32 %v5922, 7
        %v5924 = vsub.s32 %v5921, %v5923
        %v5925 = vrot.slane %v5917, %v5924
        %v5927 = vunpack.c.l.s4 1983009808
        %v5928 = vunpack.c.0.s8 %v5927
        %v5929 = vlaneseq
        %v5930 = vshrl.u32 %v5929, 7
        %v5931 = vsub.s32 %v5928, %v5930
        %v5932 = vrot.slane %v5918, %v5931
        %v5933 = vcombine.low %v5925, %v5932
        %v5934 = vcombine.low %v5782, %v5790
        %v5935 = vcombine.low %v5789, %v5791
        %v5937 = vunpack.c.l.s4 1983009808
        %v5938 = vunpack.c.0.s8 %v5937
        %v5939 = vlaneseq
        %v5940 = vshrl.u32 %v5939, 7
        %v5941 = vsub.s32 %v5938, %v5940
        %v5942 = vrot.slane %v5934, %v5941
        %v5944 = vunpack.c.l.s4 1983009808
        %v5945 = vunpack.c.0.s8 %v5944
        %v5946 = vlaneseq
        %v5947 = vshrl.u32 %v5946, 7
        %v5948 = vsub.s32 %v5945, %v5947
        %v5949 = vrot.slane %v5935, %v5948
        %v5950 = vcombine.low %v5942, %v5949
        %v5951 = vcombine.low %v5807, %v5806
        %v5952 = vcombine.low %v5808, %v5816
        %v5954 = vunpack.c.l.s4 1983009808
        %v5955 = vunpack.c.0.s8 %v5954
        %v5956 = vlaneseq
        %v5957 = vshrl.u32 %v5956, 7
        %v5958 = vsub.s32 %v5955, %v5957
        %v5959 = vrot.slane %v5951, %v5958
        %v5961 = vunpack.c.l.s4 1983009808
        %v5962 = vunpack.c.0.s8 %v5961
        %v5963 = vlaneseq
        %v5964 = vshrl.u32 %v5963, 7
        %v5965 = vsub.s32 %v5962, %v5964
        %v5966 = vrot.slane %v5952, %v5965
        %v5967 = vcombine.low %v5959, %v5966
        %v5968 = vcombine.low %v5823, %v5824
        %v5969 = vcombine.low %v5832, %v5840
        %v5971 = vunpack.c.l.s4 1983009808
        %v5972 = vunpack.c.0.s8 %v5971
        %v5973 = vlaneseq
        %v5974 = vshrl.u32 %v5973, 7
        %v5975 = vsub.s32 %v5972, %v5974
        %v5976 = vrot.slane %v5968, %v5975
        %v5978 = vunpack.c.l.s4 1983009808
        %v5979 = vunpack.c.0.s8 %v5978
        %v5980 = vlaneseq
        %v5981 = vshrl.u32 %v5980, 7
        %v5982 = vsub.s32 %v5979, %v5981
        %v5983 = vrot.slane %v5969, %v5982
        %v5984 = vcombine.low %v5976, %v5983
        %v5985 = vcombine.low %v5841, %v5849
        %v5986 = vcombine.low %v5857, %v5856
        %v5988 = vunpack.c.l.s4 1983009808
        %v5989 = vunpack.c.0.s8 %v5988
        %v5990 = vlaneseq
        %v5991 = vshrl.u32 %v5990, 7
        %v5992 = vsub.s32 %v5989, %v5991
        %v5993 = vrot.slane %v5985, %v5992
        %v5995 = vunpack.c.l.s4 1983009808
        %v5996 = vunpack.c.0.s8 %v5995
        %v5997 = vlaneseq
        %v5998 = vshrl.u32 %v5997, 7
        %v5999 = vsub.s32 %v5996, %v5998
        %v6000 = vrot.slane %v5986, %v5999
        %v6001 = vcombine.low %v5993, %v6000
        %v6010 = vadd.f32 %v5858, %v5882
        %v6011 = vadd.f32 %v5859, %v5899
        %v6012 = vadd.f32 %v5860, %v5916
        %v6013 = vadd.f32 %v5861, %v5933
        %v6014 = vadd.f32 %v5862, %v5950
        %v6015 = vadd.f32 %v5863, %v5967
        %v6016 = vadd.f32 %v5864, %v5984
        %v6017 = vadd.f32 %v5865, %v6001
        %6018 = vst.msk [vmem:[#allocation3] sm:$0xff] %vm1357, %v6010
        %6019 = vst.msk [vmem:[#allocation3 + $0x8] sm:$0xff] %vm1357, %v6011
        %6020 = vst.msk [vmem:[#allocation3 + $0x10] sm:$0xff] %vm1357, %v6012
        %6021 = vst.msk [vmem:[#allocation3 + $0x18] sm:$0xff] %vm1357, %v6013
        %6022 = vst.msk [vmem:[#allocation3 + $0x20] sm:$0xff] %vm1357, %v6014
        %6023 = vst.msk [vmem:[#allocation3 + $0x28] sm:$0xff] %vm1357, %v6015
        %6024 = vst.msk [vmem:[#allocation3 + $0x30] sm:$0xff] %vm1357, %v6016
        %6025 = vst.msk [vmem:[#allocation3 + $0x38] sm:$0xff] %vm1357, %v6017
        %s6026 = scalar_lea.vmem %s1, 28
        %v6027 = vld [vmem:[%s6026] sm:$0xf]
        %v6029 = vsel %vm1781, %v6027, 0
        %6031 = vmatprep.subr.mxu0 0.0
        %6032 = vmatpush1.msra.mxu0 %v6029
        %6033 = vmatprep.subr.mxu0 0.0
        %6034 = vmatpush1.msra.mxu0 0.0
        %6035 = vmatprep.subr.mxu0 0.0
        %6036 = vmatpush1.msra.mxu0 0.0
        %6037 = vmatprep.subr.mxu0 0.0
        %6038 = vmatpush1.msra.mxu0 0.0
        %6039 = vmatprep.subr.mxu0 0.0
        %6040 = vmatpush1.msra.mxu0 0.0
        %6041 = vmatprep.subr.mxu0 0.0
        %6042 = vmatpush1.msra.mxu0 0.0
        %6043 = vmatprep.subr.mxu0 0.0
        %6044 = vmatpush1.msra.mxu0 0.0
        %6045 = vmatprep.subr.mxu0 0.0
        %6046 = vmatpush1.msra.mxu0 0.0
        %6047 = vmatprep.subr.mxu0 0.0
        %6048 = vmatpush1.msra.mxu0 0.0
        %6049 = vmatprep.subr.mxu0 0.0
        %6050 = vmatpush1.msra.mxu0 0.0
        %6051 = vmatprep.subr.mxu0 0.0
        %6052 = vmatpush1.msra.mxu0 0.0
        %6053 = vmatprep.subr.mxu0 0.0
        %6054 = vmatpush1.msra.mxu0 0.0
        %6055 = vmatprep.subr.mxu0 0.0
        %6056 = vmatpush1.msra.mxu0 0.0
        %6057 = vmatprep.subr.mxu0 0.0
        %6058 = vmatpush1.msra.mxu0 0.0
        %6059 = vmatprep.subr.mxu0 0.0
        %6060 = vmatpush1.msra.mxu0 0.0
        %6061 = vmatprep.subr.mxu0 0.0
        %6062 = vmatpush1.msra.mxu0 0.0
        %6063 = vmatprep.subr.mxu0 0.0
        %6064 = vmatpush1.msra.mxu0 0.0
        %6065 = vmatprep.subr.mxu0 0.0
        %6066 = vmatpush1.msra.mxu0 0.0
        %6067 = vmatprep.subr.mxu0 0.0
        %6068 = vmatpush1.msra.mxu0 0.0
        %6069 = vmatprep.subr.mxu0 0.0
        %6070 = vmatpush1.msra.mxu0 0.0
        %6071 = vmatprep.subr.mxu0 0.0
        %6072 = vmatpush1.msra.mxu0 0.0
        %6073 = vmatprep.subr.mxu0 0.0
        %6074 = vmatpush1.msra.mxu0 0.0
        %6075 = vmatprep.subr.mxu0 0.0
        %6076 = vmatpush1.msra.mxu0 0.0
        %6077 = vmatprep.subr.mxu0 0.0
        %6078 = vmatpush1.msra.mxu0 0.0
        %6079 = vmatprep.subr.mxu0 0.0
        %6080 = vmatpush1.msra.mxu0 0.0
        %6081 = vmatprep.subr.mxu0 0.0
        %6082 = vmatpush1.msra.mxu0 0.0
        %6083 = vmatprep.subr.mxu0 0.0
        %6084 = vmatpush1.msra.mxu0 0.0
        %6085 = vmatprep.subr.mxu0 0.0
        %6086 = vmatpush1.msra.mxu0 0.0
        %6087 = vmatprep.subr.mxu0 0.0
        %6088 = vmatpush1.msra.mxu0 0.0
        %6089 = vmatprep.subr.mxu0 0.0
        %6090 = vmatpush1.msra.mxu0 0.0
        %6091 = vmatprep.subr.mxu0 0.0
        %6092 = vmatpush1.msra.mxu0 0.0
        %6093 = vmatprep.subr.mxu0 0.0
        %6094 = vmatpush1.msra.mxu0 0.0
        %6095 = vmatprep.mubr.f32.mxu0 0.0
        %6096 = vmatmul.mubr.f32.gmra.mrb[0].mxu0 %v5544
        %v6097 = vpop.f32.mrb[0].mxu0
        %v6098 = vadd.f32 0.0, %v6097
        %v6099 = vpop.f32.mrb[0].mxu0
        %6100 = vmatprep.mubr.f32.mxu0 0.0
        %6101 = vmatmul.mubr.f32.gmra.mrb[0].mxu0 %v5546
        %v6102 = vpop.f32.mrb[0].mxu0
        %v6103 = vadd.f32 0.0, %v6102
        %v6104 = vpop.f32.mrb[0].mxu0
        %6105 = vmatprep.mubr.f32.mxu0 0.0
        %6106 = vmatmul.mubr.f32.gmra.mrb[0].mxu0 %v5548
        %v6107 = vpop.f32.mrb[0].mxu0
        %v6108 = vadd.f32 0.0, %v6107
        %v6109 = vpop.f32.mrb[0].mxu0
        %6110 = vmatprep.mubr.f32.mxu0 0.0
        %6111 = vmatmul.mubr.f32.gmra.mrb[0].mxu0 %v5550
        %v6112 = vpop.f32.mrb[0].mxu0
        %v6113 = vadd.f32 0.0, %v6112
        %v6114 = vpop.f32.mrb[0].mxu0
        %6115 = vmatprep.mubr.f32.mxu0 0.0
        %6116 = vmatmul.mubr.f32.gmra.mrb[0].mxu0 %v5552
        %v6117 = vpop.f32.mrb[0].mxu0
        %v6118 = vadd.f32 0.0, %v6117
        %v6119 = vpop.f32.mrb[0].mxu0
        %6120 = vmatprep.mubr.f32.mxu0 0.0
        %6121 = vmatmul.mubr.f32.gmra.mrb[0].mxu0 %v5554
        %v6122 = vpop.f32.mrb[0].mxu0
        %v6123 = vadd.f32 0.0, %v6122
        %v6124 = vpop.f32.mrb[0].mxu0
        %6125 = vmatprep.mubr.f32.mxu0 0.0
        %6126 = vmatmul.mubr.f32.gmra.mrb[0].mxu0 %v5556
        %v6127 = vpop.f32.mrb[0].mxu0
        %v6128 = vadd.f32 0.0, %v6127
        %v6129 = vpop.f32.mrb[0].mxu0
        %6130 = vmatprep.mubr.f32.mxu0 0.0
        %6131 = vmatmul.mubr.f32.gmra.mrb[0].mxu0 %v5558
        %v6132 = vpop.f32.mrb[0].mxu0
        %v6133 = vadd.f32 0.0, %v6132
        %v6134 = vpop.f32.mrb[0].mxu0
        %6135 = vmatprep.mubr.f32.mxu0 0.0
        %6136 = vmatmul.mubr.f32.gmra.mrb[0].mxu0 %v5560
        %v6137 = vpop.f32.mrb[0].mxu0
        %v6138 = vadd.f32 0.0, %v6137
        %v6139 = vpop.f32.mrb[0].mxu0
        %6140 = vmatprep.mubr.f32.mxu0 0.0
        %6141 = vmatmul.mubr.f32.gmra.mrb[0].mxu0 %v5562
        %v6142 = vpop.f32.mrb[0].mxu0
        %v6143 = vadd.f32 0.0, %v6142
        %v6144 = vpop.f32.mrb[0].mxu0
        %6145 = vdwg.mxu0
        %v6156 = vcombine.high %v6098, %v6098
        %v6158 = vunpack.c.l.s4 1983009808
        %v6159 = vunpack.c.0.s8 %v6158
        %v6160 = vlaneseq
        %v6161 = vshrl.u32 %v6160, 7
        %v6162 = vsub.s32 %v6159, %v6161
        %v6163 = vrot.slane %v6098, %v6162
        %v6165 = vunpack.c.l.s4 1983009808
        %v6166 = vunpack.c.0.s8 %v6165
        %v6167 = vlaneseq
        %v6168 = vshrl.u32 %v6167, 7
        %v6169 = vsub.s32 %v6166, %v6168
        %v6170 = vrot.slane %v6156, %v6169
        %v6171 = vcombine.high %v6163, %v6163
        %v6172 = vcombine.high %v6170, %v6170
        %v6173 = vcombine.high %v6103, %v6103
        %v6175 = vunpack.c.l.s4 1983009808
        %v6176 = vunpack.c.0.s8 %v6175
        %v6177 = vlaneseq
        %v6178 = vshrl.u32 %v6177, 7
        %v6179 = vsub.s32 %v6176, %v6178
        %v6180 = vrot.slane %v6103, %v6179
        %v6182 = vunpack.c.l.s4 1983009808
        %v6183 = vunpack.c.0.s8 %v6182
        %v6184 = vlaneseq
        %v6185 = vshrl.u32 %v6184, 7
        %v6186 = vsub.s32 %v6183, %v6185
        %v6187 = vrot.slane %v6173, %v6186
        %v6188 = vcombine.high %v6180, %v6180
        %v6189 = vcombine.high %v6187, %v6187
        %v6190 = vcombine.high %v6108, %v6108
        %v6192 = vunpack.c.l.s4 1983009808
        %v6193 = vunpack.c.0.s8 %v6192
        %v6194 = vlaneseq
        %v6195 = vshrl.u32 %v6194, 7
        %v6196 = vsub.s32 %v6193, %v6195
        %v6197 = vrot.slane %v6108, %v6196
        %v6199 = vunpack.c.l.s4 1983009808
        %v6200 = vunpack.c.0.s8 %v6199
        %v6201 = vlaneseq
        %v6202 = vshrl.u32 %v6201, 7
        %v6203 = vsub.s32 %v6200, %v6202
        %v6204 = vrot.slane %v6190, %v6203
        %v6205 = vcombine.high %v6197, %v6197
        %v6206 = vcombine.high %v6204, %v6204
        %v6207 = vcombine.high %v6113, %v6113
        %v6209 = vunpack.c.l.s4 1983009808
        %v6210 = vunpack.c.0.s8 %v6209
        %v6211 = vlaneseq
        %v6212 = vshrl.u32 %v6211, 7
        %v6213 = vsub.s32 %v6210, %v6212
        %v6214 = vrot.slane %v6113, %v6213
        %v6216 = vunpack.c.l.s4 1983009808
        %v6217 = vunpack.c.0.s8 %v6216
        %v6218 = vlaneseq
        %v6219 = vshrl.u32 %v6218, 7
        %v6220 = vsub.s32 %v6217, %v6219
        %v6221 = vrot.slane %v6207, %v6220
        %v6222 = vcombine.high %v6214, %v6214
        %v6223 = vcombine.high %v6221, %v6221
        %v6224 = vcombine.high %v6118, %v6118
        %v6226 = vunpack.c.l.s4 1983009808
        %v6227 = vunpack.c.0.s8 %v6226
        %v6228 = vlaneseq
        %v6229 = vshrl.u32 %v6228, 7
        %v6230 = vsub.s32 %v6227, %v6229
        %v6231 = vrot.slane %v6118, %v6230
        %v6233 = vunpack.c.l.s4 1983009808
        %v6234 = vunpack.c.0.s8 %v6233
        %v6235 = vlaneseq
        %v6236 = vshrl.u32 %v6235, 7
        %v6237 = vsub.s32 %v6234, %v6236
        %v6238 = vrot.slane %v6224, %v6237
        %v6239 = vcombine.high %v6231, %v6231
        %v6240 = vcombine.high %v6238, %v6238
        %v6241 = vcombine.high %v6123, %v6123
        %v6243 = vunpack.c.l.s4 1983009808
        %v6244 = vunpack.c.0.s8 %v6243
        %v6245 = vlaneseq
        %v6246 = vshrl.u32 %v6245, 7
        %v6247 = vsub.s32 %v6244, %v6246
        %v6248 = vrot.slane %v6123, %v6247
        %v6250 = vunpack.c.l.s4 1983009808
        %v6251 = vunpack.c.0.s8 %v6250
        %v6252 = vlaneseq
        %v6253 = vshrl.u32 %v6252, 7
        %v6254 = vsub.s32 %v6251, %v6253
        %v6255 = vrot.slane %v6241, %v6254
        %v6256 = vcombine.high %v6248, %v6248
        %v6257 = vcombine.high %v6255, %v6255
        %v6258 = vcombine.high %v6128, %v6128
        %v6260 = vunpack.c.l.s4 1983009808
        %v6261 = vunpack.c.0.s8 %v6260
        %v6262 = vlaneseq
        %v6263 = vshrl.u32 %v6262, 7
        %v6264 = vsub.s32 %v6261, %v6263
        %v6265 = vrot.slane %v6128, %v6264
        %v6267 = vunpack.c.l.s4 1983009808
        %v6268 = vunpack.c.0.s8 %v6267
        %v6269 = vlaneseq
        %v6270 = vshrl.u32 %v6269, 7
        %v6271 = vsub.s32 %v6268, %v6270
        %v6272 = vrot.slane %v6258, %v6271
        %v6273 = vcombine.high %v6265, %v6265
        %v6274 = vcombine.high %v6272, %v6272
        %v6275 = vcombine.high %v6133, %v6133
        %v6277 = vunpack.c.l.s4 1983009808
        %v6278 = vunpack.c.0.s8 %v6277
        %v6279 = vlaneseq
        %v6280 = vshrl.u32 %v6279, 7
        %v6281 = vsub.s32 %v6278, %v6280
        %v6282 = vrot.slane %v6133, %v6281
        %v6284 = vunpack.c.l.s4 1983009808
        %v6285 = vunpack.c.0.s8 %v6284
        %v6286 = vlaneseq
        %v6287 = vshrl.u32 %v6286, 7
        %v6288 = vsub.s32 %v6285, %v6287
        %v6289 = vrot.slane %v6275, %v6288
        %v6290 = vcombine.high %v6282, %v6282
        %v6291 = vcombine.high %v6289, %v6289
        %v6292 = vcombine.high %v6138, %v6138
        %v6294 = vunpack.c.l.s4 1983009808
        %v6295 = vunpack.c.0.s8 %v6294
        %v6296 = vlaneseq
        %v6297 = vshrl.u32 %v6296, 7
        %v6298 = vsub.s32 %v6295, %v6297
        %v6299 = vrot.slane %v6138, %v6298
        %v6301 = vunpack.c.l.s4 1983009808
        %v6302 = vunpack.c.0.s8 %v6301
        %v6303 = vlaneseq
        %v6304 = vshrl.u32 %v6303, 7
        %v6305 = vsub.s32 %v6302, %v6304
        %v6306 = vrot.slane %v6292, %v6305
        %v6307 = vcombine.high %v6299, %v6299
        %v6308 = vcombine.high %v6306, %v6306
        %v6309 = vcombine.high %v6143, %v6143
        %v6311 = vunpack.c.l.s4 1983009808
        %v6312 = vunpack.c.0.s8 %v6311
        %v6313 = vlaneseq
        %v6314 = vshrl.u32 %v6313, 7
        %v6315 = vsub.s32 %v6312, %v6314
        %v6316 = vrot.slane %v6143, %v6315
        %v6318 = vunpack.c.l.s4 1983009808
        %v6319 = vunpack.c.0.s8 %v6318
        %v6320 = vlaneseq
        %v6321 = vshrl.u32 %v6320, 7
        %v6322 = vsub.s32 %v6319, %v6321
        %v6323 = vrot.slane %v6309, %v6322
        %v6324 = vcombine.high %v6316, %v6316
        %v6325 = vcombine.high %v6323, %v6323
        %v6326 = vld [vmem:[#allocation3] sm:$0xff]
        %v6327 = vld [vmem:[#allocation3 + $0x8] sm:$0xff]
        %v6328 = vld [vmem:[#allocation3 + $0x10] sm:$0xff]
        %v6329 = vld [vmem:[#allocation3 + $0x18] sm:$0xff]
        %v6330 = vld [vmem:[#allocation3 + $0x20] sm:$0xff]
        %v6331 = vld [vmem:[#allocation3 + $0x28] sm:$0xff]
        %v6332 = vld [vmem:[#allocation3 + $0x30] sm:$0xff]
        %v6333 = vld [vmem:[#allocation3 + $0x38] sm:$0xff]
        %v6334 = vcombine.low %v6163, %v6171
        %v6335 = vcombine.low %v6170, %v6172
        %v6337 = vunpack.c.l.s4 1983009808
        %v6338 = vunpack.c.0.s8 %v6337
        %v6339 = vlaneseq
        %v6340 = vshrl.u32 %v6339, 7
        %v6341 = vsub.s32 %v6338, %v6340
        %v6342 = vrot.slane %v6334, %v6341
        %v6344 = vunpack.c.l.s4 1983009808
        %v6345 = vunpack.c.0.s8 %v6344
        %v6346 = vlaneseq
        %v6347 = vshrl.u32 %v6346, 7
        %v6348 = vsub.s32 %v6345, %v6347
        %v6349 = vrot.slane %v6335, %v6348
        %v6350 = vcombine.low %v6342, %v6349
        %v6352 = vunpack.c.l.s4 1983009808
        %v6353 = vunpack.c.0.s8 %v6352
        %v6354 = vlaneseq
        %v6355 = vshrl.u32 %v6354, 7
        %v6356 = vsub.s32 %v6353, %v6355
        %v6357 = vrot.slane %v6180, %v6356
        %v6358 = vcombine.low %v6188, %v6187
        %v6359 = vcombine.low %v6189, %v6197
        %v6361 = vunpack.c.l.s4 1983009808
        %v6362 = vunpack.c.0.s8 %v6361
        %v6363 = vlaneseq
        %v6364 = vshrl.u32 %v6363, 7
        %v6365 = vsub.s32 %v6362, %v6364
        %v6366 = vrot.slane %v6358, %v6365
        %v6368 = vunpack.c.l.s4 1983009808
        %v6369 = vunpack.c.0.s8 %v6368
        %v6370 = vlaneseq
        %v6371 = vshrl.u32 %v6370, 7
        %v6372 = vsub.s32 %v6369, %v6371
        %v6373 = vrot.slane %v6359, %v6372
        %v6374 = vcombine.low %v6366, %v6373
        %v6376 = vunpack.c.l.s4 1983009808
        %v6377 = vunpack.c.0.s8 %v6376
        %v6378 = vlaneseq
        %v6379 = vshrl.u32 %v6378, 7
        %v6380 = vsub.s32 %v6377, %v6379
        %v6381 = vrot.slane %v6205, %v6380
        %v6382 = vcombine.low %v6204, %v6206
        %v6383 = vcombine.low %v6214, %v6222
        %v6385 = vunpack.c.l.s4 1983009808
        %v6386 = vunpack.c.0.s8 %v6385
        %v6387 = vlaneseq
        %v6388 = vshrl.u32 %v6387, 7
        %v6389 = vsub.s32 %v6386, %v6388
        %v6390 = vrot.slane %v6382, %v6389
        %v6392 = vunpack.c.l.s4 1983009808
        %v6393 = vunpack.c.0.s8 %v6392
        %v6394 = vlaneseq
        %v6395 = vshrl.u32 %v6394, 7
        %v6396 = vsub.s32 %v6393, %v6395
        %v6397 = vrot.slane %v6383, %v6396
        %v6398 = vcombine.low %v6390, %v6397
        %v6400 = vunpack.c.l.s4 1983009808
        %v6401 = vunpack.c.0.s8 %v6400
        %v6402 = vlaneseq
        %v6403 = vshrl.u32 %v6402, 7
        %v6404 = vsub.s32 %v6401, %v6403
        %v6405 = vrot.slane %v6221, %v6404
        %v6406 = vcombine.low %v6223, %v6231
        %v6407 = vcombine.low %v6239, %v6238
        %v6409 = vunpack.c.l.s4 1983009808
        %v6410 = vunpack.c.0.s8 %v6409
        %v6411 = vlaneseq
        %v6412 = vshrl.u32 %v6411, 7
        %v6413 = vsub.s32 %v6410, %v6412
        %v6414 = vrot.slane %v6406, %v6413
        %v6416 = vunpack.c.l.s4 1983009808
        %v6417 = vunpack.c.0.s8 %v6416
        %v6418 = vlaneseq
        %v6419 = vshrl.u32 %v6418, 7
        %v6420 = vsub.s32 %v6417, %v6419
        %v6421 = vrot.slane %v6407, %v6420
        %v6422 = vcombine.low %v6414, %v6421
        %v6424 = vunpack.c.l.s4 1983009808
        %v6425 = vunpack.c.0.s8 %v6424
        %v6426 = vlaneseq
        %v6427 = vshrl.u32 %v6426, 7
        %v6428 = vsub.s32 %v6425, %v6427
        %v6429 = vrot.slane %v6240, %v6428
        %v6430 = vcombine.low %v6248, %v6256
        %v6431 = vcombine.low %v6255, %v6257
        %v6433 = vunpack.c.l.s4 1983009808
        %v6434 = vunpack.c.0.s8 %v6433
        %v6435 = vlaneseq
        %v6436 = vshrl.u32 %v6435, 7
        %v6437 = vsub.s32 %v6434, %v6436
        %v6438 = vrot.slane %v6430, %v6437
        %v6440 = vunpack.c.l.s4 1983009808
        %v6441 = vunpack.c.0.s8 %v6440
        %v6442 = vlaneseq
        %v6443 = vshrl.u32 %v6442, 7
        %v6444 = vsub.s32 %v6441, %v6443
        %v6445 = vrot.slane %v6431, %v6444
        %v6446 = vcombine.low %v6438, %v6445
        %v6448 = vunpack.c.l.s4 1983009808
        %v6449 = vunpack.c.0.s8 %v6448
        %v6450 = vlaneseq
        %v6451 = vshrl.u32 %v6450, 7
        %v6452 = vsub.s32 %v6449, %v6451
        %v6453 = vrot.slane %v6265, %v6452
        %v6454 = vcombine.low %v6273, %v6272
        %v6455 = vcombine.low %v6274, %v6282
        %v6457 = vunpack.c.l.s4 1983009808
        %v6458 = vunpack.c.0.s8 %v6457
        %v6459 = vlaneseq
        %v6460 = vshrl.u32 %v6459, 7
        %v6461 = vsub.s32 %v6458, %v6460
        %v6462 = vrot.slane %v6454, %v6461
        %v6464 = vunpack.c.l.s4 1983009808
        %v6465 = vunpack.c.0.s8 %v6464
        %v6466 = vlaneseq
        %v6467 = vshrl.u32 %v6466, 7
        %v6468 = vsub.s32 %v6465, %v6467
        %v6469 = vrot.slane %v6455, %v6468
        %v6470 = vcombine.low %v6462, %v6469
        %v6472 = vunpack.c.l.s4 1983009808
        %v6473 = vunpack.c.0.s8 %v6472
        %v6474 = vlaneseq
        %v6475 = vshrl.u32 %v6474, 7
        %v6476 = vsub.s32 %v6473, %v6475
        %v6477 = vrot.slane %v6290, %v6476
        %v6478 = vcombine.low %v6289, %v6291
        %v6479 = vcombine.low %v6299, %v6307
        %v6481 = vunpack.c.l.s4 1983009808
        %v6482 = vunpack.c.0.s8 %v6481
        %v6483 = vlaneseq
        %v6484 = vshrl.u32 %v6483, 7
        %v6485 = vsub.s32 %v6482, %v6484
        %v6486 = vrot.slane %v6478, %v6485
        %v6488 = vunpack.c.l.s4 1983009808
        %v6489 = vunpack.c.0.s8 %v6488
        %v6490 = vlaneseq
        %v6491 = vshrl.u32 %v6490, 7
        %v6492 = vsub.s32 %v6489, %v6491
        %v6493 = vrot.slane %v6479, %v6492
        %v6494 = vcombine.low %v6486, %v6493
        %v6496 = vunpack.c.l.s4 1983009808
        %v6497 = vunpack.c.0.s8 %v6496
        %v6498 = vlaneseq
        %v6499 = vshrl.u32 %v6498, 7
        %v6500 = vsub.s32 %v6497, %v6499
        %v6501 = vrot.slane %v6306, %v6500
        %v6502 = vcombine.low %v6308, %v6316
        %v6503 = vcombine.low %v6324, %v6323
        %v6505 = vunpack.c.l.s4 1983009808
        %v6506 = vunpack.c.0.s8 %v6505
        %v6507 = vlaneseq
        %v6508 = vshrl.u32 %v6507, 7
        %v6509 = vsub.s32 %v6506, %v6508
        %v6510 = vrot.slane %v6502, %v6509
        %v6512 = vunpack.c.l.s4 1983009808
        %v6513 = vunpack.c.0.s8 %v6512
        %v6514 = vlaneseq
        %v6515 = vshrl.u32 %v6514, 7
        %v6516 = vsub.s32 %v6513, %v6515
        %v6517 = vrot.slane %v6503, %v6516
        %v6518 = vcombine.low %v6510, %v6517
        %v6520 = vunpack.c.l.s4 1983009808
        %v6521 = vunpack.c.0.s8 %v6520
        %v6522 = vlaneseq
        %v6523 = vshrl.u32 %v6522, 7
        %v6524 = vsub.s32 %v6521, %v6523
        %v6525 = vrot.slane %v6325, %v6524
        %v6526 = vrot.slane %v6350, 1
        %v6527 = vrot.slane %v6357, 1
        %v6528 = vsel %vm2744, %v6526, %v6527
        %v6529 = vrot.slane %v6374, 1
        %v6530 = vrot.slane %v6381, 1
        %v6531 = vsel %vm2744, %v6529, %v6530
        %v6532 = vrot.slane %v6398, 1
        %v6533 = vrot.slane %v6405, 1
        %v6534 = vsel %vm2744, %v6532, %v6533
        %v6535 = vrot.slane %v6422, 1
        %v6536 = vrot.slane %v6429, 1
        %v6537 = vsel %vm2744, %v6535, %v6536
        %v6538 = vrot.slane %v6446, 1
        %v6539 = vrot.slane %v6453, 1
        %v6540 = vsel %vm2744, %v6538, %v6539
        %v6541 = vrot.slane %v6470, 1
        %v6542 = vrot.slane %v6477, 1
        %v6543 = vsel %vm2744, %v6541, %v6542
        %v6544 = vrot.slane %v6494, 1
        %v6545 = vrot.slane %v6501, 1
        %v6546 = vsel %vm2744, %v6544, %v6545
        %v6547 = vrot.slane %v6518, 1
        %v6548 = vrot.slane %v6525, 1
        %v6549 = vsel %vm2744, %v6547, %v6548
        %v6558 = vadd.f32 %v6326, %v6528
        %v6559 = vadd.f32 %v6327, %v6531
        %v6560 = vadd.f32 %v6328, %v6534
        %v6561 = vadd.f32 %v6329, %v6537
        %v6562 = vadd.f32 %v6330, %v6540
        %v6563 = vadd.f32 %v6331, %v6543
        %v6564 = vadd.f32 %v6332, %v6546
        %v6565 = vadd.f32 %v6333, %v6549
        %6566 = vst.msk [vmem:[#allocation3] sm:$0xff] %vm1357, %v6558
        %6567 = vst.msk [vmem:[#allocation3 + $0x8] sm:$0xff] %vm1357, %v6559
        %6568 = vst.msk [vmem:[#allocation3 + $0x10] sm:$0xff] %vm1357, %v6560
        %6569 = vst.msk [vmem:[#allocation3 + $0x18] sm:$0xff] %vm1357, %v6561
        %6570 = vst.msk [vmem:[#allocation3 + $0x20] sm:$0xff] %vm1357, %v6562
        %6571 = vst.msk [vmem:[#allocation3 + $0x28] sm:$0xff] %vm1357, %v6563
        %6572 = vst.msk [vmem:[#allocation3 + $0x30] sm:$0xff] %vm1357, %v6564
        %6573 = vst.msk [vmem:[#allocation3 + $0x38] sm:$0xff] %vm1357, %v6565
        %s6574 = scalar_lea.vmem %s1, 32
        %v6575 = vld [vmem:[%s6574] sm:$0xf]
        %v6577 = vsel %vm1781, %v6575, 0
        %6579 = vmatprep.subr.mxu0 0.0
        %6580 = vmatpush1.msra.mxu0 %v6577
        %6581 = vmatprep.subr.mxu0 0.0
        %6582 = vmatpush1.msra.mxu0 0.0
        %6583 = vmatprep.subr.mxu0 0.0
        %6584 = vmatpush1.msra.mxu0 0.0
        %6585 = vmatprep.subr.mxu0 0.0
        %6586 = vmatpush1.msra.mxu0 0.0
        %6587 = vmatprep.subr.mxu0 0.0
        %6588 = vmatpush1.msra.mxu0 0.0
        %6589 = vmatprep.subr.mxu0 0.0
        %6590 = vmatpush1.msra.mxu0 0.0
        %6591 = vmatprep.subr.mxu0 0.0
        %6592 = vmatpush1.msra.mxu0 0.0
        %6593 = vmatprep.subr.mxu0 0.0
        %6594 = vmatpush1.msra.mxu0 0.0
        %6595 = vmatprep.subr.mxu0 0.0
        %6596 = vmatpush1.msra.mxu0 0.0
        %6597 = vmatprep.subr.mxu0 0.0
        %6598 = vmatpush1.msra.mxu0 0.0
        %6599 = vmatprep.subr.mxu0 0.0
        %6600 = vmatpush1.msra.mxu0 0.0
        %6601 = vmatprep.subr.mxu0 0.0
        %6602 = vmatpush1.msra.mxu0 0.0
        %6603 = vmatprep.subr.mxu0 0.0
        %6604 = vmatpush1.msra.mxu0 0.0
        %6605 = vmatprep.subr.mxu0 0.0
        %6606 = vmatpush1.msra.mxu0 0.0
        %6607 = vmatprep.subr.mxu0 0.0
        %6608 = vmatpush1.msra.mxu0 0.0
        %6609 = vmatprep.subr.mxu0 0.0
        %6610 = vmatpush1.msra.mxu0 0.0
        %6611 = vmatprep.subr.mxu0 0.0
        %6612 = vmatpush1.msra.mxu0 0.0
        %6613 = vmatprep.subr.mxu0 0.0
        %6614 = vmatpush1.msra.mxu0 0.0
        %6615 = vmatprep.subr.mxu0 0.0
        %6616 = vmatpush1.msra.mxu0 0.0
        %6617 = vmatprep.subr.mxu0 0.0
        %6618 = vmatpush1.msra.mxu0 0.0
        %6619 = vmatprep.subr.mxu0 0.0
        %6620 = vmatpush1.msra.mxu0 0.0
        %6621 = vmatprep.subr.mxu0 0.0
        %6622 = vmatpush1.msra.mxu0 0.0
        %6623 = vmatprep.subr.mxu0 0.0
        %6624 = vmatpush1.msra.mxu0 0.0
        %6625 = vmatprep.subr.mxu0 0.0
        %6626 = vmatpush1.msra.mxu0 0.0
        %6627 = vmatprep.subr.mxu0 0.0
        %6628 = vmatpush1.msra.mxu0 0.0
        %6629 = vmatprep.subr.mxu0 0.0
        %6630 = vmatpush1.msra.mxu0 0.0
        %6631 = vmatprep.subr.mxu0 0.0
        %6632 = vmatpush1.msra.mxu0 0.0
        %6633 = vmatprep.subr.mxu0 0.0
        %6634 = vmatpush1.msra.mxu0 0.0
        %6635 = vmatprep.subr.mxu0 0.0
        %6636 = vmatpush1.msra.mxu0 0.0
        %6637 = vmatprep.subr.mxu0 0.0
        %6638 = vmatpush1.msra.mxu0 0.0
        %6639 = vmatprep.subr.mxu0 0.0
        %6640 = vmatpush1.msra.mxu0 0.0
        %6641 = vmatprep.subr.mxu0 0.0
        %6642 = vmatpush1.msra.mxu0 0.0
        %6643 = vmatprep.mubr.f32.mxu0 0.0
        %6644 = vmatmul.mubr.f32.gmra.mrb[0].mxu0 %v5544
        %v6645 = vpop.f32.mrb[0].mxu0
        %v6646 = vadd.f32 0.0, %v6645
        %v6647 = vpop.f32.mrb[0].mxu0
        %6648 = vmatprep.mubr.f32.mxu0 0.0
        %6649 = vmatmul.mubr.f32.gmra.mrb[0].mxu0 %v5546
        %v6650 = vpop.f32.mrb[0].mxu0
        %v6651 = vadd.f32 0.0, %v6650
        %v6652 = vpop.f32.mrb[0].mxu0
        %6653 = vmatprep.mubr.f32.mxu0 0.0
        %6654 = vmatmul.mubr.f32.gmra.mrb[0].mxu0 %v5548
        %v6655 = vpop.f32.mrb[0].mxu0
        %v6656 = vadd.f32 0.0, %v6655
        %v6657 = vpop.f32.mrb[0].mxu0
        %6658 = vmatprep.mubr.f32.mxu0 0.0
        %6659 = vmatmul.mubr.f32.gmra.mrb[0].mxu0 %v5550
        %v6660 = vpop.f32.mrb[0].mxu0
        %v6661 = vadd.f32 0.0, %v6660
        %v6662 = vpop.f32.mrb[0].mxu0
        %6663 = vmatprep.mubr.f32.mxu0 0.0
        %6664 = vmatmul.mubr.f32.gmra.mrb[0].mxu0 %v5552
        %v6665 = vpop.f32.mrb[0].mxu0
        %v6666 = vadd.f32 0.0, %v6665
        %v6667 = vpop.f32.mrb[0].mxu0
        %6668 = vmatprep.mubr.f32.mxu0 0.0
        %6669 = vmatmul.mubr.f32.gmra.mrb[0].mxu0 %v5554
        %v6670 = vpop.f32.mrb[0].mxu0
        %v6671 = vadd.f32 0.0, %v6670
        %v6672 = vpop.f32.mrb[0].mxu0
        %6673 = vmatprep.mubr.f32.mxu0 0.0
        %6674 = vmatmul.mubr.f32.gmra.mrb[0].mxu0 %v5556
        %v6675 = vpop.f32.mrb[0].mxu0
        %v6676 = vadd.f32 0.0, %v6675
        %v6677 = vpop.f32.mrb[0].mxu0
        %6678 = vmatprep.mubr.f32.mxu0 0.0
        %6679 = vmatmul.mubr.f32.gmra.mrb[0].mxu0 %v5558
        %v6680 = vpop.f32.mrb[0].mxu0
        %v6681 = vadd.f32 0.0, %v6680
        %v6682 = vpop.f32.mrb[0].mxu0
        %6683 = vmatprep.mubr.f32.mxu0 0.0
        %6684 = vmatmul.mubr.f32.gmra.mrb[0].mxu0 %v5560
        %v6685 = vpop.f32.mrb[0].mxu0
        %v6686 = vadd.f32 0.0, %v6685
        %v6687 = vpop.f32.mrb[0].mxu0
        %6688 = vmatprep.mubr.f32.mxu0 0.0
        %6689 = vmatmul.mubr.f32.gmra.mrb[0].mxu0 %v5562
        %v6690 = vpop.f32.mrb[0].mxu0
        %v6691 = vadd.f32 0.0, %v6690
        %v6692 = vpop.f32.mrb[0].mxu0
        %6693 = vdwg.mxu0
        %v6704 = vcombine.high %v6646, %v6646
        %v6706 = vunpack.c.l.s4 1983009808
        %v6707 = vunpack.c.0.s8 %v6706
        %v6708 = vlaneseq
        %v6709 = vshrl.u32 %v6708, 7
        %v6710 = vsub.s32 %v6707, %v6709
        %v6711 = vrot.slane %v6646, %v6710
        %v6713 = vunpack.c.l.s4 1983009808
        %v6714 = vunpack.c.0.s8 %v6713
        %v6715 = vlaneseq
        %v6716 = vshrl.u32 %v6715, 7
        %v6717 = vsub.s32 %v6714, %v6716
        %v6718 = vrot.slane %v6704, %v6717
        %v6719 = vcombine.high %v6711, %v6711
        %v6720 = vcombine.high %v6718, %v6718
        %v6721 = vcombine.high %v6651, %v6651
        %v6723 = vunpack.c.l.s4 1983009808
        %v6724 = vunpack.c.0.s8 %v6723
        %v6725 = vlaneseq
        %v6726 = vshrl.u32 %v6725, 7
        %v6727 = vsub.s32 %v6724, %v6726
        %v6728 = vrot.slane %v6651, %v6727
        %v6730 = vunpack.c.l.s4 1983009808
        %v6731 = vunpack.c.0.s8 %v6730
        %v6732 = vlaneseq
        %v6733 = vshrl.u32 %v6732, 7
        %v6734 = vsub.s32 %v6731, %v6733
        %v6735 = vrot.slane %v6721, %v6734
        %v6736 = vcombine.high %v6735, %v6735
        %v6737 = vcombine.high %v6656, %v6656
        %v6739 = vunpack.c.l.s4 1983009808
        %v6740 = vunpack.c.0.s8 %v6739
        %v6741 = vlaneseq
        %v6742 = vshrl.u32 %v6741, 7
        %v6743 = vsub.s32 %v6740, %v6742
        %v6744 = vrot.slane %v6656, %v6743
        %v6746 = vunpack.c.l.s4 1983009808
        %v6747 = vunpack.c.0.s8 %v6746
        %v6748 = vlaneseq
        %v6749 = vshrl.u32 %v6748, 7
        %v6750 = vsub.s32 %v6747, %v6749
        %v6751 = vrot.slane %v6737, %v6750
        %v6752 = vcombine.high %v6744, %v6744
        %v6753 = vcombine.high %v6751, %v6751
        %v6754 = vcombine.high %v6661, %v6661
        %v6756 = vunpack.c.l.s4 1983009808
        %v6757 = vunpack.c.0.s8 %v6756
        %v6758 = vlaneseq
        %v6759 = vshrl.u32 %v6758, 7
        %v6760 = vsub.s32 %v6757, %v6759
        %v6761 = vrot.slane %v6661, %v6760
        %v6763 = vunpack.c.l.s4 1983009808
        %v6764 = vunpack.c.0.s8 %v6763
        %v6765 = vlaneseq
        %v6766 = vshrl.u32 %v6765, 7
        %v6767 = vsub.s32 %v6764, %v6766
        %v6768 = vrot.slane %v6754, %v6767
        %v6769 = vcombine.high %v6761, %v6761
        %v6770 = vcombine.high %v6666, %v6666
        %v6772 = vunpack.c.l.s4 1983009808
        %v6773 = vunpack.c.0.s8 %v6772
        %v6774 = vlaneseq
        %v6775 = vshrl.u32 %v6774, 7
        %v6776 = vsub.s32 %v6773, %v6775
        %v6777 = vrot.slane %v6666, %v6776
        %v6779 = vunpack.c.l.s4 1983009808
        %v6780 = vunpack.c.0.s8 %v6779
        %v6781 = vlaneseq
        %v6782 = vshrl.u32 %v6781, 7
        %v6783 = vsub.s32 %v6780, %v6782
        %v6784 = vrot.slane %v6770, %v6783
        %v6785 = vcombine.high %v6777, %v6777
        %v6786 = vcombine.high %v6784, %v6784
        %v6787 = vcombine.high %v6671, %v6671
        %v6789 = vunpack.c.l.s4 1983009808
        %v6790 = vunpack.c.0.s8 %v6789
        %v6791 = vlaneseq
        %v6792 = vshrl.u32 %v6791, 7
        %v6793 = vsub.s32 %v6790, %v6792
        %v6794 = vrot.slane %v6671, %v6793
        %v6796 = vunpack.c.l.s4 1983009808
        %v6797 = vunpack.c.0.s8 %v6796
        %v6798 = vlaneseq
        %v6799 = vshrl.u32 %v6798, 7
        %v6800 = vsub.s32 %v6797, %v6799
        %v6801 = vrot.slane %v6787, %v6800
        %v6802 = vcombine.high %v6794, %v6794
        %v6803 = vcombine.high %v6801, %v6801
        %v6804 = vcombine.high %v6676, %v6676
        %v6806 = vunpack.c.l.s4 1983009808
        %v6807 = vunpack.c.0.s8 %v6806
        %v6808 = vlaneseq
        %v6809 = vshrl.u32 %v6808, 7
        %v6810 = vsub.s32 %v6807, %v6809
        %v6811 = vrot.slane %v6676, %v6810
        %v6813 = vunpack.c.l.s4 1983009808
        %v6814 = vunpack.c.0.s8 %v6813
        %v6815 = vlaneseq
        %v6816 = vshrl.u32 %v6815, 7
        %v6817 = vsub.s32 %v6814, %v6816
        %v6818 = vrot.slane %v6804, %v6817
        %v6819 = vcombine.high %v6818, %v6818
        %v6820 = vcombine.high %v6681, %v6681
        %v6822 = vunpack.c.l.s4 1983009808
        %v6823 = vunpack.c.0.s8 %v6822
        %v6824 = vlaneseq
        %v6825 = vshrl.u32 %v6824, 7
        %v6826 = vsub.s32 %v6823, %v6825
        %v6827 = vrot.slane %v6681, %v6826
        %v6829 = vunpack.c.l.s4 1983009808
        %v6830 = vunpack.c.0.s8 %v6829
        %v6831 = vlaneseq
        %v6832 = vshrl.u32 %v6831, 7
        %v6833 = vsub.s32 %v6830, %v6832
        %v6834 = vrot.slane %v6820, %v6833
        %v6835 = vcombine.high %v6827, %v6827
        %v6836 = vcombine.high %v6834, %v6834
        %v6837 = vcombine.high %v6686, %v6686
        %v6839 = vunpack.c.l.s4 1983009808
        %v6840 = vunpack.c.0.s8 %v6839
        %v6841 = vlaneseq
        %v6842 = vshrl.u32 %v6841, 7
        %v6843 = vsub.s32 %v6840, %v6842
        %v6844 = vrot.slane %v6686, %v6843
        %v6846 = vunpack.c.l.s4 1983009808
        %v6847 = vunpack.c.0.s8 %v6846
        %v6848 = vlaneseq
        %v6849 = vshrl.u32 %v6848, 7
        %v6850 = vsub.s32 %v6847, %v6849
        %v6851 = vrot.slane %v6837, %v6850
        %v6852 = vcombine.high %v6844, %v6844
        %v6853 = vcombine.high %v6691, %v6691
        %v6855 = vunpack.c.l.s4 1983009808
        %v6856 = vunpack.c.0.s8 %v6855
        %v6857 = vlaneseq
        %v6858 = vshrl.u32 %v6857, 7
        %v6859 = vsub.s32 %v6856, %v6858
        %v6860 = vrot.slane %v6691, %v6859
        %v6862 = vunpack.c.l.s4 1983009808
        %v6863 = vunpack.c.0.s8 %v6862
        %v6864 = vlaneseq
        %v6865 = vshrl.u32 %v6864, 7
        %v6866 = vsub.s32 %v6863, %v6865
        %v6867 = vrot.slane %v6853, %v6866
        %v6868 = vcombine.high %v6860, %v6860
        %v6869 = vcombine.high %v6867, %v6867
        %v6870 = vld [vmem:[#allocation3] sm:$0xff]
        %v6871 = vld [vmem:[#allocation3 + $0x8] sm:$0xff]
        %v6872 = vld [vmem:[#allocation3 + $0x10] sm:$0xff]
        %v6873 = vld [vmem:[#allocation3 + $0x18] sm:$0xff]
        %v6874 = vld [vmem:[#allocation3 + $0x20] sm:$0xff]
        %v6875 = vld [vmem:[#allocation3 + $0x28] sm:$0xff]
        %v6876 = vld [vmem:[#allocation3 + $0x30] sm:$0xff]
        %v6877 = vld [vmem:[#allocation3 + $0x38] sm:$0xff]
        %v6878 = vcombine.low %v6719, %v6718
        %v6879 = vcombine.low %v6720, %v6728
        %v6881 = vunpack.c.l.s4 1983009808
        %v6882 = vunpack.c.0.s8 %v6881
        %v6883 = vlaneseq
        %v6884 = vshrl.u32 %v6883, 7
        %v6885 = vsub.s32 %v6882, %v6884
        %v6886 = vrot.slane %v6878, %v6885
        %v6888 = vunpack.c.l.s4 1983009808
        %v6889 = vunpack.c.0.s8 %v6888
        %v6890 = vlaneseq
        %v6891 = vshrl.u32 %v6890, 7
        %v6892 = vsub.s32 %v6889, %v6891
        %v6893 = vrot.slane %v6879, %v6892
        %v6894 = vcombine.low %v6886, %v6893
        %v6895 = vcombine.low %v6735, %v6736
        %v6896 = vcombine.low %v6744, %v6752
        %v6898 = vunpack.c.l.s4 1983009808
        %v6899 = vunpack.c.0.s8 %v6898
        %v6900 = vlaneseq
        %v6901 = vshrl.u32 %v6900, 7
        %v6902 = vsub.s32 %v6899, %v6901
        %v6903 = vrot.slane %v6895, %v6902
        %v6905 = vunpack.c.l.s4 1983009808
        %v6906 = vunpack.c.0.s8 %v6905
        %v6907 = vlaneseq
        %v6908 = vshrl.u32 %v6907, 7
        %v6909 = vsub.s32 %v6906, %v6908
        %v6910 = vrot.slane %v6896, %v6909
        %v6911 = vcombine.low %v6903, %v6910
        %v6912 = vcombine.low %v6753, %v6761
        %v6913 = vcombine.low %v6769, %v6768
        %v6915 = vunpack.c.l.s4 1983009808
        %v6916 = vunpack.c.0.s8 %v6915
        %v6917 = vlaneseq
        %v6918 = vshrl.u32 %v6917, 7
        %v6919 = vsub.s32 %v6916, %v6918
        %v6920 = vrot.slane %v6912, %v6919
        %v6922 = vunpack.c.l.s4 1983009808
        %v6923 = vunpack.c.0.s8 %v6922
        %v6924 = vlaneseq
        %v6925 = vshrl.u32 %v6924, 7
        %v6926 = vsub.s32 %v6923, %v6925
        %v6927 = vrot.slane %v6913, %v6926
        %v6928 = vcombine.low %v6920, %v6927
        %v6929 = vcombine.low %v6777, %v6785
        %v6930 = vcombine.low %v6784, %v6786
        %v6932 = vunpack.c.l.s4 1983009808
        %v6933 = vunpack.c.0.s8 %v6932
        %v6934 = vlaneseq
        %v6935 = vshrl.u32 %v6934, 7
        %v6936 = vsub.s32 %v6933, %v6935
        %v6937 = vrot.slane %v6929, %v6936
        %v6939 = vunpack.c.l.s4 1983009808
        %v6940 = vunpack.c.0.s8 %v6939
        %v6941 = vlaneseq
        %v6942 = vshrl.u32 %v6941, 7
        %v6943 = vsub.s32 %v6940, %v6942
        %v6944 = vrot.slane %v6930, %v6943
        %v6945 = vcombine.low %v6937, %v6944
        %v6946 = vcombine.low %v6802, %v6801
        %v6947 = vcombine.low %v6803, %v6811
        %v6949 = vunpack.c.l.s4 1983009808
        %v6950 = vunpack.c.0.s8 %v6949
        %v6951 = vlaneseq
        %v6952 = vshrl.u32 %v6951, 7
        %v6953 = vsub.s32 %v6950, %v6952
        %v6954 = vrot.slane %v6946, %v6953
        %v6956 = vunpack.c.l.s4 1983009808
        %v6957 = vunpack.c.0.s8 %v6956
        %v6958 = vlaneseq
        %v6959 = vshrl.u32 %v6958, 7
        %v6960 = vsub.s32 %v6957, %v6959
        %v6961 = vrot.slane %v6947, %v6960
        %v6962 = vcombine.low %v6954, %v6961
        %v6963 = vcombine.low %v6818, %v6819
        %v6964 = vcombine.low %v6827, %v6835
        %v6966 = vunpack.c.l.s4 1983009808
        %v6967 = vunpack.c.0.s8 %v6966
        %v6968 = vlaneseq
        %v6969 = vshrl.u32 %v6968, 7
        %v6970 = vsub.s32 %v6967, %v6969
        %v6971 = vrot.slane %v6963, %v6970
        %v6973 = vunpack.c.l.s4 1983009808
        %v6974 = vunpack.c.0.s8 %v6973
        %v6975 = vlaneseq
        %v6976 = vshrl.u32 %v6975, 7
        %v6977 = vsub.s32 %v6974, %v6976
        %v6978 = vrot.slane %v6964, %v6977
        %v6979 = vcombine.low %v6971, %v6978
        %v6980 = vcombine.low %v6836, %v6844
        %v6981 = vcombine.low %v6852, %v6851
        %v6983 = vunpack.c.l.s4 1983009808
        %v6984 = vunpack.c.0.s8 %v6983
        %v6985 = vlaneseq
        %v6986 = vshrl.u32 %v6985, 7
        %v6987 = vsub.s32 %v6984, %v6986
        %v6988 = vrot.slane %v6980, %v6987
        %v6990 = vunpack.c.l.s4 1983009808
        %v6991 = vunpack.c.0.s8 %v6990
        %v6992 = vlaneseq
        %v6993 = vshrl.u32 %v6992, 7
        %v6994 = vsub.s32 %v6991, %v6993
        %v6995 = vrot.slane %v6981, %v6994
        %v6996 = vcombine.low %v6988, %v6995
        %v6997 = vcombine.low %v6860, %v6868
        %v6998 = vcombine.low %v6867, %v6869
        %v7000 = vunpack.c.l.s4 1983009808
        %v7001 = vunpack.c.0.s8 %v7000
        %v7002 = vlaneseq
        %v7003 = vshrl.u32 %v7002, 7
        %v7004 = vsub.s32 %v7001, %v7003
        %v7005 = vrot.slane %v6997, %v7004
        %v7007 = vunpack.c.l.s4 1983009808
        %v7008 = vunpack.c.0.s8 %v7007
        %v7009 = vlaneseq
        %v7010 = vshrl.u32 %v7009, 7
        %v7011 = vsub.s32 %v7008, %v7010
        %v7012 = vrot.slane %v6998, %v7011
        %v7013 = vcombine.low %v7005, %v7012
        %v7022 = vadd.f32 %v6870, %v6894
        %v7023 = vadd.f32 %v6871, %v6911
        %v7024 = vadd.f32 %v6872, %v6928
        %v7025 = vadd.f32 %v6873, %v6945
        %v7026 = vadd.f32 %v6874, %v6962
        %v7027 = vadd.f32 %v6875, %v6979
        %v7028 = vadd.f32 %v6876, %v6996
        %v7029 = vadd.f32 %v6877, %v7013
        %7030 = vst.msk [vmem:[#allocation3] sm:$0xff] %vm1357, %v7022
        %7031 = vst.msk [vmem:[#allocation3 + $0x8] sm:$0xff] %vm1357, %v7023
        %7032 = vst.msk [vmem:[#allocation3 + $0x10] sm:$0xff] %vm1357, %v7024
        %7033 = vst.msk [vmem:[#allocation3 + $0x18] sm:$0xff] %vm1357, %v7025
        %7034 = vst.msk [vmem:[#allocation3 + $0x20] sm:$0xff] %vm1357, %v7026
        %7035 = vst.msk [vmem:[#allocation3 + $0x28] sm:$0xff] %vm1357, %v7027
        %7036 = vst.msk [vmem:[#allocation3 + $0x30] sm:$0xff] %vm1357, %v7028
        %7037 = vst.msk [vmem:[#allocation3 + $0x38] sm:$0xff] %vm1357, %v7029
        %v7038 = vld [vmem:[#allocation3] sm:$0xff]
        %v7039 = vld [vmem:[#allocation3 + $0x8] sm:$0xff]
        %v7040 = vld [vmem:[#allocation3 + $0x10] sm:$0xff]
        %v7041 = vld [vmem:[#allocation3 + $0x18] sm:$0xff]
        %v7042 = vld [vmem:[#allocation3 + $0x20] sm:$0xff]
        %v7043 = vld [vmem:[#allocation3 + $0x28] sm:$0xff]
        %v7044 = vld [vmem:[#allocation3 + $0x30] sm:$0xff]
        %v7045 = vld [vmem:[#allocation3 + $0x38] sm:$0xff]
        %7054 = vrot.lane.b32.xlu0 %v7038, 16
        %v7055 = vpop.permute.xlu0 %7054
        %7056 = vrot.lane.b32.xlu0 %v7039, 16
        %v7057 = vpop.permute.xlu0 %7056
        %7058 = vrot.lane.b32.xlu0 %v7040, 16
        %v7059 = vpop.permute.xlu0 %7058
        %7060 = vrot.lane.b32.xlu0 %v7041, 16
        %v7061 = vpop.permute.xlu0 %7060
        %7062 = vrot.lane.b32.xlu0 %v7042, 16
        %v7063 = vpop.permute.xlu0 %7062
        %7064 = vrot.lane.b32.xlu0 %v7043, 16
        %v7065 = vpop.permute.xlu0 %7064
        %7066 = vrot.lane.b32.xlu0 %v7044, 16
        %v7067 = vpop.permute.xlu0 %7066
        %7068 = vrot.lane.b32.xlu0 %v7045, 16
        %v7069 = vpop.permute.xlu0 %7068
        %vm7078 = vcmask 195712
        %7079 = vst.msk [vmem:[%s136] sm:$0xff] %vm7078, %v7055
        %7080 = vst.msk [vmem:[%s136 + $0x8] sm:$0xff] %vm7078, %v7057
        %7081 = vst.msk [vmem:[%s136 + $0x10] sm:$0xff] %vm7078, %v7059
        %7082 = vst.msk [vmem:[%s136 + $0x18] sm:$0xff] %vm7078, %v7061
        %7083 = vst.msk [vmem:[%s136 + $0x20] sm:$0xff] %vm7078, %v7063
        %7084 = vst.msk [vmem:[%s136 + $0x28] sm:$0xff] %vm7078, %v7065
        %7085 = vst.msk [vmem:[%s136 + $0x30] sm:$0xff] %vm7078, %v7067
        %7086 = vst.msk [vmem:[%s136 + $0x38] sm:$0xff] %vm7078, %v7069
        %s7087 = sand.u32 %s71, 1
        %s7088 = scalar_lea.sflag [#allocation5], %s7087
        %s7089 = sand.u32 %s71, 1
        %s7090 = smul.addr %s7089, 64
        %s7091 = scalar_lea.vmem [#allocation4], %s7090
        // Predicated region
        $region29: #{tpu_custom_call.1} parent=27 // pred_check
          %p7092 = pneg %p81
        $region30: #{tpu_custom_call.1} parent=27 // pred_check_branch
          %7094 = sbr.rel (%p7092) target = $region32
        $region31: #{tpu_custom_call.1} parent=27 // pred_region
          %s7096 = ssub.s32 1024, 1024
          %7097 = vsyncadd %s7088, %s7096
          %s7098 = smul.addr %s16, 8
          %s7099 = smul.addr %s7098, 128
          %s7100 = scalar_lea.hbm %s2, %s7099
          %s7101 = sshll.u32 %s7091, 4
          %s7102 = int_to_ptr.vmem [resolvable:$true] %s7101
          %7107 = dma.vmem_to_hbm [thread:$0]  %s7102, 1024, %s7100, %s7088, 128, 128, 8
        $region32: #{tpu_custom_call.1} parent=27 // pred_fallthru
          _
      $region28: #{tpu_custom_call.1} parent=5 // pred_fallthru
        _
      %p7108 = scmp.le.s32.totalorder 2, %s11
      // Predicated region
      $region33: #{tpu_custom_call.1} parent=5 // pred_check
        %p7109 = pneg %p7108
      $region34: #{tpu_custom_call.1} parent=5 // pred_check_branch
        %7111 = sbr.rel (%p7109) target = $region36
      $region35: #{tpu_custom_call.1} parent=5 // pred_region
        %s7112 = ssub.s32 %s11, 2
        // Predicated region
        $region37: #{tpu_custom_call.1} parent=35 // pred_check
          %p7113 = pneg %p87
        $region38: #{tpu_custom_call.1} parent=35 // pred_check_branch
          %7115 = sbr.rel (%p7113) target = $region40
        $region39: #{tpu_custom_call.1} parent=35 // pred_region
          %s7116 = sand.u32 %s72, 1
          %s7117 = scalar_lea.sflag [#allocation5], %s7116
          %s7118 = sand.u32 %s72, 1
          %s7119 = smul.addr %s7118, 64
          %s7120 = scalar_lea.vmem [#allocation4], %s7119
          %7121 = dma.done %s7117, 1024
        $region40: #{tpu_custom_call.1} parent=35 // pred_fallthru
          _
      $region36: #{tpu_custom_call.1} parent=5 // pred_fallthru
        _
    $region6: #{tpu_custom_call.1} parent=1 // loop_footer
      %s15 = sadd.s32 1, %s11
    $region7: #{tpu_custom_call.1} parent=1 // loop_footer_branch
      %10 = sbr.rel target = $region3
    $region8: #{tpu_custom_call.1} parent=1 // loop_exit
      _
    %7122 = vsyncpa [#allocation5], 1
    %s7123 = scalar_lea.sflag [#allocation5], 1
    %7124 = vsyncpa %s7123, 1

</llo_original>
